<compile_context>
chip_gen: v5e
topology: v5e:2x2
jax: 0.10.0
libtpu: 0.0.40
codegen_flags: <defaults>
</compile_context>

<pallas_src>
import functools

import jax
import jax.numpy as jnp
from jax import lax
from jax.experimental import pallas as pl
from jax.experimental.pallas import tpu as pltpu


def _round_up(x, m):
    return (x + m - 1) // m * m


# ----------------------------------------------------------------------------
# Pallas kernel: 7x7 stride-1 "same" conv + bias + ReLU + per-channel affine
# (the following BatchNorm, eval mode) for one image.
#
#   out[i, j*Cout+co] = ( relu( sum_{di,jp,ci} x_pad[i+di, jp*Cin+ci]
#                                 * W_banded[di, jp*Cin+ci, j*Cout+co] + bias ) )
#                       * scale + shift
#
# W_banded[di, jp*Cin+ci, j*Cout+co] = w[co, ci, di, jp-j] if 0 <= jp-j < 7 else 0,
# so the dj/ci taps live in the K dimension and the output is already lane-dense.
# ----------------------------------------------------------------------------
def _fact_conv_kernel(x_ref, w_ref, aff_ref, o_ref, *, k, h):
    # x_ref  : (1, HP, WP*Cin)        bf16  zero-padded image (rows = padded height)
    # w_ref  : (K, WP*Cin, W*Cout)    bf16  banded per-row weights
    # aff_ref: (3, W*Cout)            f32   rows: bias, bn-scale, bn-shift (tiled over W)
    # o_ref  : (1, H, W*Cout)         f32
    acc = None
    for di in range(k):                      # 7 accumulating GEMMs, register accumulator
        part = jnp.dot(x_ref[0, di:di + h, :], w_ref[di],
                       preferred_element_type=jnp.float32)      # (H, W*Cout) f32
        acc = part if acc is None else acc + part
    out = jnp.maximum(acc + aff_ref[0:1, :], 0.0)                # bias + ReLU
    o_ref[0] = out * aff_ref[1:2, :] + aff_ref[2:3, :]           # folded BatchNorm affine


def build_banded_weights(composite_w, *, width, wp):
    """(Cout, Cin, K, K) f32 -> (K, WP*Cin, W*Cout) bf16 banded weight.

    big[di, jp*Cin+ci, j*Cout+co] = composite_w[co, ci, di, jp-j] for 0<=jp-j<K else 0.
    Built with the pad/flatten Toeplitz trick (needs WP >= W + K - 2)."""
    Cout, Cin, K, _ = composite_w.shape
    assert wp + 2 - width >= K, "padded width too small for the banded construction"
    wt = jnp.transpose(composite_w, (2, 1, 0, 3))                 # (K, Cin, Cout, Kdj)
    v = jnp.pad(wt, ((0, 0), (0, 0), (0, 0), (0, wp + 1 - K)))     # (K, Cin, Cout, WP+1)
    v = jnp.broadcast_to(v[:, :, :, None, :], (K, Cin, Cout, width, wp + 1))
    v = v.reshape(K, Cin, Cout, width * (wp + 1))[..., : width * wp]
    v = v.reshape(K, Cin, Cout, width, wp)                        # [.., j, jp] = wt[.., jp-j]
    v = jnp.transpose(v, (0, 4, 1, 3, 2))                         # (K, WP, Cin, W, Cout)
    return v.reshape(K, wp * Cin, width * Cout).astype(jnp.bfloat16)


def fact_conv2d_bn_nhwc(x, composite_w, bias, bn_scale, bn_shift):
    """Fused FactConv2d(k=7, s=1, 'same') + bias + ReLU + per-channel affine.

    x: (N,H,W,Cin) f32, composite_w: (Cout,Cin,7,7) f32 -> (N,H,W,Cout) f32."""
    N, H, W, Cin = x.shape
    Cout, Cin_w, K, _ = composite_w.shape
    assert Cin_w == Cin
    pad = (K - 1) // 2
    WP = _round_up(W + 2 * pad, 8)
    HP = _round_up(H + 2 * pad, 8)
    assert WP >= W + K - 1 and HP >= H + K - 1

    w_banded = build_banded_weights(composite_w, width=W, wp=WP)  # (K, WP*Cin, W*Cout)
    aff = jnp.stack([jnp.tile(bias.astype(jnp.float32), W),
                     jnp.tile(bn_scale.astype(jnp.float32), W),
                     jnp.tile(bn_shift.astype(jnp.float32), W)], axis=0)   # (3, W*Cout)

    xp = jnp.pad(x.astype(jnp.bfloat16),
                 ((0, 0), (pad, HP - H - pad), (pad, WP - W - pad), (0, 0)))
    x_flat = xp.reshape(N, HP, WP * Cin)                          # lanes = jp*Cin + ci

    kernel = functools.partial(_fact_conv_kernel, k=K, h=H)
    out = pl.pallas_call(
        kernel,
        out_shape=jax.ShapeDtypeStruct((N, H, W * Cout), jnp.float32),
        grid_spec=pltpu.PrefetchScalarGridSpec(
            num_scalar_prefetch=0,
            grid=(N,),                                            # one image per grid step
            in_specs=[
                pl.BlockSpec((1, HP, WP * Cin), lambda n: (n, 0, 0)),
                pl.BlockSpec((K, WP * Cin, W * Cout), lambda n: (0, 0, 0)),
                pl.BlockSpec((3, W * Cout), lambda n: (0, 0)),
            ],
            out_specs=pl.BlockSpec((1, H, W * Cout), lambda n: (n, 0, 0)),
        ),
        compiler_params=pltpu.CompilerParams(
            dimension_semantics=("parallel",)),                   # megacore over batch (v7x)
    )(x_flat, w_banded, aff)
    return out.reshape(N, H, W, Cout)                             # free reshape in HBM


# ----------------------------------------------------------------------------
# Glue: FactConv2d weight composition, eval-mode BatchNorm affine, AvgPool — NHWC.
# ----------------------------------------------------------------------------
def tri_vec_to_mat(vec, n):
    """Upper-triangular factor from a flat vec; diagonal exponentiated
    (FactConv convention: tri_vec == 0 -> identity factor)."""
    m = jnp.zeros((n, n), jnp.float32)
    iu = jnp.triu_indices(n)
    m = m.at[iu].set(vec)
    d = jnp.diag(m)
    return m - jnp.diag(d) + jnp.diag(jnp.exp(d))


def compose_fact_weight(base_w, tri1_vec, tri2_vec):
    """FactConv2d composite weight: reshape(W0) @ kron(R_channel, R_spatial)."""
    Cout, Cin, kh, kw = base_w.shape
    R1 = tri_vec_to_mat(tri1_vec, Cin)
    R2 = tri_vec_to_mat(tri2_vec, kh * kw)
    U = jnp.kron(R1, R2)                                  # (Cin*k*k, Cin*k*k)
    w2d = base_w.reshape(Cout, Cin * kh * kw)
    return (w2d @ U).reshape(Cout, Cin, kh, kw)


def bn_affine(bn_params, eps=1e-5):
    # TODO(synk): training-mode batch statistics not implemented; eval-mode
    # BatchNorm2d folded to a per-channel (scale, shift).
    gamma, beta, running_mean, running_var = bn_params
    s = gamma / jnp.sqrt(running_var + eps)
    return s, beta - running_mean * s


def avg_pool_nhwc(x, k, stride, pad):
    # Matches torch AvgPool2d(count_include_pad=True): zero-pad, sum, / k*k.
    s = lax.reduce_window(x, 0.0, lax.add,
                          (1, k, k, 1), (1, stride, stride, 1),
                          [(0, 0), (pad, pad), (pad, pad), (0, 0)])
    return s / float(k * k)


# ----------------------------------------------------------------------------
# LC_CIFAR10 forward (input in PyTorch NCHW; internally NHWC).
# ----------------------------------------------------------------------------
def lc_cifar10_forward(x_nchw, params):
    hidden = params["lc1_w"].shape[0]
    x = jnp.transpose(x_nchw, (0, 2, 3, 1))                       # -> NHWC once
    sx, tx = bn_affine(params["bn_x"])
    x = x * sx + tx                                               # tiny; fuses with pad/cast

    # layer 1: bn_h1's conv-channel affine is folded into the kernel epilogue,
    # its smooth-branch affine is a tiny XLA per-channel op.
    s1, t1 = bn_affine(params["bn_h1"])
    w1 = compose_fact_weight(params["lc1_w"], params["lc1_tri1"], params["lc1_tri2"])
    c1 = fact_conv2d_bn_nhwc(x, w1, params["lc1_b"], s1[:hidden], t1[:hidden])
    sm1 = avg_pool_nhwc(x, 3, 1, 1) * s1[hidden:] + t1[hidden:]
    h = jnp.concatenate([c1, sm1], axis=-1)                       # == bn_h1(cat(...))

    # layer 2: same with bn_h2.
    s2, t2 = bn_affine(params["bn_h2"])
    w2 = compose_fact_weight(params["lc2_w"], params["lc2_tri1"], params["lc2_tri2"])
    c2 = fact_conv2d_bn_nhwc(h, w2, params["lc2_b"], s2[:hidden], t2[:hidden])
    sm2 = avg_pool_nhwc(h, 3, 1, 1) * s2[hidden:] + t2[hidden:]
    h = jnp.concatenate([c2, sm2], axis=-1)                       # == bn_h2(cat(...))

    # AvgPool 4x4 s4 p1 -> (N, 8, 8, 2H+3); flatten in torch NCHW order so the
    # classifier weight keeps the PyTorch layout.
    h = avg_pool_nhwc(h, 4, 4, 1)
    flat = jnp.transpose(h, (0, 3, 1, 2)).reshape(h.shape[0], -1)

    # Classifier: ~25 KFLOP GEMM left to XLA (per performance review).
    return flat @ params["clf_w"].T + params["clf_b"]


# ----------------------------------------------------------------------------
# Pure-JAX reference (lax.conv, explicit BN order as in the torch module).
# ----------------------------------------------------------------------------
def _conv_ref(x_nhwc, w_oihw, b):
    return lax.conv_general_dilated(
        x_nhwc, jnp.transpose(w_oihw, (2, 3, 1, 0)),
        window_strides=(1, 1), padding="SAME",
        dimension_numbers=("NHWC", "HWIO", "NHWC")) + b


def lc_cifar10_reference(x_nchw, params):
    x = jnp.transpose(x_nchw, (0, 2, 3, 1))
    s, t = bn_affine(params["bn_x"]); x = x * s + t
    w1 = compose_fact_weight(params["lc1_w"], params["lc1_tri1"], params["lc1_tri2"])
    h = jnp.concatenate([jnp.maximum(_conv_ref(x, w1, params["lc1_b"]), 0.0),
                         avg_pool_nhwc(x, 3, 1, 1)], axis=-1)
    s, t = bn_affine(params["bn_h1"]); h = h * s + t
    w2 = compose_fact_weight(params["lc2_w"], params["lc2_tri1"], params["lc2_tri2"])
    h = jnp.concatenate([jnp.maximum(_conv_ref(h, w2, params["lc2_b"]), 0.0),
                         avg_pool_nhwc(h, 3, 1, 1)], axis=-1)
    s, t = bn_affine(params["bn_h2"]); h = h * s + t
    h = avg_pool_nhwc(h, 4, 4, 1)
    flat = jnp.transpose(h, (0, 3, 1, 2)).reshape(h.shape[0], -1)
    return flat @ params["clf_w"].T + params["clf_b"]


def init_params(key, hidden_dim):
    k = 7
    ks = jax.random.split(key, 10)

    def conv_w(rng, cout, cin):
        bound = 1.0 / jnp.sqrt(cin * k * k)
        return jax.random.uniform(rng, (cout, cin, k, k), jnp.float32, -bound, bound)

    def conv_b(rng, cout, cin):
        bound = 1.0 / jnp.sqrt(cin * k * k)
        return jax.random.uniform(rng, (cout,), jnp.float32, -bound, bound)

    def bn(c):
        return (jnp.ones((c,), jnp.float32), jnp.zeros((c,), jnp.float32),
                jnp.zeros((c,), jnp.float32), jnp.ones((c,), jnp.float32))

    cin1, cin2 = 3, hidden_dim + 3
    tri_sp_len = (k * k) * (k * k + 1) // 2
    clf_in = (2 * hidden_dim + 3) * 8 * 8
    clf_bound = 1.0 / jnp.sqrt(float(clf_in))
    return {
        "lc1_w": conv_w(ks[0], hidden_dim, cin1),
        "lc1_b": conv_b(ks[1], hidden_dim, cin1),
        "lc1_tri1": 0.05 * jax.random.normal(ks[2], (cin1 * (cin1 + 1) // 2,), jnp.float32),
        "lc1_tri2": 0.05 * jax.random.normal(ks[3], (tri_sp_len,), jnp.float32),
        "lc2_w": conv_w(ks[4], hidden_dim, cin2),
        "lc2_b": conv_b(ks[5], hidden_dim, cin2),
        "lc2_tri1": 0.05 * jax.random.normal(ks[6], (cin2 * (cin2 + 1) // 2,), jnp.float32),
        "lc2_tri2": 0.05 * jax.random.normal(ks[7], (tri_sp_len,), jnp.float32),
        "bn_x": bn(3),
        "bn_h1": bn(hidden_dim + 3),
        "bn_h2": bn(2 * hidden_dim + 3),
        "clf_w": jax.random.uniform(ks[8], (10, clf_in), jnp.float32, -clf_bound, clf_bound),
        "clf_b": jax.random.uniform(ks[9], (10,), jnp.float32, -clf_bound, clf_bound),
    }


if __name__ == "__main__":
    hidden_dim = 8          # small; classifier dims force 32x32 spatial input
    key = jax.random.PRNGKey(0)
    k_x, k_p = jax.random.split(key)
    x = jax.random.normal(k_x, (2, 3, 32, 32), jnp.float32)   # CIFAR-10-like NCHW
    params = init_params(k_p, hidden_dim)

    fwd = jax.jit(lc_cifar10_forward)
    logits = jax.block_until_ready(fwd(x, params))
    assert logits.shape == (2, 10), logits.shape
    assert bool(jnp.all(jnp.isfinite(logits)))

    # Loose tolerance: kernel uses bf16 GEMM operands, reference convolves in f32.
    ref = jax.jit(lc_cifar10_reference)(x, params)
    err = float(jnp.max(jnp.abs(logits - ref)))
    scale = float(jnp.max(jnp.abs(ref))) + 1e-6
    assert err <= 0.05 * scale + 0.02, (err, scale)
    print("KERNEL_OK")
</pallas_src>

<mosaic_0001>
module attributes {stable_mosaic.version = 11 : i64} {
  func.func @_fact_conv_kernel(%arg0: i32, %arg1: memref<1x40x120xbf16, #tpu.memory_space<vmem>>, %arg2: memref<7x120x256xbf16, #tpu.memory_space<vmem>>, %arg3: memref<3x256xf32, #tpu.memory_space<vmem>>, %arg4: memref<1x32x256xf32, #tpu.memory_space<vmem>>) attributes {dimension_semantics = [#tpu.dimension_semantics<parallel>], iteration_bounds = array<i64: 2>, scalar_prefetch = 0 : i64, scratch_operands = 0 : i64, tpu.core_type = #tpu.core_type<tc>, window_params = [{transform_indices = @transform_0, window_bounds = array<i64: 1, 40, 120>}, {pipeline_mode = #tpu.pipeline_mode<synchronous>, transform_indices = @transform_1, window_bounds = array<i64: 7, 120, 256>}, {pipeline_mode = #tpu.pipeline_mode<synchronous>, transform_indices = @transform_2, window_bounds = array<i64: 3, 256>}, {transform_indices = @transform_3, window_bounds = array<i64: 1, 32, 256>}]} {
    %c0 = arith.constant 0 : index
    %c0_0 = arith.constant 0 : index
    %c0_1 = arith.constant 0 : index
    %0 = vector.load %arg1[%c0, %c0_0, %c0_1] : memref<1x40x120xbf16, #tpu.memory_space<vmem>>, vector<1x32x120xbf16>
    %1 = vector.shape_cast %0 : vector<1x32x120xbf16> to vector<32x120xbf16>
    %c0_2 = arith.constant 0 : index
    %c0_3 = arith.constant 0 : index
    %c0_4 = arith.constant 0 : index
    %2 = vector.load %arg2[%c0_2, %c0_3, %c0_4] : memref<7x120x256xbf16, #tpu.memory_space<vmem>>, vector<1x120x256xbf16>
    %3 = vector.shape_cast %2 : vector<1x120x256xbf16> to vector<120x256xbf16>
    %cst = arith.constant dense<0.000000e+00> : vector<32x256xf32>
    %4 = tpu.matmul %1, %3, %cst {dimension_numbers = #tpu.dot_dimension_numbers<[1], [0], [0], [1], [0, 0, 1, 1], [], []>} : vector<32x120xbf16>, vector<120x256xbf16>, vector<32x256xf32> -> vector<32x256xf32>
    %c0_5 = arith.constant 0 : index
    %c1 = arith.constant 1 : index
    %c0_6 = arith.constant 0 : index
    %5 = vector.load %arg1[%c0_5, %c1, %c0_6] : memref<1x40x120xbf16, #tpu.memory_space<vmem>>, vector<1x32x120xbf16>
    %6 = vector.shape_cast %5 : vector<1x32x120xbf16> to vector<32x120xbf16>
    %c1_7 = arith.constant 1 : index
    %c0_8 = arith.constant 0 : index
    %c0_9 = arith.constant 0 : index
    %7 = vector.load %arg2[%c1_7, %c0_8, %c0_9] : memref<7x120x256xbf16, #tpu.memory_space<vmem>>, vector<1x120x256xbf16>
    %8 = vector.shape_cast %7 : vector<1x120x256xbf16> to vector<120x256xbf16>
    %cst_10 = arith.constant dense<0.000000e+00> : vector<32x256xf32>
    %9 = tpu.matmul %6, %8, %cst_10 {dimension_numbers = #tpu.dot_dimension_numbers<[1], [0], [0], [1], [0, 0, 1, 1], [], []>} : vector<32x120xbf16>, vector<120x256xbf16>, vector<32x256xf32> -> vector<32x256xf32>
    %10 = arith.addf %4, %9 : vector<32x256xf32>
    %c0_11 = arith.constant 0 : index
    %c2 = arith.constant 2 : index
    %c0_12 = arith.constant 0 : index
    %11 = vector.load %arg1[%c0_11, %c2, %c0_12] : memref<1x40x120xbf16, #tpu.memory_space<vmem>>, vector<1x32x120xbf16>
    %12 = vector.shape_cast %11 : vector<1x32x120xbf16> to vector<32x120xbf16>
    %c2_13 = arith.constant 2 : index
    %c0_14 = arith.constant 0 : index
    %c0_15 = arith.constant 0 : index
    %13 = vector.load %arg2[%c2_13, %c0_14, %c0_15] : memref<7x120x256xbf16, #tpu.memory_space<vmem>>, vector<1x120x256xbf16>
    %14 = vector.shape_cast %13 : vector<1x120x256xbf16> to vector<120x256xbf16>
    %cst_16 = arith.constant dense<0.000000e+00> : vector<32x256xf32>
    %15 = tpu.matmul %12, %14, %cst_16 {dimension_numbers = #tpu.dot_dimension_numbers<[1], [0], [0], [1], [0, 0, 1, 1], [], []>} : vector<32x120xbf16>, vector<120x256xbf16>, vector<32x256xf32> -> vector<32x256xf32>
    %16 = arith.addf %10, %15 : vector<32x256xf32>
    %c0_17 = arith.constant 0 : index
    %c3 = arith.constant 3 : index
    %c0_18 = arith.constant 0 : index
    %17 = vector.load %arg1[%c0_17, %c3, %c0_18] : memref<1x40x120xbf16, #tpu.memory_space<vmem>>, vector<1x32x120xbf16>
    %18 = vector.shape_cast %17 : vector<1x32x120xbf16> to vector<32x120xbf16>
    %c3_19 = arith.constant 3 : index
    %c0_20 = arith.constant 0 : index
    %c0_21 = arith.constant 0 : index
    %19 = vector.load %arg2[%c3_19, %c0_20, %c0_21] : memref<7x120x256xbf16, #tpu.memory_space<vmem>>, vector<1x120x256xbf16>
    %20 = vector.shape_cast %19 : vector<1x120x256xbf16> to vector<120x256xbf16>
    %cst_22 = arith.constant dense<0.000000e+00> : vector<32x256xf32>
    %21 = tpu.matmul %18, %20, %cst_22 {dimension_numbers = #tpu.dot_dimension_numbers<[1], [0], [0], [1], [0, 0, 1, 1], [], []>} : vector<32x120xbf16>, vector<120x256xbf16>, vector<32x256xf32> -> vector<32x256xf32>
    %22 = arith.addf %16, %21 : vector<32x256xf32>
    %c0_23 = arith.constant 0 : index
    %c4 = arith.constant 4 : index
    %c0_24 = arith.constant 0 : index
    %23 = vector.load %arg1[%c0_23, %c4, %c0_24] : memref<1x40x120xbf16, #tpu.memory_space<vmem>>, vector<1x32x120xbf16>
    %24 = vector.shape_cast %23 : vector<1x32x120xbf16> to vector<32x120xbf16>
    %c4_25 = arith.constant 4 : index
    %c0_26 = arith.constant 0 : index
    %c0_27 = arith.constant 0 : index
    %25 = vector.load %arg2[%c4_25, %c0_26, %c0_27] : memref<7x120x256xbf16, #tpu.memory_space<vmem>>, vector<1x120x256xbf16>
    %26 = vector.shape_cast %25 : vector<1x120x256xbf16> to vector<120x256xbf16>
    %cst_28 = arith.constant dense<0.000000e+00> : vector<32x256xf32>
    %27 = tpu.matmul %24, %26, %cst_28 {dimension_numbers = #tpu.dot_dimension_numbers<[1], [0], [0], [1], [0, 0, 1, 1], [], []>} : vector<32x120xbf16>, vector<120x256xbf16>, vector<32x256xf32> -> vector<32x256xf32>
    %28 = arith.addf %22, %27 : vector<32x256xf32>
    %c0_29 = arith.constant 0 : index
    %c5 = arith.constant 5 : index
    %c0_30 = arith.constant 0 : index
    %29 = vector.load %arg1[%c0_29, %c5, %c0_30] : memref<1x40x120xbf16, #tpu.memory_space<vmem>>, vector<1x32x120xbf16>
    %30 = vector.shape_cast %29 : vector<1x32x120xbf16> to vector<32x120xbf16>
    %c5_31 = arith.constant 5 : index
    %c0_32 = arith.constant 0 : index
    %c0_33 = arith.constant 0 : index
    %31 = vector.load %arg2[%c5_31, %c0_32, %c0_33] : memref<7x120x256xbf16, #tpu.memory_space<vmem>>, vector<1x120x256xbf16>
    %32 = vector.shape_cast %31 : vector<1x120x256xbf16> to vector<120x256xbf16>
    %cst_34 = arith.constant dense<0.000000e+00> : vector<32x256xf32>
    %33 = tpu.matmul %30, %32, %cst_34 {dimension_numbers = #tpu.dot_dimension_numbers<[1], [0], [0], [1], [0, 0, 1, 1], [], []>} : vector<32x120xbf16>, vector<120x256xbf16>, vector<32x256xf32> -> vector<32x256xf32>
    %34 = arith.addf %28, %33 : vector<32x256xf32>
    %c0_35 = arith.constant 0 : index
    %c6 = arith.constant 6 : index
    %c0_36 = arith.constant 0 : index
    %35 = vector.load %arg1[%c0_35, %c6, %c0_36] : memref<1x40x120xbf16, #tpu.memory_space<vmem>>, vector<1x32x120xbf16>
    %36 = vector.shape_cast %35 : vector<1x32x120xbf16> to vector<32x120xbf16>
    %c6_37 = arith.constant 6 : index
    %c0_38 = arith.constant 0 : index
    %c0_39 = arith.constant 0 : index
    %37 = vector.load %arg2[%c6_37, %c0_38, %c0_39] : memref<7x120x256xbf16, #tpu.memory_space<vmem>>, vector<1x120x256xbf16>
    %38 = vector.shape_cast %37 : vector<1x120x256xbf16> to vector<120x256xbf16>
    %cst_40 = arith.constant dense<0.000000e+00> : vector<32x256xf32>
    %39 = tpu.matmul %36, %38, %cst_40 {dimension_numbers = #tpu.dot_dimension_numbers<[1], [0], [0], [1], [0, 0, 1, 1], [], []>} : vector<32x120xbf16>, vector<120x256xbf16>, vector<32x256xf32> -> vector<32x256xf32>
    %40 = arith.addf %34, %39 : vector<32x256xf32>
    %c0_41 = arith.constant 0 : index
    %c0_42 = arith.constant 0 : index
    %41 = vector.load %arg3[%c0_41, %c0_42] : memref<3x256xf32, #tpu.memory_space<vmem>>, vector<1x256xf32>
    %42 = vector.broadcast %41 : vector<1x256xf32> to vector<32x256xf32>
    %43 = arith.addf %40, %42 : vector<32x256xf32>
    %cst_43 = arith.constant 0.000000e+00 : f32
    %44 = vector.broadcast %cst_43 : f32 to vector<32x256xf32>
    %45 = arith.maximumf %43, %44 : vector<32x256xf32>
    %c1_44 = arith.constant 1 : index
    %c0_45 = arith.constant 0 : index
    %46 = vector.load %arg3[%c1_44, %c0_45] : memref<3x256xf32, #tpu.memory_space<vmem>>, vector<1x256xf32>
    %47 = vector.broadcast %46 : vector<1x256xf32> to vector<32x256xf32>
    %48 = arith.mulf %45, %47 : vector<32x256xf32>
    %c2_46 = arith.constant 2 : index
    %c0_47 = arith.constant 0 : index
    %49 = vector.load %arg3[%c2_46, %c0_47] : memref<3x256xf32, #tpu.memory_space<vmem>>, vector<1x256xf32>
    %50 = vector.broadcast %49 : vector<1x256xf32> to vector<32x256xf32>
    %51 = arith.addf %48, %50 : vector<32x256xf32>
    %c0_48 = arith.constant 0 : index
    %c0_49 = arith.constant 0 : index
    %c0_50 = arith.constant 0 : index
    %52 = vector.load %arg4[%c0_48, %c0_49, %c0_50] : memref<1x32x256xf32, #tpu.memory_space<vmem>>, vector<1x32x256xf32>
    %53 = vector.shape_cast %52 : vector<1x32x256xf32> to vector<32x256xf32>
    %54 = vector.shape_cast %51 : vector<32x256xf32> to vector<1x32x256xf32>
    tpu.vector_store %arg4[%c0_48, %c0_49, %c0_50], %54 {strides = array<i32>} : memref<1x32x256xf32, #tpu.memory_space<vmem>>, vector<1x32x256xf32>,
    return
  }
  func.func @transform_0(%arg0: i32) -> (i32, i32, i32) {
    %c0_i32 = arith.constant 0 : i32
    %c0_i32_0 = arith.constant 0 : i32
    %c0_i32_1 = arith.constant 0 : i32
    return %arg0, %c0_i32, %c0_i32_0 : i32, i32, i32
  }
  func.func @transform_1(%arg0: i32) -> (i32, i32, i32) {
    %c0_i32 = arith.constant 0 : i32
    %c0_i32_0 = arith.constant 0 : i32
    %c0_i32_1 = arith.constant 0 : i32
    %c0_i32_2 = arith.constant 0 : i32
    return %c0_i32, %c0_i32_0, %c0_i32_1 : i32, i32, i32
  }
  func.func @transform_2(%arg0: i32) -> (i32, i32) {
    %c0_i32 = arith.constant 0 : i32
    %c0_i32_0 = arith.constant 0 : i32
    %c0_i32_1 = arith.constant 0 : i32
    return %c0_i32, %c0_i32_0 : i32, i32
  }
  func.func @transform_3(%arg0: i32) -> (i32, i32, i32) {
    %c0_i32 = arith.constant 0 : i32
    %c0_i32_0 = arith.constant 0 : i32
    %c0_i32_1 = arith.constant 0 : i32
    return %arg0, %c0_i32, %c0_i32_0 : i32, i32, i32
  }
}

module attributes {stable_mosaic.version = 11 : i64} {
  func.func @_fact_conv_kernel(%arg0: i32, %arg1: memref<1x40x440xbf16, #tpu.memory_space<vmem>>, %arg2: memref<7x440x256xbf16, #tpu.memory_space<vmem>>, %arg3: memref<3x256xf32, #tpu.memory_space<vmem>>, %arg4: memref<1x32x256xf32, #tpu.memory_space<vmem>>) attributes {dimension_semantics = [#tpu.dimension_semantics<parallel>], iteration_bounds = array<i64: 2>, scalar_prefetch = 0 : i64, scratch_operands = 0 : i64, tpu.core_type = #tpu.core_type<tc>, window_params = [{transform_indices = @transform_0, window_bounds = array<i64: 1, 40, 440>}, {pipeline_mode = #tpu.pipeline_mode<synchronous>, transform_indices = @transform_1, window_bounds = array<i64: 7, 440, 256>}, {pipeline_mode = #tpu.pipeline_mode<synchronous>, transform_indices = @transform_2, window_bounds = array<i64: 3, 256>}, {transform_indices = @transform_3, window_bounds = array<i64: 1, 32, 256>}]} {
    %c0 = arith.constant 0 : index
    %c0_0 = arith.constant 0 : index
    %c0_1 = arith.constant 0 : index
    %0 = vector.load %arg1[%c0, %c0_0, %c0_1] : memref<1x40x440xbf16, #tpu.memory_space<vmem>>, vector<1x32x440xbf16>
    %1 = vector.shape_cast %0 : vector<1x32x440xbf16> to vector<32x440xbf16>
    %c0_2 = arith.constant 0 : index
    %c0_3 = arith.constant 0 : index
    %c0_4 = arith.constant 0 : index
    %2 = vector.load %arg2[%c0_2, %c0_3, %c0_4] : memref<7x440x256xbf16, #tpu.memory_space<vmem>>, vector<1x440x256xbf16>
    %3 = vector.shape_cast %2 : vector<1x440x256xbf16> to vector<440x256xbf16>
    %cst = arith.constant dense<0.000000e+00> : vector<32x256xf32>
    %4 = tpu.matmul %1, %3, %cst {dimension_numbers = #tpu.dot_dimension_numbers<[1], [0], [0], [1], [0, 0, 1, 1], [], []>} : vector<32x440xbf16>, vector<440x256xbf16>, vector<32x256xf32> -> vector<32x256xf32>
    %c0_5 = arith.constant 0 : index
    %c1 = arith.constant 1 : index
    %c0_6 = arith.constant 0 : index
    %5 = vector.load %arg1[%c0_5, %c1, %c0_6] : memref<1x40x440xbf16, #tpu.memory_space<vmem>>, vector<1x32x440xbf16>
    %6 = vector.shape_cast %5 : vector<1x32x440xbf16> to vector<32x440xbf16>
    %c1_7 = arith.constant 1 : index
    %c0_8 = arith.constant 0 : index
    %c0_9 = arith.constant 0 : index
    %7 = vector.load %arg2[%c1_7, %c0_8, %c0_9] : memref<7x440x256xbf16, #tpu.memory_space<vmem>>, vector<1x440x256xbf16>
    %8 = vector.shape_cast %7 : vector<1x440x256xbf16> to vector<440x256xbf16>
    %cst_10 = arith.constant dense<0.000000e+00> : vector<32x256xf32>
    %9 = tpu.matmul %6, %8, %cst_10 {dimension_numbers = #tpu.dot_dimension_numbers<[1], [0], [0], [1], [0, 0, 1, 1], [], []>} : vector<32x440xbf16>, vector<440x256xbf16>, vector<32x256xf32> -> vector<32x256xf32>
    %10 = arith.addf %4, %9 : vector<32x256xf32>
    %c0_11 = arith.constant 0 : index
    %c2 = arith.constant 2 : index
    %c0_12 = arith.constant 0 : index
    %11 = vector.load %arg1[%c0_11, %c2, %c0_12] : memref<1x40x440xbf16, #tpu.memory_space<vmem>>, vector<1x32x440xbf16>
    %12 = vector.shape_cast %11 : vector<1x32x440xbf16> to vector<32x440xbf16>
    %c2_13 = arith.constant 2 : index
    %c0_14 = arith.constant 0 : index
    %c0_15 = arith.constant 0 : index
    %13 = vector.load %arg2[%c2_13, %c0_14, %c0_15] : memref<7x440x256xbf16, #tpu.memory_space<vmem>>, vector<1x440x256xbf16>
    %14 = vector.shape_cast %13 : vector<1x440x256xbf16> to vector<440x256xbf16>
    %cst_16 = arith.constant dense<0.000000e+00> : vector<32x256xf32>
    %15 = tpu.matmul %12, %14, %cst_16 {dimension_numbers = #tpu.dot_dimension_numbers<[1], [0], [0], [1], [0, 0, 1, 1], [], []>} : vector<32x440xbf16>, vector<440x256xbf16>, vector<32x256xf32> -> vector<32x256xf32>
    %16 = arith.addf %10, %15 : vector<32x256xf32>
    %c0_17 = arith.constant 0 : index
    %c3 = arith.constant 3 : index
    %c0_18 = arith.constant 0 : index
    %17 = vector.load %arg1[%c0_17, %c3, %c0_18] : memref<1x40x440xbf16, #tpu.memory_space<vmem>>, vector<1x32x440xbf16>
    %18 = vector.shape_cast %17 : vector<1x32x440xbf16> to vector<32x440xbf16>
    %c3_19 = arith.constant 3 : index
    %c0_20 = arith.constant 0 : index
    %c0_21 = arith.constant 0 : index
    %19 = vector.load %arg2[%c3_19, %c0_20, %c0_21] : memref<7x440x256xbf16, #tpu.memory_space<vmem>>, vector<1x440x256xbf16>
    %20 = vector.shape_cast %19 : vector<1x440x256xbf16> to vector<440x256xbf16>
    %cst_22 = arith.constant dense<0.000000e+00> : vector<32x256xf32>
    %21 = tpu.matmul %18, %20, %cst_22 {dimension_numbers = #tpu.dot_dimension_numbers<[1], [0], [0], [1], [0, 0, 1, 1], [], []>} : vector<32x440xbf16>, vector<440x256xbf16>, vector<32x256xf32> -> vector<32x256xf32>
    %22 = arith.addf %16, %21 : vector<32x256xf32>
    %c0_23 = arith.constant 0 : index
    %c4 = arith.constant 4 : index
    %c0_24 = arith.constant 0 : index
    %23 = vector.load %arg1[%c0_23, %c4, %c0_24] : memref<1x40x440xbf16, #tpu.memory_space<vmem>>, vector<1x32x440xbf16>
    %24 = vector.shape_cast %23 : vector<1x32x440xbf16> to vector<32x440xbf16>
    %c4_25 = arith.constant 4 : index
    %c0_26 = arith.constant 0 : index
    %c0_27 = arith.constant 0 : index
    %25 = vector.load %arg2[%c4_25, %c0_26, %c0_27] : memref<7x440x256xbf16, #tpu.memory_space<vmem>>, vector<1x440x256xbf16>
    %26 = vector.shape_cast %25 : vector<1x440x256xbf16> to vector<440x256xbf16>
    %cst_28 = arith.constant dense<0.000000e+00> : vector<32x256xf32>
    %27 = tpu.matmul %24, %26, %cst_28 {dimension_numbers = #tpu.dot_dimension_numbers<[1], [0], [0], [1], [0, 0, 1, 1], [], []>} : vector<32x440xbf16>, vector<440x256xbf16>, vector<32x256xf32> -> vector<32x256xf32>
    %28 = arith.addf %22, %27 : vector<32x256xf32>
    %c0_29 = arith.constant 0 : index
    %c5 = arith.constant 5 : index
    %c0_30 = arith.constant 0 : index
    %29 = vector.load %arg1[%c0_29, %c5, %c0_30] : memref<1x40x440xbf16, #tpu.memory_space<vmem>>, vector<1x32x440xbf16>
    %30 = vector.shape_cast %29 : vector<1x32x440xbf16> to vector<32x440xbf16>
    %c5_31 = arith.constant 5 : index
    %c0_32 = arith.constant 0 : index
    %c0_33 = arith.constant 0 : index
    %31 = vector.load %arg2[%c5_31, %c0_32, %c0_33] : memref<7x440x256xbf16, #tpu.memory_space<vmem>>, vector<1x440x256xbf16>
    %32 = vector.shape_cast %31 : vector<1x440x256xbf16> to vector<440x256xbf16>
    %cst_34 = arith.constant dense<0.000000e+00> : vector<32x256xf32>
    %33 = tpu.matmul %30, %32, %cst_34 {dimension_numbers = #tpu.dot_dimension_numbers<[1], [0], [0], [1], [0, 0, 1, 1], [], []>} : vector<32x440xbf16>, vector<440x256xbf16>, vector<32x256xf32> -> vector<32x256xf32>
    %34 = arith.addf %28, %33 : vector<32x256xf32>
    %c0_35 = arith.constant 0 : index
    %c6 = arith.constant 6 : index
    %c0_36 = arith.constant 0 : index
    %35 = vector.load %arg1[%c0_35, %c6, %c0_36] : memref<1x40x440xbf16, #tpu.memory_space<vmem>>, vector<1x32x440xbf16>
    %36 = vector.shape_cast %35 : vector<1x32x440xbf16> to vector<32x440xbf16>
    %c6_37 = arith.constant 6 : index
    %c0_38 = arith.constant 0 : index
    %c0_39 = arith.constant 0 : index
    %37 = vector.load %arg2[%c6_37, %c0_38, %c0_39] : memref<7x440x256xbf16, #tpu.memory_space<vmem>>, vector<1x440x256xbf16>
    %38 = vector.shape_cast %37 : vector<1x440x256xbf16> to vector<440x256xbf16>
    %cst_40 = arith.constant dense<0.000000e+00> : vector<32x256xf32>
    %39 = tpu.matmul %36, %38, %cst_40 {dimension_numbers = #tpu.dot_dimension_numbers<[1], [0], [0], [1], [0, 0, 1, 1], [], []>} : vector<32x440xbf16>, vector<440x256xbf16>, vector<32x256xf32> -> vector<32x256xf32>
    %40 = arith.addf %34, %39 : vector<32x256xf32>
    %c0_41 = arith.constant 0 : index
    %c0_42 = arith.constant 0 : index
    %41 = vector.load %arg3[%c0_41, %c0_42] : memref<3x256xf32, #tpu.memory_space<vmem>>, vector<1x256xf32>
    %42 = vector.broadcast %41 : vector<1x256xf32> to vector<32x256xf32>
    %43 = arith.addf %40, %42 : vector<32x256xf32>
    %cst_43 = arith.constant 0.000000e+00 : f32
    %44 = vector.broadcast %cst_43 : f32 to vector<32x256xf32>
    %45 = arith.maximumf %43, %44 : vector<32x256xf32>
    %c1_44 = arith.constant 1 : index
    %c0_45 = arith.constant 0 : index
    %46 = vector.load %arg3[%c1_44, %c0_45] : memref<3x256xf32, #tpu.memory_space<vmem>>, vector<1x256xf32>
    %47 = vector.broadcast %46 : vector<1x256xf32> to vector<32x256xf32>
    %48 = arith.mulf %45, %47 : vector<32x256xf32>
    %c2_46 = arith.constant 2 : index
    %c0_47 = arith.constant 0 : index
    %49 = vector.load %arg3[%c2_46, %c0_47] : memref<3x256xf32, #tpu.memory_space<vmem>>, vector<1x256xf32>
    %50 = vector.broadcast %49 : vector<1x256xf32> to vector<32x256xf32>
    %51 = arith.addf %48, %50 : vector<32x256xf32>
    %c0_48 = arith.constant 0 : index
    %c0_49 = arith.constant 0 : index
    %c0_50 = arith.constant 0 : index
    %52 = vector.load %arg4[%c0_48, %c0_49, %c0_50] : memref<1x32x256xf32, #tpu.memory_space<vmem>>, vector<1x32x256xf32>
    %53 = vector.shape_cast %52 : vector<1x32x256xf32> to vector<32x256xf32>
    %54 = vector.shape_cast %51 : vector<32x256xf32> to vector<1x32x256xf32>
    tpu.vector_store %arg4[%c0_48, %c0_49, %c0_50], %54 {strides = array<i32>} : memref<1x32x256xf32, #tpu.memory_space<vmem>>, vector<1x32x256xf32>,
    return
  }
  func.func @transform_0(%arg0: i32) -> (i32, i32, i32) {
    %c0_i32 = arith.constant 0 : i32
    %c0_i32_0 = arith.constant 0 : i32
    %c0_i32_1 = arith.constant 0 : i32
    return %arg0, %c0_i32, %c0_i32_0 : i32, i32, i32
  }
  func.func @transform_1(%arg0: i32) -> (i32, i32, i32) {
    %c0_i32 = arith.constant 0 : i32
    %c0_i32_0 = arith.constant 0 : i32
    %c0_i32_1 = arith.constant 0 : i32
    %c0_i32_2 = arith.constant 0 : i32
    return %c0_i32, %c0_i32_0, %c0_i32_1 : i32, i32, i32
  }
  func.func @transform_2(%arg0: i32) -> (i32, i32) {
    %c0_i32 = arith.constant 0 : i32
    %c0_i32_0 = arith.constant 0 : i32
    %c0_i32_1 = arith.constant 0 : i32
    return %c0_i32, %c0_i32_0 : i32, i32
  }
  func.func @transform_3(%arg0: i32) -> (i32, i32, i32) {
    %c0_i32 = arith.constant 0 : i32
    %c0_i32_0 = arith.constant 0 : i32
    %c0_i32_1 = arith.constant 0 : i32
    return %arg0, %c0_i32, %c0_i32_0 : i32, i32, i32
  }
}

</mosaic_0001>

<llo_original>
// kernel: tile.37
$region0: #{tile.37}
  #allocation0 [shape = 's32[1]{0}', space=sflag, size = 0x4, scoped, tag = 'scoped memory for tile.37']
  %s0 = inlined_call_operand.vmem [shape: f32[8], index: 0, kind: input, shape index: {}]
  %s1 = inlined_call_operand.vmem [shape: f32[32,8], index: 1, kind: output, shape index: {}]
  // Predicated region
  $region2: #{tile.37} parent=0 // pred_check
    _
  $region3: #{tile.37} parent=0 // pred_check_branch
    %3 = sbr.rel (0) target = $region5
  $region4: #{tile.37} parent=0 // pred_region
    _
  $region5: #{tile.37} parent=0 // pred_fallthru
    _
  %v4 = vld [vmem:[%s0] ss:$0 sm:$0xff]
  %5 = vst [vmem:[%s1] sm:$0xff] %v4
  %s6 = scalar_lea.vmem %s1, 8
  %7 = vst [vmem:[%s6] sm:$0xff] %v4
  %s8 = scalar_lea.vmem %s1, 16
  %9 = vst [vmem:[%s8] sm:$0xff] %v4
  %s10 = scalar_lea.vmem %s1, 24
  %11 = vst [vmem:[%s10] sm:$0xff] %v4

// kernel: tile.43
$region0: #{tile.43}
  %s0 = inlined_call_operand.vmem [shape: f32[32,8], index: 0, kind: input, shape index: {}]
  %s1 = inlined_call_operand.vmem [shape: f32[1,256], index: 1, kind: output, shape index: {}]
  $region1: #{tile.43} parent=0
    #allocation0 [shape = 'u8[8192]{0}', space=vmem, size = 0x2000, scoped, tag = 'scoped mem for output reshape']
    %s2 = smov 3
    %v3 = vld [vmem:[%s0] ss:$16 sm:%s2]
    %vm4 = vcmask 64512
    %5 = vst.msk [vmem:[#allocation0] ss:$8 sm:$0x3] %vm4, %v3
    %s6 = scalar_lea.vmem %s0, 15
    %s7 = smov 3
    %v8 = vld [vmem:[%s6] ss:$16 sm:%s7]
    %9 = vrot.lane.b32.xlu0 %v8, 120
    %v10 = vpop.permute.xlu0 %9
    %vm11 = vcmask 1048512
    %12 = vst.msk [vmem:[#allocation0] ss:$8 sm:$0x3] %vm11, %v10
    %s13 = scalar_lea.vmem %s0, 14
    %s14 = smov 3
    %v15 = vld [vmem:[%s13] ss:$16 sm:%s14]
    %16 = vrot.lane.b32.xlu0 %v15, 112
    %v17 = vpop.permute.xlu0 %16
    %vm18 = vcmask 982912
    %19 = vst.msk [vmem:[#allocation0] ss:$8 sm:$0x3] %vm18, %v17
    %s20 = scalar_lea.vmem %s0, 13
    %s21 = smov 3
    %v22 = vld [vmem:[%s20] ss:$16 sm:%s21]
    %23 = vrot.lane.b32.xlu0 %v22, 104
    %v24 = vpop.permute.xlu0 %23
    %vm25 = vcmask 917312
    %26 = vst.msk [vmem:[#allocation0] ss:$8 sm:$0x3] %vm25, %v24
    %s27 = scalar_lea.vmem %s0, 12
    %s28 = smov 3
    %v29 = vld [vmem:[%s27] ss:$16 sm:%s28]
    %30 = vrot.lane.b32.xlu0 %v29, 96
    %v31 = vpop.permute.xlu0 %30
    %vm32 = vcmask 851712
    %33 = vst.msk [vmem:[#allocation0] ss:$8 sm:$0x3] %vm32, %v31
    %s34 = scalar_lea.vmem %s0, 11
    %s35 = smov 3
    %v36 = vld [vmem:[%s34] ss:$16 sm:%s35]
    %37 = vrot.lane.b32.xlu0 %v36, 88
    %v38 = vpop.permute.xlu0 %37
    %vm39 = vcmask 786112
    %40 = vst.msk [vmem:[#allocation0] ss:$8 sm:$0x3] %vm39, %v38
    %s41 = scalar_lea.vmem %s0, 10
    %s42 = smov 3
    %v43 = vld [vmem:[%s41] ss:$16 sm:%s42]
    %44 = vrot.lane.b32.xlu0 %v43, 80
    %v45 = vpop.permute.xlu0 %44
    %vm46 = vcmask 720512
    %47 = vst.msk [vmem:[#allocation0] ss:$8 sm:$0x3] %vm46, %v45
    %s48 = scalar_lea.vmem %s0, 9
    %s49 = smov 3
    %v50 = vld [vmem:[%s48] ss:$16 sm:%s49]
    %51 = vrot.lane.b32.xlu0 %v50, 72
    %v52 = vpop.permute.xlu0 %51
    %vm53 = vcmask 654912
    %54 = vst.msk [vmem:[#allocation0] ss:$8 sm:$0x3] %vm53, %v52
    %s55 = scalar_lea.vmem %s0, 8
    %s56 = smov 3
    %v57 = vld [vmem:[%s55] ss:$16 sm:%s56]
    %58 = vrot.lane.b32.xlu0 %v57, 64
    %v59 = vpop.permute.xlu0 %58
    %vm60 = vcmask 589312
    %61 = vst.msk [vmem:[#allocation0] ss:$8 sm:$0x3] %vm60, %v59
    %s62 = scalar_lea.vmem %s0, 7
    %s63 = smov 3
    %v64 = vld [vmem:[%s62] ss:$16 sm:%s63]
    %65 = vrot.lane.b32.xlu0 %v64, 56
    %v66 = vpop.permute.xlu0 %65
    %vm67 = vcmask 523712
    %68 = vst.msk [vmem:[#allocation0] ss:$8 sm:$0x3] %vm67, %v66
    %s69 = scalar_lea.vmem %s0, 6
    %s70 = smov 3
    %v71 = vld [vmem:[%s69] ss:$16 sm:%s70]
    %72 = vrot.lane.b32.xlu0 %v71, 48
    %v73 = vpop.permute.xlu0 %72
    %vm74 = vcmask 458112
    %75 = vst.msk [vmem:[#allocation0] ss:$8 sm:$0x3] %vm74, %v73
    %s76 = scalar_lea.vmem %s0, 5
    %s77 = smov 3
    %v78 = vld [vmem:[%s76] ss:$16 sm:%s77]
    %79 = vrot.lane.b32.xlu0 %v78, 40
    %v80 = vpop.permute.xlu0 %79
    %vm81 = vcmask 392512
    %82 = vst.msk [vmem:[#allocation0] ss:$8 sm:$0x3] %vm81, %v80
    %s83 = scalar_lea.vmem %s0, 4
    %s84 = smov 3
    %v85 = vld [vmem:[%s83] ss:$16 sm:%s84]
    %86 = vrot.lane.b32.xlu0 %v85, 32
    %v87 = vpop.permute.xlu0 %86
    %vm88 = vcmask 326912
    %89 = vst.msk [vmem:[#allocation0] ss:$8 sm:$0x3] %vm88, %v87
    %s90 = scalar_lea.vmem %s0, 3
    %s91 = smov 3
    %v92 = vld [vmem:[%s90] ss:$16 sm:%s91]
    %93 = vrot.lane.b32.xlu0 %v92, 24
    %v94 = vpop.permute.xlu0 %93
    %vm95 = vcmask 261312
    %96 = vst.msk [vmem:[#allocation0] ss:$8 sm:$0x3] %vm95, %v94
    %s97 = scalar_lea.vmem %s0, 2
    %s98 = smov 3
    %v99 = vld [vmem:[%s97] ss:$16 sm:%s98]
    %100 = vrot.lane.b32.xlu0 %v99, 16
    %v101 = vpop.permute.xlu0 %100
    %vm102 = vcmask 195712
    %103 = vst.msk [vmem:[#allocation0] ss:$8 sm:$0x3] %vm102, %v101
    %s104 = scalar_lea.vmem %s0, 1
    %s105 = smov 3
    %v106 = vld [vmem:[%s104] ss:$16 sm:%s105]
    %107 = vrot.lane.b32.xlu0 %v106, 8
    %v108 = vpop.permute.xlu0 %107
    %vm109 = vcmask 130112
    %110 = vst.msk [vmem:[#allocation0] ss:$8 sm:$0x3] %vm109, %v108
    %s112 = ssub.s32 2, 1
    %v113 = vld [vmem:[#allocation0] sm:%s112]
    %s115 = ssub.s32 2, 1
    %116 = vst [vmem:[%s1] sm:%s115] %v113
    %s117 = scalar_lea.vmem [#allocation0], 8
    %v118 = vld [vmem:[%s117] sm:%s112]
    %s120 = ssub.s32 2, 1
    %s121 = scalar_lea.vmem %s1, 1
    %122 = vst [vmem:[%s121] sm:%s120] %v118

// kernel: lc_cifar10_forward.2
$region0: #{lc_cifar10_forward.2}
  #allocation0 [shape = 'u32[]', space=smem, size = 0x4, offset = 0x4, fixed_abs, tag = 'smem constant byte address 0x4 - core index']
  #allocation1 [shape = 'u32[72,128]{1,0:T(1,128)}', space=vmem, size = 0x9000, scoped, tag = 'internal scratch']
  %s0 = inlined_call_operand.vmem [shape: bf16[2,40,120], index: 0, kind: input, shape index: {}]
  %s1 = inlined_call_operand.vmem [shape: bf16[7,120,256], index: 1, kind: input, shape index: {}]
  %s2 = inlined_call_operand.vmem [shape: f32[3,256], index: 2, kind: input, shape index: {}]
  %s3 = inlined_call_operand.vmem [shape: f32[2,32,256], index: 3, kind: output, shape index: {}]
  %s4 = sld [smem:[#allocation0]]
  $region45: #{lc_cifar10_forward.2} parent=0
    _
  %s6 = ssub.s32 1, %s4
  %s7 = scalar_select 0, %s6, %s4
  loop: start=0, step=1, limit=4
  $region2: #{lc_cifar10_forward.2} parent=0 // loop_pre_header
    _
  $region3: #{lc_cifar10_forward.2} parent=0 // loop_header
    %s9 = sphi 0, %s13
    %p10 = scmp.ge.s32.totalorder %s9, 4
    %s19 = sphi 0, %s21
    %s22 = sphi 0, %s19
    %s23 = sphi 0, %s22
    %s39 = sphi 0, %s23
    %s43 = sphi 0, %s43
    %s45 = sphi 0, %s43
    %s46 = sphi 0, %s45
    %s60 = sphi 0, %s46
    %s64 = sphi 0, %s64
    %s66 = sphi 0, %s64
    %s67 = sphi 0, %s66
    %s81 = sphi 0, %s67
    %s87 = sphi 0, %s89
    %s90 = sphi 0, %s87
    %s91 = sphi 0, %s90
    %s107 = sphi 0, %s91
  $region4: #{lc_cifar10_forward.2} parent=0 // loop_header_branch
    %12 = sbr.rel (%p10) target = $region8
  $region5: #{lc_cifar10_forward.2} parent=0 // loop_body
    %s14 = ssub.s32 %s9, 1
    %s15 = ssub.s32 %s9, 2
    %s16 = sadd.s32 %s9, 1
    %s17 = ssub.s32 %s9, %s16
    %p18 = scmp.eq.s32.totalorder %s17, 0
    %s20 = sadd.s32 %s19, 1
    %s21 = scalar_select %p18, %s19, %s20
    %p24 = pneg %p18
    %p25 = scmp.eq.s32.totalorder %s9, 1
    %p26 = por %p24, %p25
    %p27 = scmp.ne.s32.totalorder %s19, %s22
    %p28 = scmp.eq.s32.totalorder %s9, 0
    %p29 = por %p27, %p28
    %p30 = scmp.ne.s32.totalorder %s19, %s22
    %p31 = scmp.eq.s32.totalorder %s14, 1
    %p32 = por %p30, %p31
    %p33 = scmp.ne.s32.totalorder %s22, %s23
    %p34 = scmp.eq.s32.totalorder %s14, 0
    %p35 = por %p33, %p34
    %p36 = scmp.ne.s32.totalorder %s22, %s23
    %p37 = scmp.eq.s32.totalorder %s15, 1
    %p38 = por %p36, %p37
    %p40 = scmp.ne.s32.totalorder %s23, %s39
    %p41 = scmp.eq.s32.totalorder %s15, 0
    %p42 = por %p40, %p41
    %s44 = sadd.s32 %s43, 1
    %p47 = scmp.eq.s32.totalorder %s9, 1
    %p48 = scmp.ne.s32.totalorder %s43, %s45
    %p49 = scmp.eq.s32.totalorder %s9, 0
    %p50 = por %p48, %p49
    %p51 = scmp.ne.s32.totalorder %s43, %s45
    %p52 = scmp.eq.s32.totalorder %s14, 1
    %p53 = por %p51, %p52
    %p54 = scmp.ne.s32.totalorder %s45, %s46
    %p55 = scmp.eq.s32.totalorder %s14, 0
    %p56 = por %p54, %p55
    %p57 = scmp.ne.s32.totalorder %s45, %s46
    %p58 = scmp.eq.s32.totalorder %s15, 1
    %p59 = por %p57, %p58
    %p61 = scmp.ne.s32.totalorder %s46, %s60
    %p62 = scmp.eq.s32.totalorder %s15, 0
    %p63 = por %p61, %p62
    %s65 = sadd.s32 %s64, 1
    %p68 = scmp.eq.s32.totalorder %s9, 1
    %p69 = scmp.ne.s32.totalorder %s64, %s66
    %p70 = scmp.eq.s32.totalorder %s9, 0
    %p71 = por %p69, %p70
    %p72 = scmp.ne.s32.totalorder %s64, %s66
    %p73 = scmp.eq.s32.totalorder %s14, 1
    %p74 = por %p72, %p73
    %p75 = scmp.ne.s32.totalorder %s66, %s67
    %p76 = scmp.eq.s32.totalorder %s14, 0
    %p77 = por %p75, %p76
    %p78 = scmp.ne.s32.totalorder %s66, %s67
    %p79 = scmp.eq.s32.totalorder %s15, 1
    %p80 = por %p78, %p79
    %p82 = scmp.ne.s32.totalorder %s67, %s81
    %p83 = scmp.eq.s32.totalorder %s15, 0
    %p84 = por %p82, %p83
    %s85 = ssub.s32 %s9, %s16
    %p86 = scmp.eq.s32.totalorder %s85, 0
    %s88 = sadd.s32 %s87, 1
    %s89 = scalar_select %p86, %s87, %s88
    %p92 = pneg %p86
    %p93 = scmp.eq.s32.totalorder %s9, 1
    %p94 = por %p92, %p93
    %p95 = scmp.ne.s32.totalorder %s87, %s90
    %p96 = scmp.eq.s32.totalorder %s9, 0
    %p97 = por %p95, %p96
    %p98 = scmp.ne.s32.totalorder %s87, %s90
    %p99 = scmp.eq.s32.totalorder %s14, 1
    %p100 = por %p98, %p99
    %p101 = scmp.ne.s32.totalorder %s90, %s91
    %p102 = scmp.eq.s32.totalorder %s14, 0
    %p103 = por %p101, %p102
    %p104 = scmp.ne.s32.totalorder %s90, %s91
    %p105 = scmp.eq.s32.totalorder %s15, 1
    %p106 = por %p104, %p105
    %p108 = scmp.ne.s32.totalorder %s91, %s107
    %p109 = scmp.eq.s32.totalorder %s15, 0
    %p110 = por %p108, %p109
    %p111 = scmp.le.s32.totalorder 1, %s9
    %p112 = scmp.lt.s32.totalorder %s9, 3
    %p113 = pnand %p111, %p112
    %p114 = pneg %p113
    // Predicated region
    $region9: #{lc_cifar10_forward.2} parent=5 // pred_check
      _
    $region10: #{lc_cifar10_forward.2} parent=5 // pred_check_branch
      %116 = sbr.rel (%p113) target = $region12
    $region11: #{lc_cifar10_forward.2} parent=5 // pred_region
      %s117 = ssub.s32 %s9, 1
      // Predicated region
      $region13: #{lc_cifar10_forward.2} parent=11 // pred_check
        %p118 = pneg %p56
      $region14: #{lc_cifar10_forward.2} parent=11 // pred_check_branch
        %120 = sbr.rel (%p118) target = $region16
      $region15: #{lc_cifar10_forward.2} parent=11 // pred_region
        _
      $region16: #{lc_cifar10_forward.2} parent=11 // pred_fallthru
        _
      // Predicated region
      $region17: #{lc_cifar10_forward.2} parent=11 // pred_check
        %p121 = pneg %p77
      $region18: #{lc_cifar10_forward.2} parent=11 // pred_check_branch
        %123 = sbr.rel (%p121) target = $region20
      $region19: #{lc_cifar10_forward.2} parent=11 // pred_region
        _
      $region20: #{lc_cifar10_forward.2} parent=11 // pred_fallthru
        _
    $region12: #{lc_cifar10_forward.2} parent=5 // pred_fallthru
      _
    %p124 = scmp.lt.s32.totalorder %s9, 2
    // Predicated region
    $region21: #{lc_cifar10_forward.2} parent=5 // pred_check
      %p125 = pneg %p124
    $region22: #{lc_cifar10_forward.2} parent=5 // pred_check_branch
      %127 = sbr.rel (%p125) target = $region24
    $region23: #{lc_cifar10_forward.2} parent=5 // pred_region
      // Predicated region
      $region25: #{lc_cifar10_forward.2} parent=23 // pred_check
        %p128 = pneg %p29
      $region26: #{lc_cifar10_forward.2} parent=23 // pred_check_branch
        %130 = sbr.rel (%p128) target = $region28
      $region27: #{lc_cifar10_forward.2} parent=23 // pred_region
        %p131 = scmp.lt.s32.totalorder %s9, 1
        %s132 = scalar_select %p131, %s9, 1
        %s133 = smul.addr %s132, 5
        %s134 = smul.addr %s133, 4
        %s135 = scalar_lea.vmem %s0, %s134
      $region28: #{lc_cifar10_forward.2} parent=23 // pred_fallthru
        _
    $region24: #{lc_cifar10_forward.2} parent=5 // pred_fallthru
      _
    %p136 = scmp.le.s32.totalorder 1, %s9
    %p137 = scmp.lt.s32.totalorder %s9, 3
    %p138 = pnand %p136, %p137
    %p139 = pneg %p138
    // Predicated region
    $region29: #{lc_cifar10_forward.2} parent=5 // pred_check
      _
    $region30: #{lc_cifar10_forward.2} parent=5 // pred_check_branch
      %141 = sbr.rel (%p138) target = $region32
    $region31: #{lc_cifar10_forward.2} parent=5 // pred_region
      %s142 = ssub.s32 %s9, 1
      %p143 = scmp.lt.s32.totalorder %s14, 1
      %s144 = scalar_select %p143, %s14, 1
      %s145 = smul.addr %s144, 5
      %s146 = smul.addr %s145, 4
      %s147 = scalar_lea.vmem %s0, %s146
      %p148 = pneg %p35
      %p149 = pneg %p32
      %p150 = pneg %p56
      %p151 = pneg %p53
      %p152 = pneg %p77
      %p153 = pneg %p74
      %p154 = pneg %p103
      %p155 = pneg %p100
      %p156 = scmp.lt.s32.totalorder %s14, 1
      %s157 = scalar_select %p156, %s14, 1
      %s158 = smul.addr %s157, 8
      %s159 = smul.addr %s158, 8
      %s160 = scalar_lea.vmem %s3, %s159
      %p161 = scmp.lt.s32.totalorder %s14, 1
      %s162 = scalar_select %p161, %s14, 1
      %s163 = smul.addr %s162, 5
      %s164 = smul.addr %s163, 4
      %s165 = scalar_lea.vmem %s0, %s164
      %p166 = scmp.lt.s32.totalorder %s14, 1
      %s167 = scalar_select %p166, %s14, 1
      %s168 = smul.addr %s167, 8
      %s169 = smul.addr %s168, 8
      %s170 = scalar_lea.vmem %s3, %s169
      %v171 = vld [vmem:[%s165] sm:$0xf]
      %v172 = vld [vmem:[%s165 + $0x4] sm:$0xf]
      %v173 = vld [vmem:[%s165 + $0x8] sm:$0xf]
      %v174 = vld [vmem:[%s165 + $0xc] sm:$0xf]
      %v175 = vld [vmem:[%s1] sm:$0xff]
      %v176 = vld [vmem:[%s1 + $0x8] sm:$0xff]
      %v177 = vld [vmem:[%s1 + $0x10] sm:$0xff]
      %v178 = vld [vmem:[%s1 + $0x18] sm:$0xff]
      %v179 = vld [vmem:[%s1 + $0x20] sm:$0xff]
      %v180 = vld [vmem:[%s1 + $0x28] sm:$0xff]
      %v181 = vld [vmem:[%s1 + $0x30] sm:$0xff]
      %v182 = vld [vmem:[%s1 + $0x38] sm:$0xff]
      %v183 = vld [vmem:[%s1 + $0x40] sm:$0xff]
      %v184 = vld [vmem:[%s1 + $0x48] sm:$0xff]
      %v185 = vld [vmem:[%s1 + $0x50] sm:$0xff]
      %v186 = vld [vmem:[%s1 + $0x58] sm:$0xff]
      %v187 = vld [vmem:[%s1 + $0x60] sm:$0xff]
      %v188 = vld [vmem:[%s1 + $0x68] sm:$0xff]
      %v189 = vld [vmem:[%s1 + $0x70] sm:$0xff]
      %v190 = vld [vmem:[%s165 + $0x10] sm:$0x1]
      %s191 = scalar_lea.vmem %s1, 120
      %v192 = vld [vmem:[%s191] sm:$0xff]
      %v193 = vld [vmem:[%s191 + $0x8] sm:$0xff]
      %v194 = vld [vmem:[%s191 + $0x10] sm:$0xff]
      %v195 = vld [vmem:[%s191 + $0x18] sm:$0xff]
      %v196 = vld [vmem:[%s191 + $0x20] sm:$0xff]
      %v197 = vld [vmem:[%s191 + $0x28] sm:$0xff]
      %v198 = vld [vmem:[%s191 + $0x30] sm:$0xff]
      %v199 = vld [vmem:[%s191 + $0x38] sm:$0xff]
      %v200 = vld [vmem:[%s191 + $0x40] sm:$0xff]
      %v201 = vld [vmem:[%s191 + $0x48] sm:$0xff]
      %v202 = vld [vmem:[%s191 + $0x50] sm:$0xff]
      %v203 = vld [vmem:[%s191 + $0x58] sm:$0xff]
      %v204 = vld [vmem:[%s191 + $0x60] sm:$0xff]
      %v205 = vld [vmem:[%s191 + $0x68] sm:$0xff]
      %v206 = vld [vmem:[%s191 + $0x70] sm:$0xff]
      %v212 = vunpack.c.l.b16 %v171
      %v213 = vunpack.c.l.b16 %v172
      %v214 = vunpack.c.l.b16 %v173
      %v215 = vunpack.c.l.b16 %v174
      %v216 = vunpack.c.l.b16 %v190
      %v217 = vpack.c.b16 %v213, %v212
      %v218 = vpack.c.b16 %v215, %v214
      %v219 = vpack.c.b16 %v216, %v216
      %vm220 = vsmask.f32 7424
      %v222 = vshrl.u32 %v217, 16
      %v224 = vshll.u32 %v217, 16
      %v226 = vrot.slane %v224, 1
      %v227 = vor.u32 %v222, %v226
      %v229 = vshll.u32 %v218, 16
      %v231 = vrot.slane %v229, 1
      %v232 = vsel %vm220, %v227, %v231
      %v233 = vshrl.u32 %v218, 16
      %v235 = vor.u32 %v233, %v231
      %v237 = vshll.u32 %v219, 16
      %v239 = vrot.slane %v237, 1
      %v240 = vsel %vm220, %v235, %v239
      %v256 = vunpack.c.l.b16 %v192
      %v257 = vunpack.c.h.b16 %v192
      %v258 = vunpack.c.l.b16 %v193
      %v259 = vunpack.c.h.b16 %v193
      %v260 = vunpack.c.l.b16 %v194
      %v261 = vunpack.c.h.b16 %v194
      %v262 = vunpack.c.l.b16 %v195
      %v263 = vunpack.c.h.b16 %v195
      %v264 = vunpack.c.l.b16 %v196
      %v265 = vunpack.c.h.b16 %v196
      %v266 = vunpack.c.l.b16 %v197
      %v267 = vunpack.c.h.b16 %v197
      %v268 = vunpack.c.l.b16 %v198
      %v269 = vunpack.c.h.b16 %v198
      %v270 = vunpack.c.l.b16 %v199
      %v271 = vunpack.c.h.b16 %v199
      %v272 = vunpack.c.l.b16 %v200
      %v273 = vunpack.c.h.b16 %v200
      %v274 = vunpack.c.l.b16 %v201
      %v275 = vunpack.c.h.b16 %v201
      %v276 = vunpack.c.l.b16 %v202
      %v277 = vunpack.c.h.b16 %v202
      %v278 = vunpack.c.l.b16 %v203
      %v279 = vunpack.c.h.b16 %v203
      %v280 = vunpack.c.l.b16 %v204
      %v281 = vunpack.c.h.b16 %v204
      %v282 = vunpack.c.l.b16 %v205
      %v283 = vunpack.c.h.b16 %v205
      %v284 = vunpack.c.l.b16 %v206
      %v285 = vunpack.c.h.b16 %v206
      %v286 = vpack.c.b16 %v258, %v256
      %v287 = vpack.c.b16 %v259, %v257
      %v288 = vpack.c.b16 %v262, %v260
      %v289 = vpack.c.b16 %v263, %v261
      %v290 = vpack.c.b16 %v266, %v264
      %v291 = vpack.c.b16 %v267, %v265
      %v292 = vpack.c.b16 %v270, %v268
      %v293 = vpack.c.b16 %v271, %v269
      %v294 = vpack.c.b16 %v274, %v272
      %v295 = vpack.c.b16 %v275, %v273
      %v296 = vpack.c.b16 %v278, %v276
      %v297 = vpack.c.b16 %v279, %v277
      %v298 = vpack.c.b16 %v282, %v280
      %v299 = vpack.c.b16 %v283, %v281
      %v300 = vpack.c.b16 %v284, %v284
      %v301 = vpack.c.b16 %v285, %v285
      %vm316 = vcmask 982016
      %v318 = vsel %vm316, %v232, 0
      %v321 = vsel %vm316, %v240, 0
      %vm323 = vcmask 1043456
      %v325 = vsel %vm323, %v300, 0
      %v328 = vsel %vm323, %v301, 0
      %330 = vmatpush.bf16.msra.mxu0 %v325
      %331 = vmatpush.bf16.msra.mxu0 %v298
      %332 = vmatpush.bf16.msra.mxu0 %v296
      %333 = vmatpush.bf16.msra.mxu0 %v294
      %334 = vmatpush.bf16.msra.mxu0 %v292
      %335 = vmatpush.bf16.msra.mxu0 %v290
      %336 = vmatpush.bf16.msra.mxu0 %v288
      %337 = vmatpush.bf16.msra.mxu0 %v286
      %338 = vmatmul.bf16.gmra.mxu0 %v318
      %v339 = vpop.f32.mrf.mxu0
      %v340 = vadd.f32 0.0, %v339
      %v341 = vpop.f32.mrf.mxu0
      %v342 = vadd.f32 0.0, %v341
      %343 = vmatmul.bf16.gmra.mxu0 %v321
      %v344 = vpop.f32.mrf.mxu0
      %v345 = vadd.f32 0.0, %v344
      %v346 = vpop.f32.mrf.mxu0
      %v347 = vadd.f32 0.0, %v346
      %348 = vdwg.mxu0
      %349 = vmatpush.bf16.msra.mxu0 %v328
      %350 = vmatpush.bf16.msra.mxu0 %v299
      %351 = vmatpush.bf16.msra.mxu0 %v297
      %352 = vmatpush.bf16.msra.mxu0 %v295
      %353 = vmatpush.bf16.msra.mxu0 %v293
      %354 = vmatpush.bf16.msra.mxu0 %v291
      %355 = vmatpush.bf16.msra.mxu0 %v289
      %356 = vmatpush.bf16.msra.mxu0 %v287
      %357 = vmatmul.bf16.gmra.mxu0 %v318
      %v358 = vpop.f32.mrf.mxu0
      %v359 = vadd.f32 0.0, %v358
      %v360 = vpop.f32.mrf.mxu0
      %v361 = vadd.f32 0.0, %v360
      %362 = vmatmul.bf16.gmra.mxu0 %v321
      %v363 = vpop.f32.mrf.mxu0
      %v364 = vadd.f32 0.0, %v363
      %v365 = vpop.f32.mrf.mxu0
      %v366 = vadd.f32 0.0, %v365
      %367 = vdwg.mxu0
      %v383 = vunpack.c.l.b16 %v175
      %v384 = vunpack.c.h.b16 %v175
      %v385 = vunpack.c.l.b16 %v176
      %v386 = vunpack.c.h.b16 %v176
      %v387 = vunpack.c.l.b16 %v177
      %v388 = vunpack.c.h.b16 %v177
      %v389 = vunpack.c.l.b16 %v178
      %v390 = vunpack.c.h.b16 %v178
      %v391 = vunpack.c.l.b16 %v179
      %v392 = vunpack.c.h.b16 %v179
      %v393 = vunpack.c.l.b16 %v180
      %v394 = vunpack.c.h.b16 %v180
      %v395 = vunpack.c.l.b16 %v181
      %v396 = vunpack.c.h.b16 %v181
      %v397 = vunpack.c.l.b16 %v182
      %v398 = vunpack.c.h.b16 %v182
      %v399 = vunpack.c.l.b16 %v183
      %v400 = vunpack.c.h.b16 %v183
      %v401 = vunpack.c.l.b16 %v184
      %v402 = vunpack.c.h.b16 %v184
      %v403 = vunpack.c.l.b16 %v185
      %v404 = vunpack.c.h.b16 %v185
      %v405 = vunpack.c.l.b16 %v186
      %v406 = vunpack.c.h.b16 %v186
      %v407 = vunpack.c.l.b16 %v187
      %v408 = vunpack.c.h.b16 %v187
      %v409 = vunpack.c.l.b16 %v188
      %v410 = vunpack.c.h.b16 %v188
      %v411 = vunpack.c.l.b16 %v189
      %v412 = vunpack.c.h.b16 %v189
      %v413 = vpack.c.b16 %v385, %v383
      %v414 = vpack.c.b16 %v386, %v384
      %v415 = vpack.c.b16 %v389, %v387
      %v416 = vpack.c.b16 %v390, %v388
      %v417 = vpack.c.b16 %v393, %v391
      %v418 = vpack.c.b16 %v394, %v392
      %v419 = vpack.c.b16 %v397, %v395
      %v420 = vpack.c.b16 %v398, %v396
      %v421 = vpack.c.b16 %v401, %v399
      %v422 = vpack.c.b16 %v402, %v400
      %v423 = vpack.c.b16 %v405, %v403
      %v424 = vpack.c.b16 %v406, %v404
      %v425 = vpack.c.b16 %v409, %v407
      %v426 = vpack.c.b16 %v410, %v408
      %v427 = vpack.c.b16 %v411, %v411
      %v428 = vpack.c.b16 %v412, %v412
      %v443 = vsel %vm316, %v217, 0
      %v445 = vsel %vm316, %v218, 0
      %v448 = vsel %vm323, %v427, 0
      %v451 = vsel %vm323, %v428, 0
      %453 = vmatpush.bf16.msra.mxu0 %v448
      %454 = vmatpush.bf16.msra.mxu0 %v425
      %455 = vmatpush.bf16.msra.mxu0 %v423
      %456 = vmatpush.bf16.msra.mxu0 %v421
      %457 = vmatpush.bf16.msra.mxu0 %v419
      %458 = vmatpush.bf16.msra.mxu0 %v417
      %459 = vmatpush.bf16.msra.mxu0 %v415
      %460 = vmatpush.bf16.msra.mxu0 %v413
      %461 = vmatmul.bf16.gmra.mxu0 %v443
      %v462 = vpop.f32.mrf.mxu0
      %v463 = vadd.f32 %v340, %v462
      %v464 = vpop.f32.mrf.mxu0
      %v465 = vadd.f32 %v342, %v464
      %466 = vmatmul.bf16.gmra.mxu0 %v445
      %v467 = vpop.f32.mrf.mxu0
      %v468 = vadd.f32 %v345, %v467
      %v469 = vpop.f32.mrf.mxu0
      %v470 = vadd.f32 %v347, %v469
      %471 = vdwg.mxu0
      %472 = vmatpush.bf16.msra.mxu0 %v451
      %473 = vmatpush.bf16.msra.mxu0 %v426
      %474 = vmatpush.bf16.msra.mxu0 %v424
      %475 = vmatpush.bf16.msra.mxu0 %v422
      %476 = vmatpush.bf16.msra.mxu0 %v420
      %477 = vmatpush.bf16.msra.mxu0 %v418
      %478 = vmatpush.bf16.msra.mxu0 %v416
      %479 = vmatpush.bf16.msra.mxu0 %v414
      %480 = vmatmul.bf16.gmra.mxu0 %v443
      %v481 = vpop.f32.mrf.mxu0
      %v482 = vadd.f32 %v359, %v481
      %v483 = vpop.f32.mrf.mxu0
      %v484 = vadd.f32 %v361, %v483
      %485 = vmatmul.bf16.gmra.mxu0 %v445
      %v486 = vpop.f32.mrf.mxu0
      %v487 = vadd.f32 %v364, %v486
      %v488 = vpop.f32.mrf.mxu0
      %v489 = vadd.f32 %v366, %v488
      %490 = vdwg.mxu0
      %v491 = vld [vmem:[%s165] sm:$0xe]
      %s492 = scalar_lea.vmem %s1, 240
      %v493 = vld [vmem:[%s492] sm:$0xff]
      %v494 = vld [vmem:[%s492 + $0x8] sm:$0xff]
      %v495 = vld [vmem:[%s492 + $0x10] sm:$0xff]
      %v496 = vld [vmem:[%s492 + $0x18] sm:$0xff]
      %v497 = vld [vmem:[%s492 + $0x20] sm:$0xff]
      %v498 = vld [vmem:[%s492 + $0x28] sm:$0xff]
      %v499 = vld [vmem:[%s492 + $0x30] sm:$0xff]
      %v500 = vld [vmem:[%s492 + $0x38] sm:$0xff]
      %v501 = vld [vmem:[%s492 + $0x40] sm:$0xff]
      %v502 = vld [vmem:[%s492 + $0x48] sm:$0xff]
      %v503 = vld [vmem:[%s492 + $0x50] sm:$0xff]
      %v504 = vld [vmem:[%s492 + $0x58] sm:$0xff]
      %v505 = vld [vmem:[%s492 + $0x60] sm:$0xff]
      %v506 = vld [vmem:[%s492 + $0x68] sm:$0xff]
      %v507 = vld [vmem:[%s492 + $0x70] sm:$0xff]
      %v509 = vunpack.c.l.b16 %v491
      %v510 = vpack.c.b16 %v213, %v509
      %vm511 = vcmask 1046528
      %v512 = vrot.slane %v510, 1
      %v513 = vrot.slane %v218, 1
      %v514 = vsel %vm511, %v512, %v513
      %v515 = vrot.slane %v219, 1
      %v516 = vsel %vm511, %v513, %v515
      %v532 = vunpack.c.l.b16 %v493
      %v533 = vunpack.c.h.b16 %v493
      %v534 = vunpack.c.l.b16 %v494
      %v535 = vunpack.c.h.b16 %v494
      %v536 = vunpack.c.l.b16 %v495
      %v537 = vunpack.c.h.b16 %v495
      %v538 = vunpack.c.l.b16 %v496
      %v539 = vunpack.c.h.b16 %v496
      %v540 = vunpack.c.l.b16 %v497
      %v541 = vunpack.c.h.b16 %v497
      %v542 = vunpack.c.l.b16 %v498
      %v543 = vunpack.c.h.b16 %v498
      %v544 = vunpack.c.l.b16 %v499
      %v545 = vunpack.c.h.b16 %v499
      %v546 = vunpack.c.l.b16 %v500
      %v547 = vunpack.c.h.b16 %v500
      %v548 = vunpack.c.l.b16 %v501
      %v549 = vunpack.c.h.b16 %v501
      %v550 = vunpack.c.l.b16 %v502
      %v551 = vunpack.c.h.b16 %v502
      %v552 = vunpack.c.l.b16 %v503
      %v553 = vunpack.c.h.b16 %v503
      %v554 = vunpack.c.l.b16 %v504
      %v555 = vunpack.c.h.b16 %v504
      %v556 = vunpack.c.l.b16 %v505
      %v557 = vunpack.c.h.b16 %v505
      %v558 = vunpack.c.l.b16 %v506
      %v559 = vunpack.c.h.b16 %v506
      %v560 = vunpack.c.l.b16 %v507
      %v561 = vunpack.c.h.b16 %v507
      %v562 = vpack.c.b16 %v534, %v532
      %v563 = vpack.c.b16 %v535, %v533
      %v564 = vpack.c.b16 %v538, %v536
      %v565 = vpack.c.b16 %v539, %v537
      %v566 = vpack.c.b16 %v542, %v540
      %v567 = vpack.c.b16 %v543, %v541
      %v568 = vpack.c.b16 %v546, %v544
      %v569 = vpack.c.b16 %v547, %v545
      %v570 = vpack.c.b16 %v550, %v548
      %v571 = vpack.c.b16 %v551, %v549
      %v572 = vpack.c.b16 %v554, %v552
      %v573 = vpack.c.b16 %v555, %v553
      %v574 = vpack.c.b16 %v558, %v556
      %v575 = vpack.c.b16 %v559, %v557
      %v576 = vpack.c.b16 %v560, %v560
      %v577 = vpack.c.b16 %v561, %v561
      %v593 = vsel %vm316, %v514, 0
      %v596 = vsel %vm316, %v516, 0
      %v599 = vsel %vm323, %v576, 0
      %v602 = vsel %vm323, %v577, 0
      %604 = vmatpush.bf16.msra.mxu0 %v599
      %605 = vmatpush.bf16.msra.mxu0 %v574
      %606 = vmatpush.bf16.msra.mxu0 %v572
      %607 = vmatpush.bf16.msra.mxu0 %v570
      %608 = vmatpush.bf16.msra.mxu0 %v568
      %609 = vmatpush.bf16.msra.mxu0 %v566
      %610 = vmatpush.bf16.msra.mxu0 %v564
      %611 = vmatpush.bf16.msra.mxu0 %v562
      %612 = vmatmul.bf16.gmra.mxu0 %v593
      %v613 = vpop.f32.mrf.mxu0
      %v614 = vadd.f32 0.0, %v613
      %v615 = vpop.f32.mrf.mxu0
      %v616 = vadd.f32 0.0, %v615
      %617 = vmatmul.bf16.gmra.mxu0 %v596
      %v618 = vpop.f32.mrf.mxu0
      %v619 = vadd.f32 0.0, %v618
      %v620 = vpop.f32.mrf.mxu0
      %v621 = vadd.f32 0.0, %v620
      %622 = vdwg.mxu0
      %623 = vmatpush.bf16.msra.mxu0 %v602
      %624 = vmatpush.bf16.msra.mxu0 %v575
      %625 = vmatpush.bf16.msra.mxu0 %v573
      %626 = vmatpush.bf16.msra.mxu0 %v571
      %627 = vmatpush.bf16.msra.mxu0 %v569
      %628 = vmatpush.bf16.msra.mxu0 %v567
      %629 = vmatpush.bf16.msra.mxu0 %v565
      %630 = vmatpush.bf16.msra.mxu0 %v563
      %631 = vmatmul.bf16.gmra.mxu0 %v593
      %v632 = vpop.f32.mrf.mxu0
      %v633 = vadd.f32 0.0, %v632
      %v634 = vpop.f32.mrf.mxu0
      %v635 = vadd.f32 0.0, %v634
      %636 = vmatmul.bf16.gmra.mxu0 %v596
      %v637 = vpop.f32.mrf.mxu0
      %v638 = vadd.f32 0.0, %v637
      %v639 = vpop.f32.mrf.mxu0
      %v640 = vadd.f32 0.0, %v639
      %641 = vdwg.mxu0
      %v642 = vadd.f32 %v463, %v614
      %v643 = vadd.f32 %v482, %v633
      %v644 = vadd.f32 %v465, %v616
      %v645 = vadd.f32 %v484, %v635
      %v646 = vadd.f32 %v468, %v619
      %v647 = vadd.f32 %v487, %v638
      %v648 = vadd.f32 %v470, %v621
      %v649 = vadd.f32 %v489, %v640
      %v650 = vld [vmem:[%s165 + $0x10] sm:$0x3]
      %s651 = scalar_lea.vmem %s1, 360
      %v652 = vld [vmem:[%s651] sm:$0xff]
      %v653 = vld [vmem:[%s651 + $0x8] sm:$0xff]
      %v654 = vld [vmem:[%s651 + $0x10] sm:$0xff]
      %v655 = vld [vmem:[%s651 + $0x18] sm:$0xff]
      %v656 = vld [vmem:[%s651 + $0x20] sm:$0xff]
      %v657 = vld [vmem:[%s651 + $0x28] sm:$0xff]
      %v658 = vld [vmem:[%s651 + $0x30] sm:$0xff]
      %v659 = vld [vmem:[%s651 + $0x38] sm:$0xff]
      %v660 = vld [vmem:[%s651 + $0x40] sm:$0xff]
      %v661 = vld [vmem:[%s651 + $0x48] sm:$0xff]
      %v662 = vld [vmem:[%s651 + $0x50] sm:$0xff]
      %v663 = vld [vmem:[%s651 + $0x58] sm:$0xff]
      %v664 = vld [vmem:[%s651 + $0x60] sm:$0xff]
      %v665 = vld [vmem:[%s651 + $0x68] sm:$0xff]
      %v666 = vld [vmem:[%s651 + $0x70] sm:$0xff]
      %v668 = vunpack.c.l.b16 %v650
      %v669 = vpack.c.b16 %v668, %v668
      %vm670 = vsmask.f32 6400
      %v672 = vshrl.u32 %v510, 16
      %v674 = vrot.slane %v672, 1
      %v675 = vshll.u32 %v510, 16
      %v677 = vrot.slane %v675, 2
      %v678 = vor.u32 %v674, %v677
      %v679 = vrot.slane %v233, 1
      %v680 = vrot.slane %v229, 2
      %v681 = vor.u32 %v679, %v680
      %v682 = vsel %vm670, %v678, %v681
      %v684 = vshrl.u32 %v669, 16
      %v686 = vrot.slane %v684, 1
      %v687 = vshll.u32 %v669, 16
      %v689 = vrot.slane %v687, 2
      %v690 = vor.u32 %v686, %v689
      %v691 = vsel %vm670, %v681, %v690
      %v707 = vunpack.c.l.b16 %v652
      %v708 = vunpack.c.h.b16 %v652
      %v709 = vunpack.c.l.b16 %v653
      %v710 = vunpack.c.h.b16 %v653
      %v711 = vunpack.c.l.b16 %v654
      %v712 = vunpack.c.h.b16 %v654
      %v713 = vunpack.c.l.b16 %v655
      %v714 = vunpack.c.h.b16 %v655
      %v715 = vunpack.c.l.b16 %v656
      %v716 = vunpack.c.h.b16 %v656
      %v717 = vunpack.c.l.b16 %v657
      %v718 = vunpack.c.h.b16 %v657
      %v719 = vunpack.c.l.b16 %v658
      %v720 = vunpack.c.h.b16 %v658
      %v721 = vunpack.c.l.b16 %v659
      %v722 = vunpack.c.h.b16 %v659
      %v723 = vunpack.c.l.b16 %v660
      %v724 = vunpack.c.h.b16 %v660
      %v725 = vunpack.c.l.b16 %v661
      %v726 = vunpack.c.h.b16 %v661
      %v727 = vunpack.c.l.b16 %v662
      %v728 = vunpack.c.h.b16 %v662
      %v729 = vunpack.c.l.b16 %v663
      %v730 = vunpack.c.h.b16 %v663
      %v731 = vunpack.c.l.b16 %v664
      %v732 = vunpack.c.h.b16 %v664
      %v733 = vunpack.c.l.b16 %v665
      %v734 = vunpack.c.h.b16 %v665
      %v735 = vunpack.c.l.b16 %v666
      %v736 = vunpack.c.h.b16 %v666
      %v737 = vpack.c.b16 %v709, %v707
      %v738 = vpack.c.b16 %v710, %v708
      %v739 = vpack.c.b16 %v713, %v711
      %v740 = vpack.c.b16 %v714, %v712
      %v741 = vpack.c.b16 %v717, %v715
      %v742 = vpack.c.b16 %v718, %v716
      %v743 = vpack.c.b16 %v721, %v719
      %v744 = vpack.c.b16 %v722, %v720
      %v745 = vpack.c.b16 %v725, %v723
      %v746 = vpack.c.b16 %v726, %v724
      %v747 = vpack.c.b16 %v729, %v727
      %v748 = vpack.c.b16 %v730, %v728
      %v749 = vpack.c.b16 %v733, %v731
      %v750 = vpack.c.b16 %v734, %v732
      %v751 = vpack.c.b16 %v735, %v735
      %v752 = vpack.c.b16 %v736, %v736
      %v768 = vsel %vm316, %v682, 0
      %v771 = vsel %vm316, %v691, 0
      %v774 = vsel %vm323, %v751, 0
      %v777 = vsel %vm323, %v752, 0
      %779 = vmatpush.bf16.msra.mxu0 %v774
      %780 = vmatpush.bf16.msra.mxu0 %v749
      %781 = vmatpush.bf16.msra.mxu0 %v747
      %782 = vmatpush.bf16.msra.mxu0 %v745
      %783 = vmatpush.bf16.msra.mxu0 %v743
      %784 = vmatpush.bf16.msra.mxu0 %v741
      %785 = vmatpush.bf16.msra.mxu0 %v739
      %786 = vmatpush.bf16.msra.mxu0 %v737
      %787 = vmatmul.bf16.gmra.mxu0 %v768
      %v788 = vpop.f32.mrf.mxu0
      %v789 = vadd.f32 0.0, %v788
      %v790 = vpop.f32.mrf.mxu0
      %v791 = vadd.f32 0.0, %v790
      %792 = vmatmul.bf16.gmra.mxu0 %v771
      %v793 = vpop.f32.mrf.mxu0
      %v794 = vadd.f32 0.0, %v793
      %v795 = vpop.f32.mrf.mxu0
      %v796 = vadd.f32 0.0, %v795
      %797 = vdwg.mxu0
      %798 = vmatpush.bf16.msra.mxu0 %v777
      %799 = vmatpush.bf16.msra.mxu0 %v750
      %800 = vmatpush.bf16.msra.mxu0 %v748
      %801 = vmatpush.bf16.msra.mxu0 %v746
      %802 = vmatpush.bf16.msra.mxu0 %v744
      %803 = vmatpush.bf16.msra.mxu0 %v742
      %804 = vmatpush.bf16.msra.mxu0 %v740
      %805 = vmatpush.bf16.msra.mxu0 %v738
      %806 = vmatmul.bf16.gmra.mxu0 %v768
      %v807 = vpop.f32.mrf.mxu0
      %v808 = vadd.f32 0.0, %v807
      %v809 = vpop.f32.mrf.mxu0
      %v810 = vadd.f32 0.0, %v809
      %811 = vmatmul.bf16.gmra.mxu0 %v771
      %v812 = vpop.f32.mrf.mxu0
      %v813 = vadd.f32 0.0, %v812
      %v814 = vpop.f32.mrf.mxu0
      %v815 = vadd.f32 0.0, %v814
      %816 = vdwg.mxu0
      %v817 = vadd.f32 %v642, %v789
      %v818 = vadd.f32 %v643, %v808
      %v819 = vadd.f32 %v644, %v791
      %v820 = vadd.f32 %v645, %v810
      %v821 = vadd.f32 %v646, %v794
      %v822 = vadd.f32 %v647, %v813
      %v823 = vadd.f32 %v648, %v796
      %v824 = vadd.f32 %v649, %v815
      %v825 = vld [vmem:[%s165] sm:$0xc]
      %s826 = scalar_lea.vmem %s1, 480
      %v827 = vld [vmem:[%s826] sm:$0xff]
      %v828 = vld [vmem:[%s826 + $0x8] sm:$0xff]
      %v829 = vld [vmem:[%s826 + $0x10] sm:$0xff]
      %v830 = vld [vmem:[%s826 + $0x18] sm:$0xff]
      %v831 = vld [vmem:[%s826 + $0x20] sm:$0xff]
      %v832 = vld [vmem:[%s826 + $0x28] sm:$0xff]
      %v833 = vld [vmem:[%s826 + $0x30] sm:$0xff]
      %v834 = vld [vmem:[%s826 + $0x38] sm:$0xff]
      %v835 = vld [vmem:[%s826 + $0x40] sm:$0xff]
      %v836 = vld [vmem:[%s826 + $0x48] sm:$0xff]
      %v837 = vld [vmem:[%s826 + $0x50] sm:$0xff]
      %v838 = vld [vmem:[%s826 + $0x58] sm:$0xff]
      %v839 = vld [vmem:[%s826 + $0x60] sm:$0xff]
      %v840 = vld [vmem:[%s826 + $0x68] sm:$0xff]
      %v841 = vld [vmem:[%s826 + $0x70] sm:$0xff]
      %v843 = vunpack.c.l.b16 %v825
      %v844 = vpack.c.b16 %v213, %v843
      %vm845 = vcmask 1045504
      %v846 = vrot.slane %v844, 2
      %v847 = vrot.slane %v218, 2
      %v848 = vsel %vm845, %v846, %v847
      %v849 = vrot.slane %v669, 2
      %v850 = vsel %vm845, %v847, %v849
      %v866 = vunpack.c.l.b16 %v827
      %v867 = vunpack.c.h.b16 %v827
      %v868 = vunpack.c.l.b16 %v828
      %v869 = vunpack.c.h.b16 %v828
      %v870 = vunpack.c.l.b16 %v829
      %v871 = vunpack.c.h.b16 %v829
      %v872 = vunpack.c.l.b16 %v830
      %v873 = vunpack.c.h.b16 %v830
      %v874 = vunpack.c.l.b16 %v831
      %v875 = vunpack.c.h.b16 %v831
      %v876 = vunpack.c.l.b16 %v832
      %v877 = vunpack.c.h.b16 %v832
      %v878 = vunpack.c.l.b16 %v833
      %v879 = vunpack.c.h.b16 %v833
      %v880 = vunpack.c.l.b16 %v834
      %v881 = vunpack.c.h.b16 %v834
      %v882 = vunpack.c.l.b16 %v835
      %v883 = vunpack.c.h.b16 %v835
      %v884 = vunpack.c.l.b16 %v836
      %v885 = vunpack.c.h.b16 %v836
      %v886 = vunpack.c.l.b16 %v837
      %v887 = vunpack.c.h.b16 %v837
      %v888 = vunpack.c.l.b16 %v838
      %v889 = vunpack.c.h.b16 %v838
      %v890 = vunpack.c.l.b16 %v839
      %v891 = vunpack.c.h.b16 %v839
      %v892 = vunpack.c.l.b16 %v840
      %v893 = vunpack.c.h.b16 %v840
      %v894 = vunpack.c.l.b16 %v841
      %v895 = vunpack.c.h.b16 %v841
      %v896 = vpack.c.b16 %v868, %v866
      %v897 = vpack.c.b16 %v869, %v867
      %v898 = vpack.c.b16 %v872, %v870
      %v899 = vpack.c.b16 %v873, %v871
      %v900 = vpack.c.b16 %v876, %v874
      %v901 = vpack.c.b16 %v877, %v875
      %v902 = vpack.c.b16 %v880, %v878
      %v903 = vpack.c.b16 %v881, %v879
      %v904 = vpack.c.b16 %v884, %v882
      %v905 = vpack.c.b16 %v885, %v883
      %v906 = vpack.c.b16 %v888, %v886
      %v907 = vpack.c.b16 %v889, %v887
      %v908 = vpack.c.b16 %v892, %v890
      %v909 = vpack.c.b16 %v893, %v891
      %v910 = vpack.c.b16 %v894, %v894
      %v911 = vpack.c.b16 %v895, %v895
      %v927 = vsel %vm316, %v848, 0
      %v930 = vsel %vm316, %v850, 0
      %v933 = vsel %vm323, %v910, 0
      %v936 = vsel %vm323, %v911, 0
      %938 = vmatpush.bf16.msra.mxu0 %v933
      %939 = vmatpush.bf16.msra.mxu0 %v908
      %940 = vmatpush.bf16.msra.mxu0 %v906
      %941 = vmatpush.bf16.msra.mxu0 %v904
      %942 = vmatpush.bf16.msra.mxu0 %v902
      %943 = vmatpush.bf16.msra.mxu0 %v900
      %944 = vmatpush.bf16.msra.mxu0 %v898
      %945 = vmatpush.bf16.msra.mxu0 %v896
      %946 = vmatmul.bf16.gmra.mxu0 %v927
      %v947 = vpop.f32.mrf.mxu0
      %v948 = vadd.f32 0.0, %v947
      %v949 = vpop.f32.mrf.mxu0
      %v950 = vadd.f32 0.0, %v949
      %951 = vmatmul.bf16.gmra.mxu0 %v930
      %v952 = vpop.f32.mrf.mxu0
      %v953 = vadd.f32 0.0, %v952
      %v954 = vpop.f32.mrf.mxu0
      %v955 = vadd.f32 0.0, %v954
      %956 = vdwg.mxu0
      %957 = vmatpush.bf16.msra.mxu0 %v936
      %958 = vmatpush.bf16.msra.mxu0 %v909
      %959 = vmatpush.bf16.msra.mxu0 %v907
      %960 = vmatpush.bf16.msra.mxu0 %v905
      %961 = vmatpush.bf16.msra.mxu0 %v903
      %962 = vmatpush.bf16.msra.mxu0 %v901
      %963 = vmatpush.bf16.msra.mxu0 %v899
      %964 = vmatpush.bf16.msra.mxu0 %v897
      %965 = vmatmul.bf16.gmra.mxu0 %v927
      %v966 = vpop.f32.mrf.mxu0
      %v967 = vadd.f32 0.0, %v966
      %v968 = vpop.f32.mrf.mxu0
      %v969 = vadd.f32 0.0, %v968
      %970 = vmatmul.bf16.gmra.mxu0 %v930
      %v971 = vpop.f32.mrf.mxu0
      %v972 = vadd.f32 0.0, %v971
      %v973 = vpop.f32.mrf.mxu0
      %v974 = vadd.f32 0.0, %v973
      %975 = vdwg.mxu0
      %v976 = vadd.f32 %v817, %v948
      %v977 = vadd.f32 %v818, %v967
      %v978 = vadd.f32 %v819, %v950
      %v979 = vadd.f32 %v820, %v969
      %v980 = vadd.f32 %v821, %v953
      %v981 = vadd.f32 %v822, %v972
      %v982 = vadd.f32 %v823, %v955
      %v983 = vadd.f32 %v824, %v974
      %v984 = vld [vmem:[%s165 + $0x10] sm:$0x7]
      %s985 = scalar_lea.vmem %s1, 600
      %v986 = vld [vmem:[%s985] sm:$0xff]
      %v987 = vld [vmem:[%s985 + $0x8] sm:$0xff]
      %v988 = vld [vmem:[%s985 + $0x10] sm:$0xff]
      %v989 = vld [vmem:[%s985 + $0x18] sm:$0xff]
      %v990 = vld [vmem:[%s985 + $0x20] sm:$0xff]
      %v991 = vld [vmem:[%s985 + $0x28] sm:$0xff]
      %v992 = vld [vmem:[%s985 + $0x30] sm:$0xff]
      %v993 = vld [vmem:[%s985 + $0x38] sm:$0xff]
      %v994 = vld [vmem:[%s985 + $0x40] sm:$0xff]
      %v995 = vld [vmem:[%s985 + $0x48] sm:$0xff]
      %v996 = vld [vmem:[%s985 + $0x50] sm:$0xff]
      %v997 = vld [vmem:[%s985 + $0x58] sm:$0xff]
      %v998 = vld [vmem:[%s985 + $0x60] sm:$0xff]
      %v999 = vld [vmem:[%s985 + $0x68] sm:$0xff]
      %v1000 = vld [vmem:[%s985 + $0x70] sm:$0xff]
      %v1002 = vunpack.c.l.b16 %v984
      %v1003 = vpack.c.b16 %v1002, %v1002
      %vm1004 = vsmask.f32 5376
      %v1006 = vshrl.u32 %v844, 16
      %v1008 = vrot.slane %v1006, 2
      %v1009 = vshll.u32 %v844, 16
      %v1011 = vrot.slane %v1009, 3
      %v1012 = vor.u32 %v1008, %v1011
      %v1013 = vrot.slane %v233, 2
      %v1014 = vrot.slane %v229, 3
      %v1015 = vor.u32 %v1013, %v1014
      %v1016 = vsel %vm1004, %v1012, %v1015
      %v1018 = vshrl.u32 %v1003, 16
      %v1020 = vrot.slane %v1018, 2
      %v1021 = vshll.u32 %v1003, 16
      %v1023 = vrot.slane %v1021, 3
      %v1024 = vor.u32 %v1020, %v1023
      %v1025 = vsel %vm1004, %v1015, %v1024
      %v1041 = vunpack.c.l.b16 %v986
      %v1042 = vunpack.c.h.b16 %v986
      %v1043 = vunpack.c.l.b16 %v987
      %v1044 = vunpack.c.h.b16 %v987
      %v1045 = vunpack.c.l.b16 %v988
      %v1046 = vunpack.c.h.b16 %v988
      %v1047 = vunpack.c.l.b16 %v989
      %v1048 = vunpack.c.h.b16 %v989
      %v1049 = vunpack.c.l.b16 %v990
      %v1050 = vunpack.c.h.b16 %v990
      %v1051 = vunpack.c.l.b16 %v991
      %v1052 = vunpack.c.h.b16 %v991
      %v1053 = vunpack.c.l.b16 %v992
      %v1054 = vunpack.c.h.b16 %v992
      %v1055 = vunpack.c.l.b16 %v993
      %v1056 = vunpack.c.h.b16 %v993
      %v1057 = vunpack.c.l.b16 %v994
      %v1058 = vunpack.c.h.b16 %v994
      %v1059 = vunpack.c.l.b16 %v995
      %v1060 = vunpack.c.h.b16 %v995
      %v1061 = vunpack.c.l.b16 %v996
      %v1062 = vunpack.c.h.b16 %v996
      %v1063 = vunpack.c.l.b16 %v997
      %v1064 = vunpack.c.h.b16 %v997
      %v1065 = vunpack.c.l.b16 %v998
      %v1066 = vunpack.c.h.b16 %v998
      %v1067 = vunpack.c.l.b16 %v999
      %v1068 = vunpack.c.h.b16 %v999
      %v1069 = vunpack.c.l.b16 %v1000
      %v1070 = vunpack.c.h.b16 %v1000
      %v1071 = vpack.c.b16 %v1043, %v1041
      %v1072 = vpack.c.b16 %v1044, %v1042
      %v1073 = vpack.c.b16 %v1047, %v1045
      %v1074 = vpack.c.b16 %v1048, %v1046
      %v1075 = vpack.c.b16 %v1051, %v1049
      %v1076 = vpack.c.b16 %v1052, %v1050
      %v1077 = vpack.c.b16 %v1055, %v1053
      %v1078 = vpack.c.b16 %v1056, %v1054
      %v1079 = vpack.c.b16 %v1059, %v1057
      %v1080 = vpack.c.b16 %v1060, %v1058
      %v1081 = vpack.c.b16 %v1063, %v1061
      %v1082 = vpack.c.b16 %v1064, %v1062
      %v1083 = vpack.c.b16 %v1067, %v1065
      %v1084 = vpack.c.b16 %v1068, %v1066
      %v1085 = vpack.c.b16 %v1069, %v1069
      %v1086 = vpack.c.b16 %v1070, %v1070
      %v1102 = vsel %vm316, %v1016, 0
      %v1105 = vsel %vm316, %v1025, 0
      %v1108 = vsel %vm323, %v1085, 0
      %v1111 = vsel %vm323, %v1086, 0
      %1113 = vmatpush.bf16.msra.mxu0 %v1108
      %1114 = vmatpush.bf16.msra.mxu0 %v1083
      %1115 = vmatpush.bf16.msra.mxu0 %v1081
      %1116 = vmatpush.bf16.msra.mxu0 %v1079
      %1117 = vmatpush.bf16.msra.mxu0 %v1077
      %1118 = vmatpush.bf16.msra.mxu0 %v1075
      %1119 = vmatpush.bf16.msra.mxu0 %v1073
      %1120 = vmatpush.bf16.msra.mxu0 %v1071
      %1121 = vmatmul.bf16.gmra.mxu0 %v1102
      %v1122 = vpop.f32.mrf.mxu0
      %v1123 = vadd.f32 0.0, %v1122
      %v1124 = vpop.f32.mrf.mxu0
      %v1125 = vadd.f32 0.0, %v1124
      %1126 = vmatmul.bf16.gmra.mxu0 %v1105
      %v1127 = vpop.f32.mrf.mxu0
      %v1128 = vadd.f32 0.0, %v1127
      %v1129 = vpop.f32.mrf.mxu0
      %v1130 = vadd.f32 0.0, %v1129
      %1131 = vdwg.mxu0
      %1132 = vmatpush.bf16.msra.mxu0 %v1111
      %1133 = vmatpush.bf16.msra.mxu0 %v1084
      %1134 = vmatpush.bf16.msra.mxu0 %v1082
      %1135 = vmatpush.bf16.msra.mxu0 %v1080
      %1136 = vmatpush.bf16.msra.mxu0 %v1078
      %1137 = vmatpush.bf16.msra.mxu0 %v1076
      %1138 = vmatpush.bf16.msra.mxu0 %v1074
      %1139 = vmatpush.bf16.msra.mxu0 %v1072
      %1140 = vmatmul.bf16.gmra.mxu0 %v1102
      %v1141 = vpop.f32.mrf.mxu0
      %v1142 = vadd.f32 0.0, %v1141
      %v1143 = vpop.f32.mrf.mxu0
      %v1144 = vadd.f32 0.0, %v1143
      %1145 = vmatmul.bf16.gmra.mxu0 %v1105
      %v1146 = vpop.f32.mrf.mxu0
      %v1147 = vadd.f32 0.0, %v1146
      %v1148 = vpop.f32.mrf.mxu0
      %v1149 = vadd.f32 0.0, %v1148
      %1150 = vdwg.mxu0
      %v1151 = vadd.f32 %v976, %v1123
      %v1152 = vadd.f32 %v977, %v1142
      %v1153 = vadd.f32 %v978, %v1125
      %v1154 = vadd.f32 %v979, %v1144
      %v1155 = vadd.f32 %v980, %v1128
      %v1156 = vadd.f32 %v981, %v1147
      %v1157 = vadd.f32 %v982, %v1130
      %v1158 = vadd.f32 %v983, %v1149
      %v1159 = vld [vmem:[%s165] sm:$0x8]
      %s1160 = scalar_lea.vmem %s1, 720
      %v1161 = vld [vmem:[%s1160] sm:$0xff]
      %v1162 = vld [vmem:[%s1160 + $0x8] sm:$0xff]
      %v1163 = vld [vmem:[%s1160 + $0x10] sm:$0xff]
      %v1164 = vld [vmem:[%s1160 + $0x18] sm:$0xff]
      %v1165 = vld [vmem:[%s1160 + $0x20] sm:$0xff]
      %v1166 = vld [vmem:[%s1160 + $0x28] sm:$0xff]
      %v1167 = vld [vmem:[%s1160 + $0x30] sm:$0xff]
      %v1168 = vld [vmem:[%s1160 + $0x38] sm:$0xff]
      %v1169 = vld [vmem:[%s1160 + $0x40] sm:$0xff]
      %v1170 = vld [vmem:[%s1160 + $0x48] sm:$0xff]
      %v1171 = vld [vmem:[%s1160 + $0x50] sm:$0xff]
      %v1172 = vld [vmem:[%s1160 + $0x58] sm:$0xff]
      %v1173 = vld [vmem:[%s1160 + $0x60] sm:$0xff]
      %v1174 = vld [vmem:[%s1160 + $0x68] sm:$0xff]
      %v1175 = vld [vmem:[%s1160 + $0x70] sm:$0xff]
      %v1177 = vunpack.c.l.b16 %v1159
      %v1178 = vpack.c.b16 %v213, %v1177
      %vm1179 = vcmask 1044480
      %v1180 = vrot.slane %v1178, 3
      %v1181 = vrot.slane %v218, 3
      %v1182 = vsel %vm1179, %v1180, %v1181
      %v1183 = vrot.slane %v1003, 3
      %v1184 = vsel %vm1179, %v1181, %v1183
      %v1200 = vunpack.c.l.b16 %v1161
      %v1201 = vunpack.c.h.b16 %v1161
      %v1202 = vunpack.c.l.b16 %v1162
      %v1203 = vunpack.c.h.b16 %v1162
      %v1204 = vunpack.c.l.b16 %v1163
      %v1205 = vunpack.c.h.b16 %v1163
      %v1206 = vunpack.c.l.b16 %v1164
      %v1207 = vunpack.c.h.b16 %v1164
      %v1208 = vunpack.c.l.b16 %v1165
      %v1209 = vunpack.c.h.b16 %v1165
      %v1210 = vunpack.c.l.b16 %v1166
      %v1211 = vunpack.c.h.b16 %v1166
      %v1212 = vunpack.c.l.b16 %v1167
      %v1213 = vunpack.c.h.b16 %v1167
      %v1214 = vunpack.c.l.b16 %v1168
      %v1215 = vunpack.c.h.b16 %v1168
      %v1216 = vunpack.c.l.b16 %v1169
      %v1217 = vunpack.c.h.b16 %v1169
      %v1218 = vunpack.c.l.b16 %v1170
      %v1219 = vunpack.c.h.b16 %v1170
      %v1220 = vunpack.c.l.b16 %v1171
      %v1221 = vunpack.c.h.b16 %v1171
      %v1222 = vunpack.c.l.b16 %v1172
      %v1223 = vunpack.c.h.b16 %v1172
      %v1224 = vunpack.c.l.b16 %v1173
      %v1225 = vunpack.c.h.b16 %v1173
      %v1226 = vunpack.c.l.b16 %v1174
      %v1227 = vunpack.c.h.b16 %v1174
      %v1228 = vunpack.c.l.b16 %v1175
      %v1229 = vunpack.c.h.b16 %v1175
      %v1230 = vpack.c.b16 %v1202, %v1200
      %v1231 = vpack.c.b16 %v1203, %v1201
      %v1232 = vpack.c.b16 %v1206, %v1204
      %v1233 = vpack.c.b16 %v1207, %v1205
      %v1234 = vpack.c.b16 %v1210, %v1208
      %v1235 = vpack.c.b16 %v1211, %v1209
      %v1236 = vpack.c.b16 %v1214, %v1212
      %v1237 = vpack.c.b16 %v1215, %v1213
      %v1238 = vpack.c.b16 %v1218, %v1216
      %v1239 = vpack.c.b16 %v1219, %v1217
      %v1240 = vpack.c.b16 %v1222, %v1220
      %v1241 = vpack.c.b16 %v1223, %v1221
      %v1242 = vpack.c.b16 %v1226, %v1224
      %v1243 = vpack.c.b16 %v1227, %v1225
      %v1244 = vpack.c.b16 %v1228, %v1228
      %v1245 = vpack.c.b16 %v1229, %v1229
      %v1261 = vsel %vm316, %v1182, 0
      %v1264 = vsel %vm316, %v1184, 0
      %v1267 = vsel %vm323, %v1244, 0
      %v1270 = vsel %vm323, %v1245, 0
      %1272 = vmatpush.bf16.msra.mxu0 %v1267
      %1273 = vmatpush.bf16.msra.mxu0 %v1242
      %1274 = vmatpush.bf16.msra.mxu0 %v1240
      %1275 = vmatpush.bf16.msra.mxu0 %v1238
      %1276 = vmatpush.bf16.msra.mxu0 %v1236
      %1277 = vmatpush.bf16.msra.mxu0 %v1234
      %1278 = vmatpush.bf16.msra.mxu0 %v1232
      %1279 = vmatpush.bf16.msra.mxu0 %v1230
      %1280 = vmatmul.bf16.gmra.mxu0 %v1261
      %v1281 = vpop.f32.mrf.mxu0
      %v1282 = vadd.f32 0.0, %v1281
      %v1283 = vpop.f32.mrf.mxu0
      %v1284 = vadd.f32 0.0, %v1283
      %1285 = vmatmul.bf16.gmra.mxu0 %v1264
      %v1286 = vpop.f32.mrf.mxu0
      %v1287 = vadd.f32 0.0, %v1286
      %v1288 = vpop.f32.mrf.mxu0
      %v1289 = vadd.f32 0.0, %v1288
      %1290 = vdwg.mxu0
      %1291 = vmatpush.bf16.msra.mxu0 %v1270
      %1292 = vmatpush.bf16.msra.mxu0 %v1243
      %1293 = vmatpush.bf16.msra.mxu0 %v1241
      %1294 = vmatpush.bf16.msra.mxu0 %v1239
      %1295 = vmatpush.bf16.msra.mxu0 %v1237
      %1296 = vmatpush.bf16.msra.mxu0 %v1235
      %1297 = vmatpush.bf16.msra.mxu0 %v1233
      %1298 = vmatpush.bf16.msra.mxu0 %v1231
      %1299 = vmatmul.bf16.gmra.mxu0 %v1261
      %v1300 = vpop.f32.mrf.mxu0
      %v1301 = vadd.f32 0.0, %v1300
      %v1302 = vpop.f32.mrf.mxu0
      %v1303 = vadd.f32 0.0, %v1302
      %1304 = vmatmul.bf16.gmra.mxu0 %v1264
      %v1305 = vpop.f32.mrf.mxu0
      %v1306 = vadd.f32 0.0, %v1305
      %v1307 = vpop.f32.mrf.mxu0
      %v1308 = vadd.f32 0.0, %v1307
      %1309 = vdwg.mxu0
      %v1310 = vadd.f32 %v1151, %v1282
      %v1311 = vadd.f32 %v1152, %v1301
      %v1312 = vadd.f32 %v1153, %v1284
      %v1313 = vadd.f32 %v1154, %v1303
      %v1314 = vadd.f32 %v1155, %v1287
      %v1315 = vadd.f32 %v1156, %v1306
      %v1316 = vadd.f32 %v1157, %v1289
      %v1317 = vadd.f32 %v1158, %v1308
      %v1318 = vld [vmem:[%s2] ss:$4 sm:$0x3]
      %v1320 = vperm.slane %v1318, 0
      %v1321 = vperm.slane %v1318, 1
      %v1324 = vadd.f32 %v1310, %v1320
      %v1325 = vadd.f32 %v1311, %v1321
      %v1326 = vadd.f32 %v1312, %v1320
      %v1327 = vadd.f32 %v1313, %v1321
      %v1328 = vadd.f32 %v1314, %v1320
      %v1329 = vadd.f32 %v1315, %v1321
      %v1330 = vadd.f32 %v1316, %v1320
      %v1331 = vadd.f32 %v1317, %v1321
      %v1332 = vmax.f32 %v1324, 0.0
      %v1333 = vmax.f32 %v1325, 0.0
      %v1334 = vmax.f32 %v1326, 0.0
      %v1335 = vmax.f32 %v1327, 0.0
      %v1336 = vmax.f32 %v1328, 0.0
      %v1337 = vmax.f32 %v1329, 0.0
      %v1338 = vmax.f32 %v1330, 0.0
      %v1339 = vmax.f32 %v1331, 0.0
      %s1340 = scalar_lea.vmem %s2, 1
      %v1341 = vld [vmem:[%s1340] ss:$4 sm:$0x3]
      %v1343 = vperm.slane %v1341, 0
      %v1344 = vperm.slane %v1341, 1
      %v1347 = vmul.f32 %v1332, %v1343
      %v1348 = vmul.f32 %v1333, %v1344
      %v1349 = vmul.f32 %v1334, %v1343
      %v1350 = vmul.f32 %v1335, %v1344
      %v1351 = vmul.f32 %v1336, %v1343
      %v1352 = vmul.f32 %v1337, %v1344
      %v1353 = vmul.f32 %v1338, %v1343
      %v1354 = vmul.f32 %v1339, %v1344
      %s1355 = scalar_lea.vmem %s2, 2
      %v1356 = vld [vmem:[%s1355] ss:$4 sm:$0x3]
      %v1358 = vperm.slane %v1356, 0
      %v1359 = vperm.slane %v1356, 1
      %v1362 = vadd.f32 %v1347, %v1358
      %v1363 = vadd.f32 %v1348, %v1359
      %v1364 = vadd.f32 %v1349, %v1358
      %v1365 = vadd.f32 %v1350, %v1359
      %v1366 = vadd.f32 %v1351, %v1358
      %v1367 = vadd.f32 %v1352, %v1359
      %v1368 = vadd.f32 %v1353, %v1358
      %v1369 = vadd.f32 %v1354, %v1359
      %1370 = vst [vmem:[%s170] sm:$0xff] %v1362
      %1371 = vst [vmem:[%s170 + $0x8] sm:$0xff] %v1363
      %1372 = vst [vmem:[%s170 + $0x10] sm:$0xff] %v1364
      %1373 = vst [vmem:[%s170 + $0x18] sm:$0xff] %v1365
      %1374 = vst [vmem:[%s170 + $0x20] sm:$0xff] %v1366
      %1375 = vst [vmem:[%s170 + $0x28] sm:$0xff] %v1367
      %1376 = vst [vmem:[%s170 + $0x30] sm:$0xff] %v1368
      %1377 = vst [vmem:[%s170 + $0x38] sm:$0xff] %v1369
      %p1378 = scmp.lt.s32.totalorder %s14, 1
      %s1379 = scalar_select %p1378, %s14, 1
      %s1380 = smul.addr %s1379, 8
      %s1381 = smul.addr %s1380, 8
      %s1382 = scalar_lea.vmem %s3, %s1381
      // Predicated region
      $region33: #{lc_cifar10_forward.2} parent=31 // pred_check
        %p1383 = pneg %p100
      $region34: #{lc_cifar10_forward.2} parent=31 // pred_check_branch
        %1385 = sbr.rel (%p1383) target = $region36
      $region35: #{lc_cifar10_forward.2} parent=31 // pred_region
        _
      $region36: #{lc_cifar10_forward.2} parent=31 // pred_fallthru
        _
    $region32: #{lc_cifar10_forward.2} parent=5 // pred_fallthru
      _
    %p1386 = scmp.le.s32.totalorder 2, %s9
    // Predicated region
    $region37: #{lc_cifar10_forward.2} parent=5 // pred_check
      %p1387 = pneg %p1386
    $region38: #{lc_cifar10_forward.2} parent=5 // pred_check_branch
      %1389 = sbr.rel (%p1387) target = $region40
    $region39: #{lc_cifar10_forward.2} parent=5 // pred_region
      %s1390 = ssub.s32 %s9, 2
      // Predicated region
      $region41: #{lc_cifar10_forward.2} parent=39 // pred_check
        %p1391 = pneg %p106
      $region42: #{lc_cifar10_forward.2} parent=39 // pred_check_branch
        %1393 = sbr.rel (%p1391) target = $region44
      $region43: #{lc_cifar10_forward.2} parent=39 // pred_region
        %p1394 = scmp.lt.s32.totalorder %s15, 1
        %s1395 = scalar_select %p1394, %s15, 1
        %s1396 = smul.addr %s1395, 8
        %s1397 = smul.addr %s1396, 8
        %s1398 = scalar_lea.vmem %s3, %s1397
      $region44: #{lc_cifar10_forward.2} parent=39 // pred_fallthru
        _
    $region40: #{lc_cifar10_forward.2} parent=5 // pred_fallthru
      _
  $region6: #{lc_cifar10_forward.2} parent=0 // loop_footer
    %s13 = sadd.s32 1, %s9
  $region7: #{lc_cifar10_forward.2} parent=0 // loop_footer_branch
    %8 = sbr.rel target = $region3
  $region8: #{lc_cifar10_forward.2} parent=0 // loop_exit
    _

// kernel: lc_cifar10_forward.3
$region0: #{lc_cifar10_forward.3}
  #allocation0 [shape = 'u32[]', space=smem, size = 0x4, offset = 0x4, fixed_abs, tag = 'smem constant byte address 0x4 - core index']
  #allocation1 [shape = 'u32[72,128]{1,0:T(1,128)}', space=vmem, size = 0x9000, scoped, tag = 'internal scratch']
  %s0 = inlined_call_operand.vmem [shape: bf16[2,40,440], index: 0, kind: input, shape index: {}]
  %s1 = inlined_call_operand.vmem [shape: bf16[7,440,256], index: 1, kind: input, shape index: {}]
  %s2 = inlined_call_operand.vmem [shape: f32[3,256], index: 2, kind: input, shape index: {}]
  %s3 = inlined_call_operand.vmem [shape: f32[2,32,256], index: 3, kind: output, shape index: {}]
  %s4 = sld [smem:[#allocation0]]
  $region45: #{lc_cifar10_forward.3} parent=0
    _
  %s6 = ssub.s32 1, %s4
  %s7 = scalar_select 0, %s6, %s4
  loop: start=0, step=1, limit=4
  $region2: #{lc_cifar10_forward.3} parent=0 // loop_pre_header
    _
  $region3: #{lc_cifar10_forward.3} parent=0 // loop_header
    %s9 = sphi 0, %s13
    %p10 = scmp.ge.s32.totalorder %s9, 4
    %s19 = sphi 0, %s21
    %s22 = sphi 0, %s19
    %s23 = sphi 0, %s22
    %s39 = sphi 0, %s23
    %s43 = sphi 0, %s43
    %s45 = sphi 0, %s43
    %s46 = sphi 0, %s45
    %s60 = sphi 0, %s46
    %s64 = sphi 0, %s64
    %s66 = sphi 0, %s64
    %s67 = sphi 0, %s66
    %s81 = sphi 0, %s67
    %s87 = sphi 0, %s89
    %s90 = sphi 0, %s87
    %s91 = sphi 0, %s90
    %s107 = sphi 0, %s91
  $region4: #{lc_cifar10_forward.3} parent=0 // loop_header_branch
    %12 = sbr.rel (%p10) target = $region8
  $region5: #{lc_cifar10_forward.3} parent=0 // loop_body
    %s14 = ssub.s32 %s9, 1
    %s15 = ssub.s32 %s9, 2
    %s16 = sadd.s32 %s9, 1
    %s17 = ssub.s32 %s9, %s16
    %p18 = scmp.eq.s32.totalorder %s17, 0
    %s20 = sadd.s32 %s19, 1
    %s21 = scalar_select %p18, %s19, %s20
    %p24 = pneg %p18
    %p25 = scmp.eq.s32.totalorder %s9, 1
    %p26 = por %p24, %p25
    %p27 = scmp.ne.s32.totalorder %s19, %s22
    %p28 = scmp.eq.s32.totalorder %s9, 0
    %p29 = por %p27, %p28
    %p30 = scmp.ne.s32.totalorder %s19, %s22
    %p31 = scmp.eq.s32.totalorder %s14, 1
    %p32 = por %p30, %p31
    %p33 = scmp.ne.s32.totalorder %s22, %s23
    %p34 = scmp.eq.s32.totalorder %s14, 0
    %p35 = por %p33, %p34
    %p36 = scmp.ne.s32.totalorder %s22, %s23
    %p37 = scmp.eq.s32.totalorder %s15, 1
    %p38 = por %p36, %p37
    %p40 = scmp.ne.s32.totalorder %s23, %s39
    %p41 = scmp.eq.s32.totalorder %s15, 0
    %p42 = por %p40, %p41
    %s44 = sadd.s32 %s43, 1
    %p47 = scmp.eq.s32.totalorder %s9, 1
    %p48 = scmp.ne.s32.totalorder %s43, %s45
    %p49 = scmp.eq.s32.totalorder %s9, 0
    %p50 = por %p48, %p49
    %p51 = scmp.ne.s32.totalorder %s43, %s45
    %p52 = scmp.eq.s32.totalorder %s14, 1
    %p53 = por %p51, %p52
    %p54 = scmp.ne.s32.totalorder %s45, %s46
    %p55 = scmp.eq.s32.totalorder %s14, 0
    %p56 = por %p54, %p55
    %p57 = scmp.ne.s32.totalorder %s45, %s46
    %p58 = scmp.eq.s32.totalorder %s15, 1
    %p59 = por %p57, %p58
    %p61 = scmp.ne.s32.totalorder %s46, %s60
    %p62 = scmp.eq.s32.totalorder %s15, 0
    %p63 = por %p61, %p62
    %s65 = sadd.s32 %s64, 1
    %p68 = scmp.eq.s32.totalorder %s9, 1
    %p69 = scmp.ne.s32.totalorder %s64, %s66
    %p70 = scmp.eq.s32.totalorder %s9, 0
    %p71 = por %p69, %p70
    %p72 = scmp.ne.s32.totalorder %s64, %s66
    %p73 = scmp.eq.s32.totalorder %s14, 1
    %p74 = por %p72, %p73
    %p75 = scmp.ne.s32.totalorder %s66, %s67
    %p76 = scmp.eq.s32.totalorder %s14, 0
    %p77 = por %p75, %p76
    %p78 = scmp.ne.s32.totalorder %s66, %s67
    %p79 = scmp.eq.s32.totalorder %s15, 1
    %p80 = por %p78, %p79
    %p82 = scmp.ne.s32.totalorder %s67, %s81
    %p83 = scmp.eq.s32.totalorder %s15, 0
    %p84 = por %p82, %p83
    %s85 = ssub.s32 %s9, %s16
    %p86 = scmp.eq.s32.totalorder %s85, 0
    %s88 = sadd.s32 %s87, 1
    %s89 = scalar_select %p86, %s87, %s88
    %p92 = pneg %p86
    %p93 = scmp.eq.s32.totalorder %s9, 1
    %p94 = por %p92, %p93
    %p95 = scmp.ne.s32.totalorder %s87, %s90
    %p96 = scmp.eq.s32.totalorder %s9, 0
    %p97 = por %p95, %p96
    %p98 = scmp.ne.s32.totalorder %s87, %s90
    %p99 = scmp.eq.s32.totalorder %s14, 1
    %p100 = por %p98, %p99
    %p101 = scmp.ne.s32.totalorder %s90, %s91
    %p102 = scmp.eq.s32.totalorder %s14, 0
    %p103 = por %p101, %p102
    %p104 = scmp.ne.s32.totalorder %s90, %s91
    %p105 = scmp.eq.s32.totalorder %s15, 1
    %p106 = por %p104, %p105
    %p108 = scmp.ne.s32.totalorder %s91, %s107
    %p109 = scmp.eq.s32.totalorder %s15, 0
    %p110 = por %p108, %p109
    %p111 = scmp.le.s32.totalorder 1, %s9
    %p112 = scmp.lt.s32.totalorder %s9, 3
    %p113 = pnand %p111, %p112
    %p114 = pneg %p113
    // Predicated region
    $region9: #{lc_cifar10_forward.3} parent=5 // pred_check
      _
    $region10: #{lc_cifar10_forward.3} parent=5 // pred_check_branch
      %116 = sbr.rel (%p113) target = $region12
    $region11: #{lc_cifar10_forward.3} parent=5 // pred_region
      %s117 = ssub.s32 %s9, 1
      // Predicated region
      $region13: #{lc_cifar10_forward.3} parent=11 // pred_check
        %p118 = pneg %p56
      $region14: #{lc_cifar10_forward.3} parent=11 // pred_check_branch
        %120 = sbr.rel (%p118) target = $region16
      $region15: #{lc_cifar10_forward.3} parent=11 // pred_region
        _
      $region16: #{lc_cifar10_forward.3} parent=11 // pred_fallthru
        _
      // Predicated region
      $region17: #{lc_cifar10_forward.3} parent=11 // pred_check
        %p121 = pneg %p77
      $region18: #{lc_cifar10_forward.3} parent=11 // pred_check_branch
        %123 = sbr.rel (%p121) target = $region20
      $region19: #{lc_cifar10_forward.3} parent=11 // pred_region
        _
      $region20: #{lc_cifar10_forward.3} parent=11 // pred_fallthru
        _
    $region12: #{lc_cifar10_forward.3} parent=5 // pred_fallthru
      _
    %p124 = scmp.lt.s32.totalorder %s9, 2
    // Predicated region
    $region21: #{lc_cifar10_forward.3} parent=5 // pred_check
      %p125 = pneg %p124
    $region22: #{lc_cifar10_forward.3} parent=5 // pred_check_branch
      %127 = sbr.rel (%p125) target = $region24
    $region23: #{lc_cifar10_forward.3} parent=5 // pred_region
      // Predicated region
      $region25: #{lc_cifar10_forward.3} parent=23 // pred_check
        %p128 = pneg %p29
      $region26: #{lc_cifar10_forward.3} parent=23 // pred_check_branch
        %130 = sbr.rel (%p128) target = $region28
      $region27: #{lc_cifar10_forward.3} parent=23 // pred_region
        %p131 = scmp.lt.s32.totalorder %s9, 1
        %s132 = scalar_select %p131, %s9, 1
        %s133 = smul.addr %s132, 20
        %s134 = smul.addr %s133, 4
        %s135 = scalar_lea.vmem %s0, %s134
      $region28: #{lc_cifar10_forward.3} parent=23 // pred_fallthru
        _
    $region24: #{lc_cifar10_forward.3} parent=5 // pred_fallthru
      _
    %p136 = scmp.le.s32.totalorder 1, %s9
    %p137 = scmp.lt.s32.totalorder %s9, 3
    %p138 = pnand %p136, %p137
    %p139 = pneg %p138
    // Predicated region
    $region29: #{lc_cifar10_forward.3} parent=5 // pred_check
      _
    $region30: #{lc_cifar10_forward.3} parent=5 // pred_check_branch
      %141 = sbr.rel (%p138) target = $region32
    $region31: #{lc_cifar10_forward.3} parent=5 // pred_region
      %s142 = ssub.s32 %s9, 1
      %p143 = scmp.lt.s32.totalorder %s14, 1
      %s144 = scalar_select %p143, %s14, 1
      %s145 = smul.addr %s144, 20
      %s146 = smul.addr %s145, 4
      %s147 = scalar_lea.vmem %s0, %s146
      %p148 = pneg %p35
      %p149 = pneg %p32
      %p150 = pneg %p56
      %p151 = pneg %p53
      %p152 = pneg %p77
      %p153 = pneg %p74
      %p154 = pneg %p103
      %p155 = pneg %p100
      %p156 = scmp.lt.s32.totalorder %s14, 1
      %s157 = scalar_select %p156, %s14, 1
      %s158 = smul.addr %s157, 8
      %s159 = smul.addr %s158, 8
      %s160 = scalar_lea.vmem %s3, %s159
      %p161 = scmp.lt.s32.totalorder %s14, 1
      %s162 = scalar_select %p161, %s14, 1
      %s163 = smul.addr %s162, 20
      %s164 = smul.addr %s163, 4
      %s165 = scalar_lea.vmem %s0, %s164
      %p166 = scmp.lt.s32.totalorder %s14, 1
      %s167 = scalar_select %p166, %s14, 1
      %s168 = smul.addr %s167, 8
      %s169 = smul.addr %s168, 8
      %s170 = scalar_lea.vmem %s3, %s169
      %v172 = vld [vmem:[%s165] sm:$0xff]
      %v173 = vld [vmem:[%s165 + $0x8] sm:$0xff]
      %v174 = vld [vmem:[%s165 + $0x10] sm:$0xff]
      %v175 = vld [vmem:[%s165 + $0x18] sm:$0xff]
      %v176 = vld [vmem:[%s165 + $0x20] sm:$0xff]
      %v177 = vld [vmem:[%s165 + $0x28] sm:$0xff]
      %v178 = vld [vmem:[%s165 + $0x30] sm:$0xff]
      %v179 = vld [vmem:[%s165 + $0x38] sm:$0xff]
      %v180 = vld [vmem:[%s1] sm:$0xff]
      %v181 = vld [vmem:[%s1 + $0x8] sm:$0xff]
      %v182 = vld [vmem:[%s1 + $0x10] sm:$0xff]
      %v183 = vld [vmem:[%s1 + $0x18] sm:$0xff]
      %v184 = vld [vmem:[%s1 + $0x20] sm:$0xff]
      %v185 = vld [vmem:[%s1 + $0x28] sm:$0xff]
      %v186 = vld [vmem:[%s1 + $0x30] sm:$0xff]
      %v187 = vld [vmem:[%s1 + $0x38] sm:$0xff]
      %v188 = vld [vmem:[%s1 + $0x40] sm:$0xff]
      %v189 = vld [vmem:[%s1 + $0x48] sm:$0xff]
      %v190 = vld [vmem:[%s1 + $0x50] sm:$0xff]
      %v191 = vld [vmem:[%s1 + $0x58] sm:$0xff]
      %v192 = vld [vmem:[%s1 + $0x60] sm:$0xff]
      %v193 = vld [vmem:[%s1 + $0x68] sm:$0xff]
      %v194 = vld [vmem:[%s1 + $0x70] sm:$0xff]
      %v195 = vld [vmem:[%s1 + $0x78] sm:$0xff]
      %v196 = vld [vmem:[%s1 + $0x80] sm:$0xff]
      %v197 = vld [vmem:[%s1 + $0x88] sm:$0xff]
      %v198 = vld [vmem:[%s1 + $0x90] sm:$0xff]
      %v199 = vld [vmem:[%s1 + $0x98] sm:$0xff]
      %v200 = vld [vmem:[%s1 + $0xa0] sm:$0xff]
      %v201 = vld [vmem:[%s1 + $0xa8] sm:$0xff]
      %v202 = vld [vmem:[%s1 + $0xb0] sm:$0xff]
      %v203 = vld [vmem:[%s1 + $0xb8] sm:$0xff]
      %v204 = vld [vmem:[%s1 + $0xc0] sm:$0xff]
      %v205 = vld [vmem:[%s1 + $0xc8] sm:$0xff]
      %v206 = vld [vmem:[%s1 + $0xd0] sm:$0xff]
      %v207 = vld [vmem:[%s1 + $0xd8] sm:$0xff]
      %v208 = vld [vmem:[%s1 + $0xe0] sm:$0xff]
      %v209 = vld [vmem:[%s1 + $0xe8] sm:$0xff]
      %v210 = vld [vmem:[%s1 + $0xf0] sm:$0xff]
      %v211 = vld [vmem:[%s1 + $0xf8] sm:$0xff]
      %v212 = vld [vmem:[%s1 + $0x100] sm:$0xff]
      %v213 = vld [vmem:[%s1 + $0x108] sm:$0xff]
      %v214 = vld [vmem:[%s1 + $0x110] sm:$0xff]
      %v215 = vld [vmem:[%s1 + $0x118] sm:$0xff]
      %v216 = vld [vmem:[%s1 + $0x120] sm:$0xff]
      %v217 = vld [vmem:[%s1 + $0x128] sm:$0xff]
      %v218 = vld [vmem:[%s1 + $0x130] sm:$0xff]
      %v219 = vld [vmem:[%s1 + $0x138] sm:$0xff]
      %v220 = vld [vmem:[%s1 + $0x140] sm:$0xff]
      %v221 = vld [vmem:[%s1 + $0x148] sm:$0xff]
      %v222 = vld [vmem:[%s1 + $0x150] sm:$0xff]
      %v223 = vld [vmem:[%s1 + $0x158] sm:$0xff]
      %v224 = vld [vmem:[%s1 + $0x160] sm:$0xff]
      %v225 = vld [vmem:[%s1 + $0x168] sm:$0xff]
      %v226 = vld [vmem:[%s1 + $0x170] sm:$0xff]
      %v227 = vld [vmem:[%s1 + $0x178] sm:$0xff]
      %v228 = vld [vmem:[%s1 + $0x180] sm:$0xff]
      %v229 = vld [vmem:[%s1 + $0x188] sm:$0xff]
      %v230 = vld [vmem:[%s1 + $0x190] sm:$0xff]
      %v231 = vld [vmem:[%s1 + $0x198] sm:$0xff]
      %v232 = vld [vmem:[%s1 + $0x1a0] sm:$0xff]
      %v233 = vld [vmem:[%s1 + $0x1a8] sm:$0xff]
      %v234 = vld [vmem:[%s1 + $0x1b0] sm:$0xff]
      %v235 = vld [vmem:[%s165 + $0x40] sm:$0x11]
      %v236 = vld [vmem:[%s165 + $0x48] sm:$0x11]
      %s237 = scalar_lea.vmem %s1, 440
      %v238 = vld [vmem:[%s237] sm:$0xff]
      %v239 = vld [vmem:[%s237 + $0x8] sm:$0xff]
      %v240 = vld [vmem:[%s237 + $0x10] sm:$0xff]
      %v241 = vld [vmem:[%s237 + $0x18] sm:$0xff]
      %v242 = vld [vmem:[%s237 + $0x20] sm:$0xff]
      %v243 = vld [vmem:[%s237 + $0x28] sm:$0xff]
      %v244 = vld [vmem:[%s237 + $0x30] sm:$0xff]
      %v245 = vld [vmem:[%s237 + $0x38] sm:$0xff]
      %v246 = vld [vmem:[%s237 + $0x40] sm:$0xff]
      %v247 = vld [vmem:[%s237 + $0x48] sm:$0xff]
      %v248 = vld [vmem:[%s237 + $0x50] sm:$0xff]
      %v249 = vld [vmem:[%s237 + $0x58] sm:$0xff]
      %v250 = vld [vmem:[%s237 + $0x60] sm:$0xff]
      %v251 = vld [vmem:[%s237 + $0x68] sm:$0xff]
      %v252 = vld [vmem:[%s237 + $0x70] sm:$0xff]
      %v253 = vld [vmem:[%s237 + $0x78] sm:$0xff]
      %v254 = vld [vmem:[%s237 + $0x80] sm:$0xff]
      %v255 = vld [vmem:[%s237 + $0x88] sm:$0xff]
      %v256 = vld [vmem:[%s237 + $0x90] sm:$0xff]
      %v257 = vld [vmem:[%s237 + $0x98] sm:$0xff]
      %v258 = vld [vmem:[%s237 + $0xa0] sm:$0xff]
      %v259 = vld [vmem:[%s237 + $0xa8] sm:$0xff]
      %v260 = vld [vmem:[%s237 + $0xb0] sm:$0xff]
      %v261 = vld [vmem:[%s237 + $0xb8] sm:$0xff]
      %v262 = vld [vmem:[%s237 + $0xc0] sm:$0xff]
      %v263 = vld [vmem:[%s237 + $0xc8] sm:$0xff]
      %v264 = vld [vmem:[%s237 + $0xd0] sm:$0xff]
      %v265 = vld [vmem:[%s237 + $0xd8] sm:$0xff]
      %v266 = vld [vmem:[%s237 + $0xe0] sm:$0xff]
      %v267 = vld [vmem:[%s237 + $0xe8] sm:$0xff]
      %v268 = vld [vmem:[%s237 + $0xf0] sm:$0xff]
      %v269 = vld [vmem:[%s237 + $0xf8] sm:$0xff]
      %v270 = vld [vmem:[%s237 + $0x100] sm:$0xff]
      %v271 = vld [vmem:[%s237 + $0x108] sm:$0xff]
      %v272 = vld [vmem:[%s237 + $0x110] sm:$0xff]
      %v273 = vld [vmem:[%s237 + $0x118] sm:$0xff]
      %v274 = vld [vmem:[%s237 + $0x120] sm:$0xff]
      %v275 = vld [vmem:[%s237 + $0x128] sm:$0xff]
      %v276 = vld [vmem:[%s237 + $0x130] sm:$0xff]
      %v277 = vld [vmem:[%s237 + $0x138] sm:$0xff]
      %v278 = vld [vmem:[%s237 + $0x140] sm:$0xff]
      %v279 = vld [vmem:[%s237 + $0x148] sm:$0xff]
      %v280 = vld [vmem:[%s237 + $0x150] sm:$0xff]
      %v281 = vld [vmem:[%s237 + $0x158] sm:$0xff]
      %v282 = vld [vmem:[%s237 + $0x160] sm:$0xff]
      %v283 = vld [vmem:[%s237 + $0x168] sm:$0xff]
      %v284 = vld [vmem:[%s237 + $0x170] sm:$0xff]
      %v285 = vld [vmem:[%s237 + $0x178] sm:$0xff]
      %v286 = vld [vmem:[%s237 + $0x180] sm:$0xff]
      %v287 = vld [vmem:[%s237 + $0x188] sm:$0xff]
      %v288 = vld [vmem:[%s237 + $0x190] sm:$0xff]
      %v289 = vld [vmem:[%s237 + $0x198] sm:$0xff]
      %v290 = vld [vmem:[%s237 + $0x1a0] sm:$0xff]
      %v291 = vld [vmem:[%s237 + $0x1a8] sm:$0xff]
      %v292 = vld [vmem:[%s237 + $0x1b0] sm:$0xff]
      %v303 = vunpack.c.l.b16 %v172
      %v304 = vunpack.c.h.b16 %v172
      %v305 = vunpack.c.l.b16 %v173
      %v306 = vunpack.c.h.b16 %v173
      %v307 = vunpack.c.l.b16 %v174
      %v308 = vunpack.c.h.b16 %v174
      %v309 = vunpack.c.l.b16 %v175
      %v310 = vunpack.c.h.b16 %v175
      %v311 = vunpack.c.l.b16 %v176
      %v312 = vunpack.c.h.b16 %v176
      %v313 = vunpack.c.l.b16 %v177
      %v314 = vunpack.c.h.b16 %v177
      %v315 = vunpack.c.l.b16 %v178
      %v316 = vunpack.c.h.b16 %v178
      %v317 = vunpack.c.l.b16 %v179
      %v318 = vunpack.c.h.b16 %v179
      %v319 = vunpack.c.l.b16 %v235
      %v320 = vunpack.c.h.b16 %v235
      %v321 = vunpack.c.l.b16 %v236
      %v322 = vunpack.c.h.b16 %v236
      %v323 = vpack.c.b16 %v307, %v303
      %v324 = vpack.c.b16 %v308, %v304
      %v325 = vpack.c.b16 %v309, %v305
      %v326 = vpack.c.b16 %v310, %v306
      %v327 = vpack.c.b16 %v315, %v311
      %v328 = vpack.c.b16 %v316, %v312
      %v329 = vpack.c.b16 %v317, %v313
      %v330 = vpack.c.b16 %v318, %v314
      %v331 = vpack.c.b16 %v319, %v319
      %v332 = vpack.c.b16 %v320, %v320
      %v333 = vpack.c.b16 %v321, %v321
      %v334 = vpack.c.b16 %v322, %v322
      %vm335 = vsmask.f32 7424
      %v337 = vshrl.u32 %v323, 16
      %v339 = vshll.u32 %v323, 16
      %v341 = vrot.slane %v339, 1
      %v342 = vor.u32 %v337, %v341
      %v344 = vshll.u32 %v327, 16
      %v346 = vrot.slane %v344, 1
      %v347 = vsel %vm335, %v342, %v346
      %v349 = vshrl.u32 %v324, 16
      %v351 = vshll.u32 %v324, 16
      %v353 = vrot.slane %v351, 1
      %v354 = vor.u32 %v349, %v353
      %v356 = vshll.u32 %v328, 16
      %v358 = vrot.slane %v356, 1
      %v359 = vsel %vm335, %v354, %v358
      %v361 = vshrl.u32 %v325, 16
      %v363 = vshll.u32 %v325, 16
      %v365 = vrot.slane %v363, 1
      %v366 = vor.u32 %v361, %v365
      %v368 = vshll.u32 %v329, 16
      %v370 = vrot.slane %v368, 1
      %v371 = vsel %vm335, %v366, %v370
      %v373 = vshrl.u32 %v326, 16
      %v375 = vshll.u32 %v326, 16
      %v377 = vrot.slane %v375, 1
      %v378 = vor.u32 %v373, %v377
      %v380 = vshll.u32 %v330, 16
      %v382 = vrot.slane %v380, 1
      %v383 = vsel %vm335, %v378, %v382
      %v384 = vshrl.u32 %v327, 16
      %v386 = vor.u32 %v384, %v346
      %v388 = vshll.u32 %v331, 16
      %v390 = vrot.slane %v388, 1
      %v391 = vsel %vm335, %v386, %v390
      %v392 = vshrl.u32 %v328, 16
      %v394 = vor.u32 %v392, %v358
      %v396 = vshll.u32 %v332, 16
      %v398 = vrot.slane %v396, 1
      %v399 = vsel %vm335, %v394, %v398
      %v400 = vshrl.u32 %v329, 16
      %v402 = vor.u32 %v400, %v370
      %v404 = vshll.u32 %v333, 16
      %v406 = vrot.slane %v404, 1
      %v407 = vsel %vm335, %v402, %v406
      %v408 = vshrl.u32 %v330, 16
      %v410 = vor.u32 %v408, %v382
      %v412 = vshll.u32 %v334, 16
      %v414 = vrot.slane %v412, 1
      %v415 = vsel %vm335, %v410, %v414
      %v477 = vunpack.c.l.b16 %v238
      %v478 = vunpack.c.h.b16 %v238
      %v479 = vunpack.c.l.b16 %v239
      %v480 = vunpack.c.h.b16 %v239
      %v481 = vunpack.c.l.b16 %v240
      %v482 = vunpack.c.h.b16 %v240
      %v483 = vunpack.c.l.b16 %v241
      %v484 = vunpack.c.h.b16 %v241
      %v485 = vunpack.c.l.b16 %v242
      %v486 = vunpack.c.h.b16 %v242
      %v487 = vunpack.c.l.b16 %v243
      %v488 = vunpack.c.h.b16 %v243
      %v489 = vunpack.c.l.b16 %v244
      %v490 = vunpack.c.h.b16 %v244
      %v491 = vunpack.c.l.b16 %v245
      %v492 = vunpack.c.h.b16 %v245
      %v493 = vunpack.c.l.b16 %v246
      %v494 = vunpack.c.h.b16 %v246
      %v495 = vunpack.c.l.b16 %v247
      %v496 = vunpack.c.h.b16 %v247
      %v497 = vunpack.c.l.b16 %v248
      %v498 = vunpack.c.h.b16 %v248
      %v499 = vunpack.c.l.b16 %v249
      %v500 = vunpack.c.h.b16 %v249
      %v501 = vunpack.c.l.b16 %v250
      %v502 = vunpack.c.h.b16 %v250
      %v503 = vunpack.c.l.b16 %v251
      %v504 = vunpack.c.h.b16 %v251
      %v505 = vunpack.c.l.b16 %v252
      %v506 = vunpack.c.h.b16 %v252
      %v507 = vunpack.c.l.b16 %v253
      %v508 = vunpack.c.h.b16 %v253
      %v509 = vunpack.c.l.b16 %v254
      %v510 = vunpack.c.h.b16 %v254
      %v511 = vunpack.c.l.b16 %v255
      %v512 = vunpack.c.h.b16 %v255
      %v513 = vunpack.c.l.b16 %v256
      %v514 = vunpack.c.h.b16 %v256
      %v515 = vunpack.c.l.b16 %v257
      %v516 = vunpack.c.h.b16 %v257
      %v517 = vunpack.c.l.b16 %v258
      %v518 = vunpack.c.h.b16 %v258
      %v519 = vunpack.c.l.b16 %v259
      %v520 = vunpack.c.h.b16 %v259
      %v521 = vunpack.c.l.b16 %v260
      %v522 = vunpack.c.h.b16 %v260
      %v523 = vunpack.c.l.b16 %v261
      %v524 = vunpack.c.h.b16 %v261
      %v525 = vunpack.c.l.b16 %v262
      %v526 = vunpack.c.h.b16 %v262
      %v527 = vunpack.c.l.b16 %v263
      %v528 = vunpack.c.h.b16 %v263
      %v529 = vunpack.c.l.b16 %v264
      %v530 = vunpack.c.h.b16 %v264
      %v531 = vunpack.c.l.b16 %v265
      %v532 = vunpack.c.h.b16 %v265
      %v533 = vunpack.c.l.b16 %v266
      %v534 = vunpack.c.h.b16 %v266
      %v535 = vunpack.c.l.b16 %v267
      %v536 = vunpack.c.h.b16 %v267
      %v537 = vunpack.c.l.b16 %v268
      %v538 = vunpack.c.h.b16 %v268
      %v539 = vunpack.c.l.b16 %v269
      %v540 = vunpack.c.h.b16 %v269
      %v541 = vunpack.c.l.b16 %v270
      %v542 = vunpack.c.h.b16 %v270
      %v543 = vunpack.c.l.b16 %v271
      %v544 = vunpack.c.h.b16 %v271
      %v545 = vunpack.c.l.b16 %v272
      %v546 = vunpack.c.h.b16 %v272
      %v547 = vunpack.c.l.b16 %v273
      %v548 = vunpack.c.h.b16 %v273
      %v549 = vunpack.c.l.b16 %v274
      %v550 = vunpack.c.h.b16 %v274
      %v551 = vunpack.c.l.b16 %v275
      %v552 = vunpack.c.h.b16 %v275
      %v553 = vunpack.c.l.b16 %v276
      %v554 = vunpack.c.h.b16 %v276
      %v555 = vunpack.c.l.b16 %v277
      %v556 = vunpack.c.h.b16 %v277
      %v557 = vunpack.c.l.b16 %v278
      %v558 = vunpack.c.h.b16 %v278
      %v559 = vunpack.c.l.b16 %v279
      %v560 = vunpack.c.h.b16 %v279
      %v561 = vunpack.c.l.b16 %v280
      %v562 = vunpack.c.h.b16 %v280
      %v563 = vunpack.c.l.b16 %v281
      %v564 = vunpack.c.h.b16 %v281
      %v565 = vunpack.c.l.b16 %v282
      %v566 = vunpack.c.h.b16 %v282
      %v567 = vunpack.c.l.b16 %v283
      %v568 = vunpack.c.h.b16 %v283
      %v569 = vunpack.c.l.b16 %v284
      %v570 = vunpack.c.h.b16 %v284
      %v571 = vunpack.c.l.b16 %v285
      %v572 = vunpack.c.h.b16 %v285
      %v573 = vunpack.c.l.b16 %v286
      %v574 = vunpack.c.h.b16 %v286
      %v575 = vunpack.c.l.b16 %v287
      %v576 = vunpack.c.h.b16 %v287
      %v577 = vunpack.c.l.b16 %v288
      %v578 = vunpack.c.h.b16 %v288
      %v579 = vunpack.c.l.b16 %v289
      %v580 = vunpack.c.h.b16 %v289
      %v581 = vunpack.c.l.b16 %v290
      %v582 = vunpack.c.h.b16 %v290
      %v583 = vunpack.c.l.b16 %v291
      %v584 = vunpack.c.h.b16 %v291
      %v585 = vunpack.c.l.b16 %v292
      %v586 = vunpack.c.h.b16 %v292
      %v587 = vpack.c.b16 %v479, %v477
      %v588 = vpack.c.b16 %v480, %v478
      %v589 = vpack.c.b16 %v483, %v481
      %v590 = vpack.c.b16 %v484, %v482
      %v591 = vpack.c.b16 %v487, %v485
      %v592 = vpack.c.b16 %v488, %v486
      %v593 = vpack.c.b16 %v491, %v489
      %v594 = vpack.c.b16 %v492, %v490
      %v595 = vpack.c.b16 %v495, %v493
      %v596 = vpack.c.b16 %v496, %v494
      %v597 = vpack.c.b16 %v499, %v497
      %v598 = vpack.c.b16 %v500, %v498
      %v599 = vpack.c.b16 %v503, %v501
      %v600 = vpack.c.b16 %v504, %v502
      %v601 = vpack.c.b16 %v507, %v505
      %v602 = vpack.c.b16 %v508, %v506
      %v603 = vpack.c.b16 %v511, %v509
      %v604 = vpack.c.b16 %v512, %v510
      %v605 = vpack.c.b16 %v515, %v513
      %v606 = vpack.c.b16 %v516, %v514
      %v607 = vpack.c.b16 %v519, %v517
      %v608 = vpack.c.b16 %v520, %v518
      %v609 = vpack.c.b16 %v523, %v521
      %v610 = vpack.c.b16 %v524, %v522
      %v611 = vpack.c.b16 %v527, %v525
      %v612 = vpack.c.b16 %v528, %v526
      %v613 = vpack.c.b16 %v531, %v529
      %v614 = vpack.c.b16 %v532, %v530
      %v615 = vpack.c.b16 %v535, %v533
      %v616 = vpack.c.b16 %v536, %v534
      %v617 = vpack.c.b16 %v539, %v537
      %v618 = vpack.c.b16 %v540, %v538
      %v619 = vpack.c.b16 %v543, %v541
      %v620 = vpack.c.b16 %v544, %v542
      %v621 = vpack.c.b16 %v547, %v545
      %v622 = vpack.c.b16 %v548, %v546
      %v623 = vpack.c.b16 %v551, %v549
      %v624 = vpack.c.b16 %v552, %v550
      %v625 = vpack.c.b16 %v555, %v553
      %v626 = vpack.c.b16 %v556, %v554
      %v627 = vpack.c.b16 %v559, %v557
      %v628 = vpack.c.b16 %v560, %v558
      %v629 = vpack.c.b16 %v563, %v561
      %v630 = vpack.c.b16 %v564, %v562
      %v631 = vpack.c.b16 %v567, %v565
      %v632 = vpack.c.b16 %v568, %v566
      %v633 = vpack.c.b16 %v571, %v569
      %v634 = vpack.c.b16 %v572, %v570
      %v635 = vpack.c.b16 %v575, %v573
      %v636 = vpack.c.b16 %v576, %v574
      %v637 = vpack.c.b16 %v579, %v577
      %v638 = vpack.c.b16 %v580, %v578
      %v639 = vpack.c.b16 %v583, %v581
      %v640 = vpack.c.b16 %v584, %v582
      %v641 = vpack.c.b16 %v585, %v585
      %v642 = vpack.c.b16 %v586, %v586
      %vm697 = vcmask 457728
      %v699 = vsel %vm697, %v383, 0
      %v702 = vsel %vm697, %v415, 0
      %vm704 = vcmask 1043456
      %v706 = vsel %vm704, %v641, 0
      %v709 = vsel %vm704, %v642, 0
      %711 = vmatpush.bf16.msra.mxu0 %v601
      %712 = vmatpush.bf16.msra.mxu0 %v599
      %713 = vmatpush.bf16.msra.mxu0 %v597
      %714 = vmatpush.bf16.msra.mxu0 %v595
      %715 = vmatpush.bf16.msra.mxu0 %v593
      %716 = vmatpush.bf16.msra.mxu0 %v591
      %717 = vmatpush.bf16.msra.mxu0 %v589
      %718 = vmatpush.bf16.msra.mxu0 %v587
      %719 = vmatmul.bf16.gmra.mxu0 %v347
      %v720 = vpop.f32.mrf.mxu0
      %v721 = vadd.f32 0.0, %v720
      %v722 = vpop.f32.mrf.mxu0
      %v723 = vadd.f32 0.0, %v722
      %724 = vmatmul.bf16.gmra.mxu0 %v391
      %v725 = vpop.f32.mrf.mxu0
      %v726 = vadd.f32 0.0, %v725
      %v727 = vpop.f32.mrf.mxu0
      %v728 = vadd.f32 0.0, %v727
      %729 = vdwg.mxu0
      %730 = vmatpush.bf16.msra.mxu0 %v617
      %731 = vmatpush.bf16.msra.mxu0 %v615
      %732 = vmatpush.bf16.msra.mxu0 %v613
      %733 = vmatpush.bf16.msra.mxu0 %v611
      %734 = vmatpush.bf16.msra.mxu0 %v609
      %735 = vmatpush.bf16.msra.mxu0 %v607
      %736 = vmatpush.bf16.msra.mxu0 %v605
      %737 = vmatpush.bf16.msra.mxu0 %v603
      %738 = vmatmul.bf16.gmra.mxu0 %v359
      %v739 = vpop.f32.mrf.mxu0
      %v740 = vadd.f32 %v721, %v739
      %v741 = vpop.f32.mrf.mxu0
      %v742 = vadd.f32 %v723, %v741
      %743 = vmatmul.bf16.gmra.mxu0 %v399
      %v744 = vpop.f32.mrf.mxu0
      %v745 = vadd.f32 %v726, %v744
      %v746 = vpop.f32.mrf.mxu0
      %v747 = vadd.f32 %v728, %v746
      %748 = vdwg.mxu0
      %749 = vmatpush.bf16.msra.mxu0 %v633
      %750 = vmatpush.bf16.msra.mxu0 %v631
      %751 = vmatpush.bf16.msra.mxu0 %v629
      %752 = vmatpush.bf16.msra.mxu0 %v627
      %753 = vmatpush.bf16.msra.mxu0 %v625
      %754 = vmatpush.bf16.msra.mxu0 %v623
      %755 = vmatpush.bf16.msra.mxu0 %v621
      %756 = vmatpush.bf16.msra.mxu0 %v619
      %757 = vmatmul.bf16.gmra.mxu0 %v371
      %v758 = vpop.f32.mrf.mxu0
      %v759 = vadd.f32 %v740, %v758
      %v760 = vpop.f32.mrf.mxu0
      %v761 = vadd.f32 %v742, %v760
      %762 = vmatmul.bf16.gmra.mxu0 %v407
      %v763 = vpop.f32.mrf.mxu0
      %v764 = vadd.f32 %v745, %v763
      %v765 = vpop.f32.mrf.mxu0
      %v766 = vadd.f32 %v747, %v765
      %767 = vdwg.mxu0
      %768 = vmatpush.bf16.msra.mxu0 0
      %769 = vmatpush.bf16.msra.mxu0 0
      %770 = vmatpush.bf16.msra.mxu0 0
      %771 = vmatpush.bf16.msra.mxu0 0
      %772 = vmatpush.bf16.msra.mxu0 %v706
      %773 = vmatpush.bf16.msra.mxu0 %v639
      %774 = vmatpush.bf16.msra.mxu0 %v637
      %775 = vmatpush.bf16.msra.mxu0 %v635
      %776 = vmatmul.bf16.gmra.mxu0 %v699
      %v777 = vpop.f32.mrf.mxu0
      %v778 = vadd.f32 %v759, %v777
      %v779 = vpop.f32.mrf.mxu0
      %v780 = vadd.f32 %v761, %v779
      %781 = vmatmul.bf16.gmra.mxu0 %v702
      %v782 = vpop.f32.mrf.mxu0
      %v783 = vadd.f32 %v764, %v782
      %v784 = vpop.f32.mrf.mxu0
      %v785 = vadd.f32 %v766, %v784
      %786 = vdwg.mxu0
      %787 = vmatpush.bf16.msra.mxu0 %v602
      %788 = vmatpush.bf16.msra.mxu0 %v600
      %789 = vmatpush.bf16.msra.mxu0 %v598
      %790 = vmatpush.bf16.msra.mxu0 %v596
      %791 = vmatpush.bf16.msra.mxu0 %v594
      %792 = vmatpush.bf16.msra.mxu0 %v592
      %793 = vmatpush.bf16.msra.mxu0 %v590
      %794 = vmatpush.bf16.msra.mxu0 %v588
      %795 = vmatmul.bf16.gmra.mxu0 %v347
      %v796 = vpop.f32.mrf.mxu0
      %v797 = vadd.f32 0.0, %v796
      %v798 = vpop.f32.mrf.mxu0
      %v799 = vadd.f32 0.0, %v798
      %800 = vmatmul.bf16.gmra.mxu0 %v391
      %v801 = vpop.f32.mrf.mxu0
      %v802 = vadd.f32 0.0, %v801
      %v803 = vpop.f32.mrf.mxu0
      %v804 = vadd.f32 0.0, %v803
      %805 = vdwg.mxu0
      %806 = vmatpush.bf16.msra.mxu0 %v618
      %807 = vmatpush.bf16.msra.mxu0 %v616
      %808 = vmatpush.bf16.msra.mxu0 %v614
      %809 = vmatpush.bf16.msra.mxu0 %v612
      %810 = vmatpush.bf16.msra.mxu0 %v610
      %811 = vmatpush.bf16.msra.mxu0 %v608
      %812 = vmatpush.bf16.msra.mxu0 %v606
      %813 = vmatpush.bf16.msra.mxu0 %v604
      %814 = vmatmul.bf16.gmra.mxu0 %v359
      %v815 = vpop.f32.mrf.mxu0
      %v816 = vadd.f32 %v797, %v815
      %v817 = vpop.f32.mrf.mxu0
      %v818 = vadd.f32 %v799, %v817
      %819 = vmatmul.bf16.gmra.mxu0 %v399
      %v820 = vpop.f32.mrf.mxu0
      %v821 = vadd.f32 %v802, %v820
      %v822 = vpop.f32.mrf.mxu0
      %v823 = vadd.f32 %v804, %v822
      %824 = vdwg.mxu0
      %825 = vmatpush.bf16.msra.mxu0 %v634
      %826 = vmatpush.bf16.msra.mxu0 %v632
      %827 = vmatpush.bf16.msra.mxu0 %v630
      %828 = vmatpush.bf16.msra.mxu0 %v628
      %829 = vmatpush.bf16.msra.mxu0 %v626
      %830 = vmatpush.bf16.msra.mxu0 %v624
      %831 = vmatpush.bf16.msra.mxu0 %v622
      %832 = vmatpush.bf16.msra.mxu0 %v620
      %833 = vmatmul.bf16.gmra.mxu0 %v371
      %v834 = vpop.f32.mrf.mxu0
      %v835 = vadd.f32 %v816, %v834
      %v836 = vpop.f32.mrf.mxu0
      %v837 = vadd.f32 %v818, %v836
      %838 = vmatmul.bf16.gmra.mxu0 %v407
      %v839 = vpop.f32.mrf.mxu0
      %v840 = vadd.f32 %v821, %v839
      %v841 = vpop.f32.mrf.mxu0
      %v842 = vadd.f32 %v823, %v841
      %843 = vdwg.mxu0
      %844 = vmatpush.bf16.msra.mxu0 0
      %845 = vmatpush.bf16.msra.mxu0 0
      %846 = vmatpush.bf16.msra.mxu0 0
      %847 = vmatpush.bf16.msra.mxu0 0
      %848 = vmatpush.bf16.msra.mxu0 %v709
      %849 = vmatpush.bf16.msra.mxu0 %v640
      %850 = vmatpush.bf16.msra.mxu0 %v638
      %851 = vmatpush.bf16.msra.mxu0 %v636
      %852 = vmatmul.bf16.gmra.mxu0 %v699
      %v853 = vpop.f32.mrf.mxu0
      %v854 = vadd.f32 %v835, %v853
      %v855 = vpop.f32.mrf.mxu0
      %v856 = vadd.f32 %v837, %v855
      %857 = vmatmul.bf16.gmra.mxu0 %v702
      %v858 = vpop.f32.mrf.mxu0
      %v859 = vadd.f32 %v840, %v858
      %v860 = vpop.f32.mrf.mxu0
      %v861 = vadd.f32 %v842, %v860
      %862 = vdwg.mxu0
      %v924 = vunpack.c.l.b16 %v180
      %v925 = vunpack.c.h.b16 %v180
      %v926 = vunpack.c.l.b16 %v181
      %v927 = vunpack.c.h.b16 %v181
      %v928 = vunpack.c.l.b16 %v182
      %v929 = vunpack.c.h.b16 %v182
      %v930 = vunpack.c.l.b16 %v183
      %v931 = vunpack.c.h.b16 %v183
      %v932 = vunpack.c.l.b16 %v184
      %v933 = vunpack.c.h.b16 %v184
      %v934 = vunpack.c.l.b16 %v185
      %v935 = vunpack.c.h.b16 %v185
      %v936 = vunpack.c.l.b16 %v186
      %v937 = vunpack.c.h.b16 %v186
      %v938 = vunpack.c.l.b16 %v187
      %v939 = vunpack.c.h.b16 %v187
      %v940 = vunpack.c.l.b16 %v188
      %v941 = vunpack.c.h.b16 %v188
      %v942 = vunpack.c.l.b16 %v189
      %v943 = vunpack.c.h.b16 %v189
      %v944 = vunpack.c.l.b16 %v190
      %v945 = vunpack.c.h.b16 %v190
      %v946 = vunpack.c.l.b16 %v191
      %v947 = vunpack.c.h.b16 %v191
      %v948 = vunpack.c.l.b16 %v192
      %v949 = vunpack.c.h.b16 %v192
      %v950 = vunpack.c.l.b16 %v193
      %v951 = vunpack.c.h.b16 %v193
      %v952 = vunpack.c.l.b16 %v194
      %v953 = vunpack.c.h.b16 %v194
      %v954 = vunpack.c.l.b16 %v195
      %v955 = vunpack.c.h.b16 %v195
      %v956 = vunpack.c.l.b16 %v196
      %v957 = vunpack.c.h.b16 %v196
      %v958 = vunpack.c.l.b16 %v197
      %v959 = vunpack.c.h.b16 %v197
      %v960 = vunpack.c.l.b16 %v198
      %v961 = vunpack.c.h.b16 %v198
      %v962 = vunpack.c.l.b16 %v199
      %v963 = vunpack.c.h.b16 %v199
      %v964 = vunpack.c.l.b16 %v200
      %v965 = vunpack.c.h.b16 %v200
      %v966 = vunpack.c.l.b16 %v201
      %v967 = vunpack.c.h.b16 %v201
      %v968 = vunpack.c.l.b16 %v202
      %v969 = vunpack.c.h.b16 %v202
      %v970 = vunpack.c.l.b16 %v203
      %v971 = vunpack.c.h.b16 %v203
      %v972 = vunpack.c.l.b16 %v204
      %v973 = vunpack.c.h.b16 %v204
      %v974 = vunpack.c.l.b16 %v205
      %v975 = vunpack.c.h.b16 %v205
      %v976 = vunpack.c.l.b16 %v206
      %v977 = vunpack.c.h.b16 %v206
      %v978 = vunpack.c.l.b16 %v207
      %v979 = vunpack.c.h.b16 %v207
      %v980 = vunpack.c.l.b16 %v208
      %v981 = vunpack.c.h.b16 %v208
      %v982 = vunpack.c.l.b16 %v209
      %v983 = vunpack.c.h.b16 %v209
      %v984 = vunpack.c.l.b16 %v210
      %v985 = vunpack.c.h.b16 %v210
      %v986 = vunpack.c.l.b16 %v211
      %v987 = vunpack.c.h.b16 %v211
      %v988 = vunpack.c.l.b16 %v212
      %v989 = vunpack.c.h.b16 %v212
      %v990 = vunpack.c.l.b16 %v213
      %v991 = vunpack.c.h.b16 %v213
      %v992 = vunpack.c.l.b16 %v214
      %v993 = vunpack.c.h.b16 %v214
      %v994 = vunpack.c.l.b16 %v215
      %v995 = vunpack.c.h.b16 %v215
      %v996 = vunpack.c.l.b16 %v216
      %v997 = vunpack.c.h.b16 %v216
      %v998 = vunpack.c.l.b16 %v217
      %v999 = vunpack.c.h.b16 %v217
      %v1000 = vunpack.c.l.b16 %v218
      %v1001 = vunpack.c.h.b16 %v218
      %v1002 = vunpack.c.l.b16 %v219
      %v1003 = vunpack.c.h.b16 %v219
      %v1004 = vunpack.c.l.b16 %v220
      %v1005 = vunpack.c.h.b16 %v220
      %v1006 = vunpack.c.l.b16 %v221
      %v1007 = vunpack.c.h.b16 %v221
      %v1008 = vunpack.c.l.b16 %v222
      %v1009 = vunpack.c.h.b16 %v222
      %v1010 = vunpack.c.l.b16 %v223
      %v1011 = vunpack.c.h.b16 %v223
      %v1012 = vunpack.c.l.b16 %v224
      %v1013 = vunpack.c.h.b16 %v224
      %v1014 = vunpack.c.l.b16 %v225
      %v1015 = vunpack.c.h.b16 %v225
      %v1016 = vunpack.c.l.b16 %v226
      %v1017 = vunpack.c.h.b16 %v226
      %v1018 = vunpack.c.l.b16 %v227
      %v1019 = vunpack.c.h.b16 %v227
      %v1020 = vunpack.c.l.b16 %v228
      %v1021 = vunpack.c.h.b16 %v228
      %v1022 = vunpack.c.l.b16 %v229
      %v1023 = vunpack.c.h.b16 %v229
      %v1024 = vunpack.c.l.b16 %v230
      %v1025 = vunpack.c.h.b16 %v230
      %v1026 = vunpack.c.l.b16 %v231
      %v1027 = vunpack.c.h.b16 %v231
      %v1028 = vunpack.c.l.b16 %v232
      %v1029 = vunpack.c.h.b16 %v232
      %v1030 = vunpack.c.l.b16 %v233
      %v1031 = vunpack.c.h.b16 %v233
      %v1032 = vunpack.c.l.b16 %v234
      %v1033 = vunpack.c.h.b16 %v234
      %v1034 = vpack.c.b16 %v926, %v924
      %v1035 = vpack.c.b16 %v927, %v925
      %v1036 = vpack.c.b16 %v930, %v928
      %v1037 = vpack.c.b16 %v931, %v929
      %v1038 = vpack.c.b16 %v934, %v932
      %v1039 = vpack.c.b16 %v935, %v933
      %v1040 = vpack.c.b16 %v938, %v936
      %v1041 = vpack.c.b16 %v939, %v937
      %v1042 = vpack.c.b16 %v942, %v940
      %v1043 = vpack.c.b16 %v943, %v941
      %v1044 = vpack.c.b16 %v946, %v944
      %v1045 = vpack.c.b16 %v947, %v945
      %v1046 = vpack.c.b16 %v950, %v948
      %v1047 = vpack.c.b16 %v951, %v949
      %v1048 = vpack.c.b16 %v954, %v952
      %v1049 = vpack.c.b16 %v955, %v953
      %v1050 = vpack.c.b16 %v958, %v956
      %v1051 = vpack.c.b16 %v959, %v957
      %v1052 = vpack.c.b16 %v962, %v960
      %v1053 = vpack.c.b16 %v963, %v961
      %v1054 = vpack.c.b16 %v966, %v964
      %v1055 = vpack.c.b16 %v967, %v965
      %v1056 = vpack.c.b16 %v970, %v968
      %v1057 = vpack.c.b16 %v971, %v969
      %v1058 = vpack.c.b16 %v974, %v972
      %v1059 = vpack.c.b16 %v975, %v973
      %v1060 = vpack.c.b16 %v978, %v976
      %v1061 = vpack.c.b16 %v979, %v977
      %v1062 = vpack.c.b16 %v982, %v980
      %v1063 = vpack.c.b16 %v983, %v981
      %v1064 = vpack.c.b16 %v986, %v984
      %v1065 = vpack.c.b16 %v987, %v985
      %v1066 = vpack.c.b16 %v990, %v988
      %v1067 = vpack.c.b16 %v991, %v989
      %v1068 = vpack.c.b16 %v994, %v992
      %v1069 = vpack.c.b16 %v995, %v993
      %v1070 = vpack.c.b16 %v998, %v996
      %v1071 = vpack.c.b16 %v999, %v997
      %v1072 = vpack.c.b16 %v1002, %v1000
      %v1073 = vpack.c.b16 %v1003, %v1001
      %v1074 = vpack.c.b16 %v1006, %v1004
      %v1075 = vpack.c.b16 %v1007, %v1005
      %v1076 = vpack.c.b16 %v1010, %v1008
      %v1077 = vpack.c.b16 %v1011, %v1009
      %v1078 = vpack.c.b16 %v1014, %v1012
      %v1079 = vpack.c.b16 %v1015, %v1013
      %v1080 = vpack.c.b16 %v1018, %v1016
      %v1081 = vpack.c.b16 %v1019, %v1017
      %v1082 = vpack.c.b16 %v1022, %v1020
      %v1083 = vpack.c.b16 %v1023, %v1021
      %v1084 = vpack.c.b16 %v1026, %v1024
      %v1085 = vpack.c.b16 %v1027, %v1025
      %v1086 = vpack.c.b16 %v1030, %v1028
      %v1087 = vpack.c.b16 %v1031, %v1029
      %v1088 = vpack.c.b16 %v1032, %v1032
      %v1089 = vpack.c.b16 %v1033, %v1033
      %v1144 = vsel %vm697, %v326, 0
      %v1146 = vsel %vm697, %v330, 0
      %v1149 = vsel %vm704, %v1088, 0
      %v1152 = vsel %vm704, %v1089, 0
      %1154 = vmatpush.bf16.msra.mxu0 %v1048
      %1155 = vmatpush.bf16.msra.mxu0 %v1046
      %1156 = vmatpush.bf16.msra.mxu0 %v1044
      %1157 = vmatpush.bf16.msra.mxu0 %v1042
      %1158 = vmatpush.bf16.msra.mxu0 %v1040
      %1159 = vmatpush.bf16.msra.mxu0 %v1038
      %1160 = vmatpush.bf16.msra.mxu0 %v1036
      %1161 = vmatpush.bf16.msra.mxu0 %v1034
      %1162 = vmatmul.bf16.gmra.mxu0 %v323
      %v1163 = vpop.f32.mrf.mxu0
      %v1164 = vadd.f32 %v778, %v1163
      %v1165 = vpop.f32.mrf.mxu0
      %v1166 = vadd.f32 %v780, %v1165
      %1167 = vmatmul.bf16.gmra.mxu0 %v327
      %v1168 = vpop.f32.mrf.mxu0
      %v1169 = vadd.f32 %v783, %v1168
      %v1170 = vpop.f32.mrf.mxu0
      %v1171 = vadd.f32 %v785, %v1170
      %1172 = vdwg.mxu0
      %1173 = vmatpush.bf16.msra.mxu0 %v1064
      %1174 = vmatpush.bf16.msra.mxu0 %v1062
      %1175 = vmatpush.bf16.msra.mxu0 %v1060
      %1176 = vmatpush.bf16.msra.mxu0 %v1058
      %1177 = vmatpush.bf16.msra.mxu0 %v1056
      %1178 = vmatpush.bf16.msra.mxu0 %v1054
      %1179 = vmatpush.bf16.msra.mxu0 %v1052
      %1180 = vmatpush.bf16.msra.mxu0 %v1050
      %1181 = vmatmul.bf16.gmra.mxu0 %v324
      %v1182 = vpop.f32.mrf.mxu0
      %v1183 = vadd.f32 %v1164, %v1182
      %v1184 = vpop.f32.mrf.mxu0
      %v1185 = vadd.f32 %v1166, %v1184
      %1186 = vmatmul.bf16.gmra.mxu0 %v328
      %v1187 = vpop.f32.mrf.mxu0
      %v1188 = vadd.f32 %v1169, %v1187
      %v1189 = vpop.f32.mrf.mxu0
      %v1190 = vadd.f32 %v1171, %v1189
      %1191 = vdwg.mxu0
      %1192 = vmatpush.bf16.msra.mxu0 %v1080
      %1193 = vmatpush.bf16.msra.mxu0 %v1078
      %1194 = vmatpush.bf16.msra.mxu0 %v1076
      %1195 = vmatpush.bf16.msra.mxu0 %v1074
      %1196 = vmatpush.bf16.msra.mxu0 %v1072
      %1197 = vmatpush.bf16.msra.mxu0 %v1070
      %1198 = vmatpush.bf16.msra.mxu0 %v1068
      %1199 = vmatpush.bf16.msra.mxu0 %v1066
      %1200 = vmatmul.bf16.gmra.mxu0 %v325
      %v1201 = vpop.f32.mrf.mxu0
      %v1202 = vadd.f32 %v1183, %v1201
      %v1203 = vpop.f32.mrf.mxu0
      %v1204 = vadd.f32 %v1185, %v1203
      %1205 = vmatmul.bf16.gmra.mxu0 %v329
      %v1206 = vpop.f32.mrf.mxu0
      %v1207 = vadd.f32 %v1188, %v1206
      %v1208 = vpop.f32.mrf.mxu0
      %v1209 = vadd.f32 %v1190, %v1208
      %1210 = vdwg.mxu0
      %1211 = vmatpush.bf16.msra.mxu0 0
      %1212 = vmatpush.bf16.msra.mxu0 0
      %1213 = vmatpush.bf16.msra.mxu0 0
      %1214 = vmatpush.bf16.msra.mxu0 0
      %1215 = vmatpush.bf16.msra.mxu0 %v1149
      %1216 = vmatpush.bf16.msra.mxu0 %v1086
      %1217 = vmatpush.bf16.msra.mxu0 %v1084
      %1218 = vmatpush.bf16.msra.mxu0 %v1082
      %1219 = vmatmul.bf16.gmra.mxu0 %v1144
      %v1220 = vpop.f32.mrf.mxu0
      %v1221 = vadd.f32 %v1202, %v1220
      %v1222 = vpop.f32.mrf.mxu0
      %v1223 = vadd.f32 %v1204, %v1222
      %1224 = vmatmul.bf16.gmra.mxu0 %v1146
      %v1225 = vpop.f32.mrf.mxu0
      %v1226 = vadd.f32 %v1207, %v1225
      %v1227 = vpop.f32.mrf.mxu0
      %v1228 = vadd.f32 %v1209, %v1227
      %1229 = vdwg.mxu0
      %1230 = vmatpush.bf16.msra.mxu0 %v1049
      %1231 = vmatpush.bf16.msra.mxu0 %v1047
      %1232 = vmatpush.bf16.msra.mxu0 %v1045
      %1233 = vmatpush.bf16.msra.mxu0 %v1043
      %1234 = vmatpush.bf16.msra.mxu0 %v1041
      %1235 = vmatpush.bf16.msra.mxu0 %v1039
      %1236 = vmatpush.bf16.msra.mxu0 %v1037
      %1237 = vmatpush.bf16.msra.mxu0 %v1035
      %1238 = vmatmul.bf16.gmra.mxu0 %v323
      %v1239 = vpop.f32.mrf.mxu0
      %v1240 = vadd.f32 %v854, %v1239
      %v1241 = vpop.f32.mrf.mxu0
      %v1242 = vadd.f32 %v856, %v1241
      %1243 = vmatmul.bf16.gmra.mxu0 %v327
      %v1244 = vpop.f32.mrf.mxu0
      %v1245 = vadd.f32 %v859, %v1244
      %v1246 = vpop.f32.mrf.mxu0
      %v1247 = vadd.f32 %v861, %v1246
      %1248 = vdwg.mxu0
      %1249 = vmatpush.bf16.msra.mxu0 %v1065
      %1250 = vmatpush.bf16.msra.mxu0 %v1063
      %1251 = vmatpush.bf16.msra.mxu0 %v1061
      %1252 = vmatpush.bf16.msra.mxu0 %v1059
      %1253 = vmatpush.bf16.msra.mxu0 %v1057
      %1254 = vmatpush.bf16.msra.mxu0 %v1055
      %1255 = vmatpush.bf16.msra.mxu0 %v1053
      %1256 = vmatpush.bf16.msra.mxu0 %v1051
      %1257 = vmatmul.bf16.gmra.mxu0 %v324
      %v1258 = vpop.f32.mrf.mxu0
      %v1259 = vadd.f32 %v1240, %v1258
      %v1260 = vpop.f32.mrf.mxu0
      %v1261 = vadd.f32 %v1242, %v1260
      %1262 = vmatmul.bf16.gmra.mxu0 %v328
      %v1263 = vpop.f32.mrf.mxu0
      %v1264 = vadd.f32 %v1245, %v1263
      %v1265 = vpop.f32.mrf.mxu0
      %v1266 = vadd.f32 %v1247, %v1265
      %1267 = vdwg.mxu0
      %1268 = vmatpush.bf16.msra.mxu0 %v1081
      %1269 = vmatpush.bf16.msra.mxu0 %v1079
      %1270 = vmatpush.bf16.msra.mxu0 %v1077
      %1271 = vmatpush.bf16.msra.mxu0 %v1075
      %1272 = vmatpush.bf16.msra.mxu0 %v1073
      %1273 = vmatpush.bf16.msra.mxu0 %v1071
      %1274 = vmatpush.bf16.msra.mxu0 %v1069
      %1275 = vmatpush.bf16.msra.mxu0 %v1067
      %1276 = vmatmul.bf16.gmra.mxu0 %v325
      %v1277 = vpop.f32.mrf.mxu0
      %v1278 = vadd.f32 %v1259, %v1277
      %v1279 = vpop.f32.mrf.mxu0
      %v1280 = vadd.f32 %v1261, %v1279
      %1281 = vmatmul.bf16.gmra.mxu0 %v329
      %v1282 = vpop.f32.mrf.mxu0
      %v1283 = vadd.f32 %v1264, %v1282
      %v1284 = vpop.f32.mrf.mxu0
      %v1285 = vadd.f32 %v1266, %v1284
      %1286 = vdwg.mxu0
      %1287 = vmatpush.bf16.msra.mxu0 0
      %1288 = vmatpush.bf16.msra.mxu0 0
      %1289 = vmatpush.bf16.msra.mxu0 0
      %1290 = vmatpush.bf16.msra.mxu0 0
      %1291 = vmatpush.bf16.msra.mxu0 %v1152
      %1292 = vmatpush.bf16.msra.mxu0 %v1087
      %1293 = vmatpush.bf16.msra.mxu0 %v1085
      %1294 = vmatpush.bf16.msra.mxu0 %v1083
      %1295 = vmatmul.bf16.gmra.mxu0 %v1144
      %v1296 = vpop.f32.mrf.mxu0
      %v1297 = vadd.f32 %v1278, %v1296
      %v1298 = vpop.f32.mrf.mxu0
      %v1299 = vadd.f32 %v1280, %v1298
      %1300 = vmatmul.bf16.gmra.mxu0 %v1146
      %v1301 = vpop.f32.mrf.mxu0
      %v1302 = vadd.f32 %v1283, %v1301
      %v1303 = vpop.f32.mrf.mxu0
      %v1304 = vadd.f32 %v1285, %v1303
      %1305 = vdwg.mxu0
      %v1306 = vld [vmem:[%s165] sm:$0xee]
      %v1307 = vld [vmem:[%s165 + $0x8] sm:$0xee]
      %s1308 = scalar_lea.vmem %s1, 880
      %v1309 = vld [vmem:[%s1308] sm:$0xff]
      %v1310 = vld [vmem:[%s1308 + $0x8] sm:$0xff]
      %v1311 = vld [vmem:[%s1308 + $0x10] sm:$0xff]
      %v1312 = vld [vmem:[%s1308 + $0x18] sm:$0xff]
      %v1313 = vld [vmem:[%s1308 + $0x20] sm:$0xff]
      %v1314 = vld [vmem:[%s1308 + $0x28] sm:$0xff]
      %v1315 = vld [vmem:[%s1308 + $0x30] sm:$0xff]
      %v1316 = vld [vmem:[%s1308 + $0x38] sm:$0xff]
      %v1317 = vld [vmem:[%s1308 + $0x40] sm:$0xff]
      %v1318 = vld [vmem:[%s1308 + $0x48] sm:$0xff]
      %v1319 = vld [vmem:[%s1308 + $0x50] sm:$0xff]
      %v1320 = vld [vmem:[%s1308 + $0x58] sm:$0xff]
      %v1321 = vld [vmem:[%s1308 + $0x60] sm:$0xff]
      %v1322 = vld [vmem:[%s1308 + $0x68] sm:$0xff]
      %v1323 = vld [vmem:[%s1308 + $0x70] sm:$0xff]
      %v1324 = vld [vmem:[%s1308 + $0x78] sm:$0xff]
      %v1325 = vld [vmem:[%s1308 + $0x80] sm:$0xff]
      %v1326 = vld [vmem:[%s1308 + $0x88] sm:$0xff]
      %v1327 = vld [vmem:[%s1308 + $0x90] sm:$0xff]
      %v1328 = vld [vmem:[%s1308 + $0x98] sm:$0xff]
      %v1329 = vld [vmem:[%s1308 + $0xa0] sm:$0xff]
      %v1330 = vld [vmem:[%s1308 + $0xa8] sm:$0xff]
      %v1331 = vld [vmem:[%s1308 + $0xb0] sm:$0xff]
      %v1332 = vld [vmem:[%s1308 + $0xb8] sm:$0xff]
      %v1333 = vld [vmem:[%s1308 + $0xc0] sm:$0xff]
      %v1334 = vld [vmem:[%s1308 + $0xc8] sm:$0xff]
      %v1335 = vld [vmem:[%s1308 + $0xd0] sm:$0xff]
      %v1336 = vld [vmem:[%s1308 + $0xd8] sm:$0xff]
      %v1337 = vld [vmem:[%s1308 + $0xe0] sm:$0xff]
      %v1338 = vld [vmem:[%s1308 + $0xe8] sm:$0xff]
      %v1339 = vld [vmem:[%s1308 + $0xf0] sm:$0xff]
      %v1340 = vld [vmem:[%s1308 + $0xf8] sm:$0xff]
      %v1341 = vld [vmem:[%s1308 + $0x100] sm:$0xff]
      %v1342 = vld [vmem:[%s1308 + $0x108] sm:$0xff]
      %v1343 = vld [vmem:[%s1308 + $0x110] sm:$0xff]
      %v1344 = vld [vmem:[%s1308 + $0x118] sm:$0xff]
      %v1345 = vld [vmem:[%s1308 + $0x120] sm:$0xff]
      %v1346 = vld [vmem:[%s1308 + $0x128] sm:$0xff]
      %v1347 = vld [vmem:[%s1308 + $0x130] sm:$0xff]
      %v1348 = vld [vmem:[%s1308 + $0x138] sm:$0xff]
      %v1349 = vld [vmem:[%s1308 + $0x140] sm:$0xff]
      %v1350 = vld [vmem:[%s1308 + $0x148] sm:$0xff]
      %v1351 = vld [vmem:[%s1308 + $0x150] sm:$0xff]
      %v1352 = vld [vmem:[%s1308 + $0x158] sm:$0xff]
      %v1353 = vld [vmem:[%s1308 + $0x160] sm:$0xff]
      %v1354 = vld [vmem:[%s1308 + $0x168] sm:$0xff]
      %v1355 = vld [vmem:[%s1308 + $0x170] sm:$0xff]
      %v1356 = vld [vmem:[%s1308 + $0x178] sm:$0xff]
      %v1357 = vld [vmem:[%s1308 + $0x180] sm:$0xff]
      %v1358 = vld [vmem:[%s1308 + $0x188] sm:$0xff]
      %v1359 = vld [vmem:[%s1308 + $0x190] sm:$0xff]
      %v1360 = vld [vmem:[%s1308 + $0x198] sm:$0xff]
      %v1361 = vld [vmem:[%s1308 + $0x1a0] sm:$0xff]
      %v1362 = vld [vmem:[%s1308 + $0x1a8] sm:$0xff]
      %v1363 = vld [vmem:[%s1308 + $0x1b0] sm:$0xff]
      %v1366 = vunpack.c.l.b16 %v1306
      %v1367 = vunpack.c.h.b16 %v1306
      %v1368 = vunpack.c.l.b16 %v1307
      %v1369 = vunpack.c.h.b16 %v1307
      %v1370 = vpack.c.b16 %v307, %v1366
      %v1371 = vpack.c.b16 %v308, %v1367
      %v1372 = vpack.c.b16 %v309, %v1368
      %v1373 = vpack.c.b16 %v310, %v1369
      %vm1374 = vcmask 1046528
      %v1375 = vrot.slane %v1370, 1
      %v1376 = vrot.slane %v327, 1
      %v1377 = vsel %vm1374, %v1375, %v1376
      %v1378 = vrot.slane %v1371, 1
      %v1379 = vrot.slane %v328, 1
      %v1380 = vsel %vm1374, %v1378, %v1379
      %v1381 = vrot.slane %v1372, 1
      %v1382 = vrot.slane %v329, 1
      %v1383 = vsel %vm1374, %v1381, %v1382
      %v1384 = vrot.slane %v1373, 1
      %v1385 = vrot.slane %v330, 1
      %v1386 = vsel %vm1374, %v1384, %v1385
      %v1387 = vrot.slane %v331, 1
      %v1388 = vsel %vm1374, %v1376, %v1387
      %v1389 = vrot.slane %v332, 1
      %v1390 = vsel %vm1374, %v1379, %v1389
      %v1391 = vrot.slane %v333, 1
      %v1392 = vsel %vm1374, %v1382, %v1391
      %v1393 = vrot.slane %v334, 1
      %v1394 = vsel %vm1374, %v1385, %v1393
      %v1456 = vunpack.c.l.b16 %v1309
      %v1457 = vunpack.c.h.b16 %v1309
      %v1458 = vunpack.c.l.b16 %v1310
      %v1459 = vunpack.c.h.b16 %v1310
      %v1460 = vunpack.c.l.b16 %v1311
      %v1461 = vunpack.c.h.b16 %v1311
      %v1462 = vunpack.c.l.b16 %v1312
      %v1463 = vunpack.c.h.b16 %v1312
      %v1464 = vunpack.c.l.b16 %v1313
      %v1465 = vunpack.c.h.b16 %v1313
      %v1466 = vunpack.c.l.b16 %v1314
      %v1467 = vunpack.c.h.b16 %v1314
      %v1468 = vunpack.c.l.b16 %v1315
      %v1469 = vunpack.c.h.b16 %v1315
      %v1470 = vunpack.c.l.b16 %v1316
      %v1471 = vunpack.c.h.b16 %v1316
      %v1472 = vunpack.c.l.b16 %v1317
      %v1473 = vunpack.c.h.b16 %v1317
      %v1474 = vunpack.c.l.b16 %v1318
      %v1475 = vunpack.c.h.b16 %v1318
      %v1476 = vunpack.c.l.b16 %v1319
      %v1477 = vunpack.c.h.b16 %v1319
      %v1478 = vunpack.c.l.b16 %v1320
      %v1479 = vunpack.c.h.b16 %v1320
      %v1480 = vunpack.c.l.b16 %v1321
      %v1481 = vunpack.c.h.b16 %v1321
      %v1482 = vunpack.c.l.b16 %v1322
      %v1483 = vunpack.c.h.b16 %v1322
      %v1484 = vunpack.c.l.b16 %v1323
      %v1485 = vunpack.c.h.b16 %v1323
      %v1486 = vunpack.c.l.b16 %v1324
      %v1487 = vunpack.c.h.b16 %v1324
      %v1488 = vunpack.c.l.b16 %v1325
      %v1489 = vunpack.c.h.b16 %v1325
      %v1490 = vunpack.c.l.b16 %v1326
      %v1491 = vunpack.c.h.b16 %v1326
      %v1492 = vunpack.c.l.b16 %v1327
      %v1493 = vunpack.c.h.b16 %v1327
      %v1494 = vunpack.c.l.b16 %v1328
      %v1495 = vunpack.c.h.b16 %v1328
      %v1496 = vunpack.c.l.b16 %v1329
      %v1497 = vunpack.c.h.b16 %v1329
      %v1498 = vunpack.c.l.b16 %v1330
      %v1499 = vunpack.c.h.b16 %v1330
      %v1500 = vunpack.c.l.b16 %v1331
      %v1501 = vunpack.c.h.b16 %v1331
      %v1502 = vunpack.c.l.b16 %v1332
      %v1503 = vunpack.c.h.b16 %v1332
      %v1504 = vunpack.c.l.b16 %v1333
      %v1505 = vunpack.c.h.b16 %v1333
      %v1506 = vunpack.c.l.b16 %v1334
      %v1507 = vunpack.c.h.b16 %v1334
      %v1508 = vunpack.c.l.b16 %v1335
      %v1509 = vunpack.c.h.b16 %v1335
      %v1510 = vunpack.c.l.b16 %v1336
      %v1511 = vunpack.c.h.b16 %v1336
      %v1512 = vunpack.c.l.b16 %v1337
      %v1513 = vunpack.c.h.b16 %v1337
      %v1514 = vunpack.c.l.b16 %v1338
      %v1515 = vunpack.c.h.b16 %v1338
      %v1516 = vunpack.c.l.b16 %v1339
      %v1517 = vunpack.c.h.b16 %v1339
      %v1518 = vunpack.c.l.b16 %v1340
      %v1519 = vunpack.c.h.b16 %v1340
      %v1520 = vunpack.c.l.b16 %v1341
      %v1521 = vunpack.c.h.b16 %v1341
      %v1522 = vunpack.c.l.b16 %v1342
      %v1523 = vunpack.c.h.b16 %v1342
      %v1524 = vunpack.c.l.b16 %v1343
      %v1525 = vunpack.c.h.b16 %v1343
      %v1526 = vunpack.c.l.b16 %v1344
      %v1527 = vunpack.c.h.b16 %v1344
      %v1528 = vunpack.c.l.b16 %v1345
      %v1529 = vunpack.c.h.b16 %v1345
      %v1530 = vunpack.c.l.b16 %v1346
      %v1531 = vunpack.c.h.b16 %v1346
      %v1532 = vunpack.c.l.b16 %v1347
      %v1533 = vunpack.c.h.b16 %v1347
      %v1534 = vunpack.c.l.b16 %v1348
      %v1535 = vunpack.c.h.b16 %v1348
      %v1536 = vunpack.c.l.b16 %v1349
      %v1537 = vunpack.c.h.b16 %v1349
      %v1538 = vunpack.c.l.b16 %v1350
      %v1539 = vunpack.c.h.b16 %v1350
      %v1540 = vunpack.c.l.b16 %v1351
      %v1541 = vunpack.c.h.b16 %v1351
      %v1542 = vunpack.c.l.b16 %v1352
      %v1543 = vunpack.c.h.b16 %v1352
      %v1544 = vunpack.c.l.b16 %v1353
      %v1545 = vunpack.c.h.b16 %v1353
      %v1546 = vunpack.c.l.b16 %v1354
      %v1547 = vunpack.c.h.b16 %v1354
      %v1548 = vunpack.c.l.b16 %v1355
      %v1549 = vunpack.c.h.b16 %v1355
      %v1550 = vunpack.c.l.b16 %v1356
      %v1551 = vunpack.c.h.b16 %v1356
      %v1552 = vunpack.c.l.b16 %v1357
      %v1553 = vunpack.c.h.b16 %v1357
      %v1554 = vunpack.c.l.b16 %v1358
      %v1555 = vunpack.c.h.b16 %v1358
      %v1556 = vunpack.c.l.b16 %v1359
      %v1557 = vunpack.c.h.b16 %v1359
      %v1558 = vunpack.c.l.b16 %v1360
      %v1559 = vunpack.c.h.b16 %v1360
      %v1560 = vunpack.c.l.b16 %v1361
      %v1561 = vunpack.c.h.b16 %v1361
      %v1562 = vunpack.c.l.b16 %v1362
      %v1563 = vunpack.c.h.b16 %v1362
      %v1564 = vunpack.c.l.b16 %v1363
      %v1565 = vunpack.c.h.b16 %v1363
      %v1566 = vpack.c.b16 %v1458, %v1456
      %v1567 = vpack.c.b16 %v1459, %v1457
      %v1568 = vpack.c.b16 %v1462, %v1460
      %v1569 = vpack.c.b16 %v1463, %v1461
      %v1570 = vpack.c.b16 %v1466, %v1464
      %v1571 = vpack.c.b16 %v1467, %v1465
      %v1572 = vpack.c.b16 %v1470, %v1468
      %v1573 = vpack.c.b16 %v1471, %v1469
      %v1574 = vpack.c.b16 %v1474, %v1472
      %v1575 = vpack.c.b16 %v1475, %v1473
      %v1576 = vpack.c.b16 %v1478, %v1476
      %v1577 = vpack.c.b16 %v1479, %v1477
      %v1578 = vpack.c.b16 %v1482, %v1480
      %v1579 = vpack.c.b16 %v1483, %v1481
      %v1580 = vpack.c.b16 %v1486, %v1484
      %v1581 = vpack.c.b16 %v1487, %v1485
      %v1582 = vpack.c.b16 %v1490, %v1488
      %v1583 = vpack.c.b16 %v1491, %v1489
      %v1584 = vpack.c.b16 %v1494, %v1492
      %v1585 = vpack.c.b16 %v1495, %v1493
      %v1586 = vpack.c.b16 %v1498, %v1496
      %v1587 = vpack.c.b16 %v1499, %v1497
      %v1588 = vpack.c.b16 %v1502, %v1500
      %v1589 = vpack.c.b16 %v1503, %v1501
      %v1590 = vpack.c.b16 %v1506, %v1504
      %v1591 = vpack.c.b16 %v1507, %v1505
      %v1592 = vpack.c.b16 %v1510, %v1508
      %v1593 = vpack.c.b16 %v1511, %v1509
      %v1594 = vpack.c.b16 %v1514, %v1512
      %v1595 = vpack.c.b16 %v1515, %v1513
      %v1596 = vpack.c.b16 %v1518, %v1516
      %v1597 = vpack.c.b16 %v1519, %v1517
      %v1598 = vpack.c.b16 %v1522, %v1520
      %v1599 = vpack.c.b16 %v1523, %v1521
      %v1600 = vpack.c.b16 %v1526, %v1524
      %v1601 = vpack.c.b16 %v1527, %v1525
      %v1602 = vpack.c.b16 %v1530, %v1528
      %v1603 = vpack.c.b16 %v1531, %v1529
      %v1604 = vpack.c.b16 %v1534, %v1532
      %v1605 = vpack.c.b16 %v1535, %v1533
      %v1606 = vpack.c.b16 %v1538, %v1536
      %v1607 = vpack.c.b16 %v1539, %v1537
      %v1608 = vpack.c.b16 %v1542, %v1540
      %v1609 = vpack.c.b16 %v1543, %v1541
      %v1610 = vpack.c.b16 %v1546, %v1544
      %v1611 = vpack.c.b16 %v1547, %v1545
      %v1612 = vpack.c.b16 %v1550, %v1548
      %v1613 = vpack.c.b16 %v1551, %v1549
      %v1614 = vpack.c.b16 %v1554, %v1552
      %v1615 = vpack.c.b16 %v1555, %v1553
      %v1616 = vpack.c.b16 %v1558, %v1556
      %v1617 = vpack.c.b16 %v1559, %v1557
      %v1618 = vpack.c.b16 %v1562, %v1560
      %v1619 = vpack.c.b16 %v1563, %v1561
      %v1620 = vpack.c.b16 %v1564, %v1564
      %v1621 = vpack.c.b16 %v1565, %v1565
      %v1677 = vsel %vm697, %v1386, 0
      %v1680 = vsel %vm697, %v1394, 0
      %v1683 = vsel %vm704, %v1620, 0
      %v1686 = vsel %vm704, %v1621, 0
      %1688 = vmatpush.bf16.msra.mxu0 %v1580
      %1689 = vmatpush.bf16.msra.mxu0 %v1578
      %1690 = vmatpush.bf16.msra.mxu0 %v1576
      %1691 = vmatpush.bf16.msra.mxu0 %v1574
      %1692 = vmatpush.bf16.msra.mxu0 %v1572
      %1693 = vmatpush.bf16.msra.mxu0 %v1570
      %1694 = vmatpush.bf16.msra.mxu0 %v1568
      %1695 = vmatpush.bf16.msra.mxu0 %v1566
      %1696 = vmatmul.bf16.gmra.mxu0 %v1377
      %v1697 = vpop.f32.mrf.mxu0
      %v1698 = vadd.f32 0.0, %v1697
      %v1699 = vpop.f32.mrf.mxu0
      %v1700 = vadd.f32 0.0, %v1699
      %1701 = vmatmul.bf16.gmra.mxu0 %v1388
      %v1702 = vpop.f32.mrf.mxu0
      %v1703 = vadd.f32 0.0, %v1702
      %v1704 = vpop.f32.mrf.mxu0
      %v1705 = vadd.f32 0.0, %v1704
      %1706 = vdwg.mxu0
      %1707 = vmatpush.bf16.msra.mxu0 %v1596
      %1708 = vmatpush.bf16.msra.mxu0 %v1594
      %1709 = vmatpush.bf16.msra.mxu0 %v1592
      %1710 = vmatpush.bf16.msra.mxu0 %v1590
      %1711 = vmatpush.bf16.msra.mxu0 %v1588
      %1712 = vmatpush.bf16.msra.mxu0 %v1586
      %1713 = vmatpush.bf16.msra.mxu0 %v1584
      %1714 = vmatpush.bf16.msra.mxu0 %v1582
      %1715 = vmatmul.bf16.gmra.mxu0 %v1380
      %v1716 = vpop.f32.mrf.mxu0
      %v1717 = vadd.f32 %v1698, %v1716
      %v1718 = vpop.f32.mrf.mxu0
      %v1719 = vadd.f32 %v1700, %v1718
      %1720 = vmatmul.bf16.gmra.mxu0 %v1390
      %v1721 = vpop.f32.mrf.mxu0
      %v1722 = vadd.f32 %v1703, %v1721
      %v1723 = vpop.f32.mrf.mxu0
      %v1724 = vadd.f32 %v1705, %v1723
      %1725 = vdwg.mxu0
      %1726 = vmatpush.bf16.msra.mxu0 %v1612
      %1727 = vmatpush.bf16.msra.mxu0 %v1610
      %1728 = vmatpush.bf16.msra.mxu0 %v1608
      %1729 = vmatpush.bf16.msra.mxu0 %v1606
      %1730 = vmatpush.bf16.msra.mxu0 %v1604
      %1731 = vmatpush.bf16.msra.mxu0 %v1602
      %1732 = vmatpush.bf16.msra.mxu0 %v1600
      %1733 = vmatpush.bf16.msra.mxu0 %v1598
      %1734 = vmatmul.bf16.gmra.mxu0 %v1383
      %v1735 = vpop.f32.mrf.mxu0
      %v1736 = vadd.f32 %v1717, %v1735
      %v1737 = vpop.f32.mrf.mxu0
      %v1738 = vadd.f32 %v1719, %v1737
      %1739 = vmatmul.bf16.gmra.mxu0 %v1392
      %v1740 = vpop.f32.mrf.mxu0
      %v1741 = vadd.f32 %v1722, %v1740
      %v1742 = vpop.f32.mrf.mxu0
      %v1743 = vadd.f32 %v1724, %v1742
      %1744 = vdwg.mxu0
      %1745 = vmatpush.bf16.msra.mxu0 0
      %1746 = vmatpush.bf16.msra.mxu0 0
      %1747 = vmatpush.bf16.msra.mxu0 0
      %1748 = vmatpush.bf16.msra.mxu0 0
      %1749 = vmatpush.bf16.msra.mxu0 %v1683
      %1750 = vmatpush.bf16.msra.mxu0 %v1618
      %1751 = vmatpush.bf16.msra.mxu0 %v1616
      %1752 = vmatpush.bf16.msra.mxu0 %v1614
      %1753 = vmatmul.bf16.gmra.mxu0 %v1677
      %v1754 = vpop.f32.mrf.mxu0
      %v1755 = vadd.f32 %v1736, %v1754
      %v1756 = vpop.f32.mrf.mxu0
      %v1757 = vadd.f32 %v1738, %v1756
      %1758 = vmatmul.bf16.gmra.mxu0 %v1680
      %v1759 = vpop.f32.mrf.mxu0
      %v1760 = vadd.f32 %v1741, %v1759
      %v1761 = vpop.f32.mrf.mxu0
      %v1762 = vadd.f32 %v1743, %v1761
      %1763 = vdwg.mxu0
      %1764 = vmatpush.bf16.msra.mxu0 %v1581
      %1765 = vmatpush.bf16.msra.mxu0 %v1579
      %1766 = vmatpush.bf16.msra.mxu0 %v1577
      %1767 = vmatpush.bf16.msra.mxu0 %v1575
      %1768 = vmatpush.bf16.msra.mxu0 %v1573
      %1769 = vmatpush.bf16.msra.mxu0 %v1571
      %1770 = vmatpush.bf16.msra.mxu0 %v1569
      %1771 = vmatpush.bf16.msra.mxu0 %v1567
      %1772 = vmatmul.bf16.gmra.mxu0 %v1377
      %v1773 = vpop.f32.mrf.mxu0
      %v1774 = vadd.f32 0.0, %v1773
      %v1775 = vpop.f32.mrf.mxu0
      %v1776 = vadd.f32 0.0, %v1775
      %1777 = vmatmul.bf16.gmra.mxu0 %v1388
      %v1778 = vpop.f32.mrf.mxu0
      %v1779 = vadd.f32 0.0, %v1778
      %v1780 = vpop.f32.mrf.mxu0
      %v1781 = vadd.f32 0.0, %v1780
      %1782 = vdwg.mxu0
      %1783 = vmatpush.bf16.msra.mxu0 %v1597
      %1784 = vmatpush.bf16.msra.mxu0 %v1595
      %1785 = vmatpush.bf16.msra.mxu0 %v1593
      %1786 = vmatpush.bf16.msra.mxu0 %v1591
      %1787 = vmatpush.bf16.msra.mxu0 %v1589
      %1788 = vmatpush.bf16.msra.mxu0 %v1587
      %1789 = vmatpush.bf16.msra.mxu0 %v1585
      %1790 = vmatpush.bf16.msra.mxu0 %v1583
      %1791 = vmatmul.bf16.gmra.mxu0 %v1380
      %v1792 = vpop.f32.mrf.mxu0
      %v1793 = vadd.f32 %v1774, %v1792
      %v1794 = vpop.f32.mrf.mxu0
      %v1795 = vadd.f32 %v1776, %v1794
      %1796 = vmatmul.bf16.gmra.mxu0 %v1390
      %v1797 = vpop.f32.mrf.mxu0
      %v1798 = vadd.f32 %v1779, %v1797
      %v1799 = vpop.f32.mrf.mxu0
      %v1800 = vadd.f32 %v1781, %v1799
      %1801 = vdwg.mxu0
      %1802 = vmatpush.bf16.msra.mxu0 %v1613
      %1803 = vmatpush.bf16.msra.mxu0 %v1611
      %1804 = vmatpush.bf16.msra.mxu0 %v1609
      %1805 = vmatpush.bf16.msra.mxu0 %v1607
      %1806 = vmatpush.bf16.msra.mxu0 %v1605
      %1807 = vmatpush.bf16.msra.mxu0 %v1603
      %1808 = vmatpush.bf16.msra.mxu0 %v1601
      %1809 = vmatpush.bf16.msra.mxu0 %v1599
      %1810 = vmatmul.bf16.gmra.mxu0 %v1383
      %v1811 = vpop.f32.mrf.mxu0
      %v1812 = vadd.f32 %v1793, %v1811
      %v1813 = vpop.f32.mrf.mxu0
      %v1814 = vadd.f32 %v1795, %v1813
      %1815 = vmatmul.bf16.gmra.mxu0 %v1392
      %v1816 = vpop.f32.mrf.mxu0
      %v1817 = vadd.f32 %v1798, %v1816
      %v1818 = vpop.f32.mrf.mxu0
      %v1819 = vadd.f32 %v1800, %v1818
      %1820 = vdwg.mxu0
      %1821 = vmatpush.bf16.msra.mxu0 0
      %1822 = vmatpush.bf16.msra.mxu0 0
      %1823 = vmatpush.bf16.msra.mxu0 0
      %1824 = vmatpush.bf16.msra.mxu0 0
      %1825 = vmatpush.bf16.msra.mxu0 %v1686
      %1826 = vmatpush.bf16.msra.mxu0 %v1619
      %1827 = vmatpush.bf16.msra.mxu0 %v1617
      %1828 = vmatpush.bf16.msra.mxu0 %v1615
      %1829 = vmatmul.bf16.gmra.mxu0 %v1677
      %v1830 = vpop.f32.mrf.mxu0
      %v1831 = vadd.f32 %v1812, %v1830
      %v1832 = vpop.f32.mrf.mxu0
      %v1833 = vadd.f32 %v1814, %v1832
      %1834 = vmatmul.bf16.gmra.mxu0 %v1680
      %v1835 = vpop.f32.mrf.mxu0
      %v1836 = vadd.f32 %v1817, %v1835
      %v1837 = vpop.f32.mrf.mxu0
      %v1838 = vadd.f32 %v1819, %v1837
      %1839 = vdwg.mxu0
      %v1840 = vadd.f32 %v1221, %v1755
      %v1841 = vadd.f32 %v1297, %v1831
      %v1842 = vadd.f32 %v1223, %v1757
      %v1843 = vadd.f32 %v1299, %v1833
      %v1844 = vadd.f32 %v1226, %v1760
      %v1845 = vadd.f32 %v1302, %v1836
      %v1846 = vadd.f32 %v1228, %v1762
      %v1847 = vadd.f32 %v1304, %v1838
      %v1848 = vld [vmem:[%s165 + $0x40] sm:$0x33]
      %v1849 = vld [vmem:[%s165 + $0x48] sm:$0x33]
      %s1850 = scalar_lea.vmem %s1, 1320
      %v1851 = vld [vmem:[%s1850] sm:$0xff]
      %v1852 = vld [vmem:[%s1850 + $0x8] sm:$0xff]
      %v1853 = vld [vmem:[%s1850 + $0x10] sm:$0xff]
      %v1854 = vld [vmem:[%s1850 + $0x18] sm:$0xff]
      %v1855 = vld [vmem:[%s1850 + $0x20] sm:$0xff]
      %v1856 = vld [vmem:[%s1850 + $0x28] sm:$0xff]
      %v1857 = vld [vmem:[%s1850 + $0x30] sm:$0xff]
      %v1858 = vld [vmem:[%s1850 + $0x38] sm:$0xff]
      %v1859 = vld [vmem:[%s1850 + $0x40] sm:$0xff]
      %v1860 = vld [vmem:[%s1850 + $0x48] sm:$0xff]
      %v1861 = vld [vmem:[%s1850 + $0x50] sm:$0xff]
      %v1862 = vld [vmem:[%s1850 + $0x58] sm:$0xff]
      %v1863 = vld [vmem:[%s1850 + $0x60] sm:$0xff]
      %v1864 = vld [vmem:[%s1850 + $0x68] sm:$0xff]
      %v1865 = vld [vmem:[%s1850 + $0x70] sm:$0xff]
      %v1866 = vld [vmem:[%s1850 + $0x78] sm:$0xff]
      %v1867 = vld [vmem:[%s1850 + $0x80] sm:$0xff]
      %v1868 = vld [vmem:[%s1850 + $0x88] sm:$0xff]
      %v1869 = vld [vmem:[%s1850 + $0x90] sm:$0xff]
      %v1870 = vld [vmem:[%s1850 + $0x98] sm:$0xff]
      %v1871 = vld [vmem:[%s1850 + $0xa0] sm:$0xff]
      %v1872 = vld [vmem:[%s1850 + $0xa8] sm:$0xff]
      %v1873 = vld [vmem:[%s1850 + $0xb0] sm:$0xff]
      %v1874 = vld [vmem:[%s1850 + $0xb8] sm:$0xff]
      %v1875 = vld [vmem:[%s1850 + $0xc0] sm:$0xff]
      %v1876 = vld [vmem:[%s1850 + $0xc8] sm:$0xff]
      %v1877 = vld [vmem:[%s1850 + $0xd0] sm:$0xff]
      %v1878 = vld [vmem:[%s1850 + $0xd8] sm:$0xff]
      %v1879 = vld [vmem:[%s1850 + $0xe0] sm:$0xff]
      %v1880 = vld [vmem:[%s1850 + $0xe8] sm:$0xff]
      %v1881 = vld [vmem:[%s1850 + $0xf0] sm:$0xff]
      %v1882 = vld [vmem:[%s1850 + $0xf8] sm:$0xff]
      %v1883 = vld [vmem:[%s1850 + $0x100] sm:$0xff]
      %v1884 = vld [vmem:[%s1850 + $0x108] sm:$0xff]
      %v1885 = vld [vmem:[%s1850 + $0x110] sm:$0xff]
      %v1886 = vld [vmem:[%s1850 + $0x118] sm:$0xff]
      %v1887 = vld [vmem:[%s1850 + $0x120] sm:$0xff]
      %v1888 = vld [vmem:[%s1850 + $0x128] sm:$0xff]
      %v1889 = vld [vmem:[%s1850 + $0x130] sm:$0xff]
      %v1890 = vld [vmem:[%s1850 + $0x138] sm:$0xff]
      %v1891 = vld [vmem:[%s1850 + $0x140] sm:$0xff]
      %v1892 = vld [vmem:[%s1850 + $0x148] sm:$0xff]
      %v1893 = vld [vmem:[%s1850 + $0x150] sm:$0xff]
      %v1894 = vld [vmem:[%s1850 + $0x158] sm:$0xff]
      %v1895 = vld [vmem:[%s1850 + $0x160] sm:$0xff]
      %v1896 = vld [vmem:[%s1850 + $0x168] sm:$0xff]
      %v1897 = vld [vmem:[%s1850 + $0x170] sm:$0xff]
      %v1898 = vld [vmem:[%s1850 + $0x178] sm:$0xff]
      %v1899 = vld [vmem:[%s1850 + $0x180] sm:$0xff]
      %v1900 = vld [vmem:[%s1850 + $0x188] sm:$0xff]
      %v1901 = vld [vmem:[%s1850 + $0x190] sm:$0xff]
      %v1902 = vld [vmem:[%s1850 + $0x198] sm:$0xff]
      %v1903 = vld [vmem:[%s1850 + $0x1a0] sm:$0xff]
      %v1904 = vld [vmem:[%s1850 + $0x1a8] sm:$0xff]
      %v1905 = vld [vmem:[%s1850 + $0x1b0] sm:$0xff]
      %v1908 = vunpack.c.l.b16 %v1848
      %v1909 = vunpack.c.h.b16 %v1848
      %v1910 = vunpack.c.l.b16 %v1849
      %v1911 = vunpack.c.h.b16 %v1849
      %v1912 = vpack.c.b16 %v1908, %v1908
      %v1913 = vpack.c.b16 %v1909, %v1909
      %v1914 = vpack.c.b16 %v1910, %v1910
      %v1915 = vpack.c.b16 %v1911, %v1911
      %vm1916 = vsmask.f32 6400
      %v1918 = vshrl.u32 %v1370, 16
      %v1920 = vrot.slane %v1918, 1
      %v1921 = vshll.u32 %v1370, 16
      %v1923 = vrot.slane %v1921, 2
      %v1924 = vor.u32 %v1920, %v1923
      %v1925 = vrot.slane %v384, 1
      %v1926 = vrot.slane %v344, 2
      %v1927 = vor.u32 %v1925, %v1926
      %v1928 = vsel %vm1916, %v1924, %v1927
      %v1930 = vshrl.u32 %v1371, 16
      %v1932 = vrot.slane %v1930, 1
      %v1933 = vshll.u32 %v1371, 16
      %v1935 = vrot.slane %v1933, 2
      %v1936 = vor.u32 %v1932, %v1935
      %v1937 = vrot.slane %v392, 1
      %v1938 = vrot.slane %v356, 2
      %v1939 = vor.u32 %v1937, %v1938
      %v1940 = vsel %vm1916, %v1936, %v1939
      %v1942 = vshrl.u32 %v1372, 16
      %v1944 = vrot.slane %v1942, 1
      %v1945 = vshll.u32 %v1372, 16
      %v1947 = vrot.slane %v1945, 2
      %v1948 = vor.u32 %v1944, %v1947
      %v1949 = vrot.slane %v400, 1
      %v1950 = vrot.slane %v368, 2
      %v1951 = vor.u32 %v1949, %v1950
      %v1952 = vsel %vm1916, %v1948, %v1951
      %v1954 = vshrl.u32 %v1373, 16
      %v1956 = vrot.slane %v1954, 1
      %v1957 = vshll.u32 %v1373, 16
      %v1959 = vrot.slane %v1957, 2
      %v1960 = vor.u32 %v1956, %v1959
      %v1961 = vrot.slane %v408, 1
      %v1962 = vrot.slane %v380, 2
      %v1963 = vor.u32 %v1961, %v1962
      %v1964 = vsel %vm1916, %v1960, %v1963
      %v1966 = vshrl.u32 %v1912, 16
      %v1968 = vrot.slane %v1966, 1
      %v1969 = vshll.u32 %v1912, 16
      %v1971 = vrot.slane %v1969, 2
      %v1972 = vor.u32 %v1968, %v1971
      %v1973 = vsel %vm1916, %v1927, %v1972
      %v1975 = vshrl.u32 %v1913, 16
      %v1977 = vrot.slane %v1975, 1
      %v1978 = vshll.u32 %v1913, 16
      %v1980 = vrot.slane %v1978, 2
      %v1981 = vor.u32 %v1977, %v1980
      %v1982 = vsel %vm1916, %v1939, %v1981
      %v1984 = vshrl.u32 %v1914, 16
      %v1986 = vrot.slane %v1984, 1
      %v1987 = vshll.u32 %v1914, 16
      %v1989 = vrot.slane %v1987, 2
      %v1990 = vor.u32 %v1986, %v1989
      %v1991 = vsel %vm1916, %v1951, %v1990
      %v1993 = vshrl.u32 %v1915, 16
      %v1995 = vrot.slane %v1993, 1
      %v1996 = vshll.u32 %v1915, 16
      %v1998 = vrot.slane %v1996, 2
      %v1999 = vor.u32 %v1995, %v1998
      %v2000 = vsel %vm1916, %v1963, %v1999
      %v2062 = vunpack.c.l.b16 %v1851
      %v2063 = vunpack.c.h.b16 %v1851
      %v2064 = vunpack.c.l.b16 %v1852
      %v2065 = vunpack.c.h.b16 %v1852
      %v2066 = vunpack.c.l.b16 %v1853
      %v2067 = vunpack.c.h.b16 %v1853
      %v2068 = vunpack.c.l.b16 %v1854
      %v2069 = vunpack.c.h.b16 %v1854
      %v2070 = vunpack.c.l.b16 %v1855
      %v2071 = vunpack.c.h.b16 %v1855
      %v2072 = vunpack.c.l.b16 %v1856
      %v2073 = vunpack.c.h.b16 %v1856
      %v2074 = vunpack.c.l.b16 %v1857
      %v2075 = vunpack.c.h.b16 %v1857
      %v2076 = vunpack.c.l.b16 %v1858
      %v2077 = vunpack.c.h.b16 %v1858
      %v2078 = vunpack.c.l.b16 %v1859
      %v2079 = vunpack.c.h.b16 %v1859
      %v2080 = vunpack.c.l.b16 %v1860
      %v2081 = vunpack.c.h.b16 %v1860
      %v2082 = vunpack.c.l.b16 %v1861
      %v2083 = vunpack.c.h.b16 %v1861
      %v2084 = vunpack.c.l.b16 %v1862
      %v2085 = vunpack.c.h.b16 %v1862
      %v2086 = vunpack.c.l.b16 %v1863
      %v2087 = vunpack.c.h.b16 %v1863
      %v2088 = vunpack.c.l.b16 %v1864
      %v2089 = vunpack.c.h.b16 %v1864
      %v2090 = vunpack.c.l.b16 %v1865
      %v2091 = vunpack.c.h.b16 %v1865
      %v2092 = vunpack.c.l.b16 %v1866
      %v2093 = vunpack.c.h.b16 %v1866
      %v2094 = vunpack.c.l.b16 %v1867
      %v2095 = vunpack.c.h.b16 %v1867
      %v2096 = vunpack.c.l.b16 %v1868
      %v2097 = vunpack.c.h.b16 %v1868
      %v2098 = vunpack.c.l.b16 %v1869
      %v2099 = vunpack.c.h.b16 %v1869
      %v2100 = vunpack.c.l.b16 %v1870
      %v2101 = vunpack.c.h.b16 %v1870
      %v2102 = vunpack.c.l.b16 %v1871
      %v2103 = vunpack.c.h.b16 %v1871
      %v2104 = vunpack.c.l.b16 %v1872
      %v2105 = vunpack.c.h.b16 %v1872
      %v2106 = vunpack.c.l.b16 %v1873
      %v2107 = vunpack.c.h.b16 %v1873
      %v2108 = vunpack.c.l.b16 %v1874
      %v2109 = vunpack.c.h.b16 %v1874
      %v2110 = vunpack.c.l.b16 %v1875
      %v2111 = vunpack.c.h.b16 %v1875
      %v2112 = vunpack.c.l.b16 %v1876
      %v2113 = vunpack.c.h.b16 %v1876
      %v2114 = vunpack.c.l.b16 %v1877
      %v2115 = vunpack.c.h.b16 %v1877
      %v2116 = vunpack.c.l.b16 %v1878
      %v2117 = vunpack.c.h.b16 %v1878
      %v2118 = vunpack.c.l.b16 %v1879
      %v2119 = vunpack.c.h.b16 %v1879
      %v2120 = vunpack.c.l.b16 %v1880
      %v2121 = vunpack.c.h.b16 %v1880
      %v2122 = vunpack.c.l.b16 %v1881
      %v2123 = vunpack.c.h.b16 %v1881
      %v2124 = vunpack.c.l.b16 %v1882
      %v2125 = vunpack.c.h.b16 %v1882
      %v2126 = vunpack.c.l.b16 %v1883
      %v2127 = vunpack.c.h.b16 %v1883
      %v2128 = vunpack.c.l.b16 %v1884
      %v2129 = vunpack.c.h.b16 %v1884
      %v2130 = vunpack.c.l.b16 %v1885
      %v2131 = vunpack.c.h.b16 %v1885
      %v2132 = vunpack.c.l.b16 %v1886
      %v2133 = vunpack.c.h.b16 %v1886
      %v2134 = vunpack.c.l.b16 %v1887
      %v2135 = vunpack.c.h.b16 %v1887
      %v2136 = vunpack.c.l.b16 %v1888
      %v2137 = vunpack.c.h.b16 %v1888
      %v2138 = vunpack.c.l.b16 %v1889
      %v2139 = vunpack.c.h.b16 %v1889
      %v2140 = vunpack.c.l.b16 %v1890
      %v2141 = vunpack.c.h.b16 %v1890
      %v2142 = vunpack.c.l.b16 %v1891
      %v2143 = vunpack.c.h.b16 %v1891
      %v2144 = vunpack.c.l.b16 %v1892
      %v2145 = vunpack.c.h.b16 %v1892
      %v2146 = vunpack.c.l.b16 %v1893
      %v2147 = vunpack.c.h.b16 %v1893
      %v2148 = vunpack.c.l.b16 %v1894
      %v2149 = vunpack.c.h.b16 %v1894
      %v2150 = vunpack.c.l.b16 %v1895
      %v2151 = vunpack.c.h.b16 %v1895
      %v2152 = vunpack.c.l.b16 %v1896
      %v2153 = vunpack.c.h.b16 %v1896
      %v2154 = vunpack.c.l.b16 %v1897
      %v2155 = vunpack.c.h.b16 %v1897
      %v2156 = vunpack.c.l.b16 %v1898
      %v2157 = vunpack.c.h.b16 %v1898
      %v2158 = vunpack.c.l.b16 %v1899
      %v2159 = vunpack.c.h.b16 %v1899
      %v2160 = vunpack.c.l.b16 %v1900
      %v2161 = vunpack.c.h.b16 %v1900
      %v2162 = vunpack.c.l.b16 %v1901
      %v2163 = vunpack.c.h.b16 %v1901
      %v2164 = vunpack.c.l.b16 %v1902
      %v2165 = vunpack.c.h.b16 %v1902
      %v2166 = vunpack.c.l.b16 %v1903
      %v2167 = vunpack.c.h.b16 %v1903
      %v2168 = vunpack.c.l.b16 %v1904
      %v2169 = vunpack.c.h.b16 %v1904
      %v2170 = vunpack.c.l.b16 %v1905
      %v2171 = vunpack.c.h.b16 %v1905
      %v2172 = vpack.c.b16 %v2064, %v2062
      %v2173 = vpack.c.b16 %v2065, %v2063
      %v2174 = vpack.c.b16 %v2068, %v2066
      %v2175 = vpack.c.b16 %v2069, %v2067
      %v2176 = vpack.c.b16 %v2072, %v2070
      %v2177 = vpack.c.b16 %v2073, %v2071
      %v2178 = vpack.c.b16 %v2076, %v2074
      %v2179 = vpack.c.b16 %v2077, %v2075
      %v2180 = vpack.c.b16 %v2080, %v2078
      %v2181 = vpack.c.b16 %v2081, %v2079
      %v2182 = vpack.c.b16 %v2084, %v2082
      %v2183 = vpack.c.b16 %v2085, %v2083
      %v2184 = vpack.c.b16 %v2088, %v2086
      %v2185 = vpack.c.b16 %v2089, %v2087
      %v2186 = vpack.c.b16 %v2092, %v2090
      %v2187 = vpack.c.b16 %v2093, %v2091
      %v2188 = vpack.c.b16 %v2096, %v2094
      %v2189 = vpack.c.b16 %v2097, %v2095
      %v2190 = vpack.c.b16 %v2100, %v2098
      %v2191 = vpack.c.b16 %v2101, %v2099
      %v2192 = vpack.c.b16 %v2104, %v2102
      %v2193 = vpack.c.b16 %v2105, %v2103
      %v2194 = vpack.c.b16 %v2108, %v2106
      %v2195 = vpack.c.b16 %v2109, %v2107
      %v2196 = vpack.c.b16 %v2112, %v2110
      %v2197 = vpack.c.b16 %v2113, %v2111
      %v2198 = vpack.c.b16 %v2116, %v2114
      %v2199 = vpack.c.b16 %v2117, %v2115
      %v2200 = vpack.c.b16 %v2120, %v2118
      %v2201 = vpack.c.b16 %v2121, %v2119
      %v2202 = vpack.c.b16 %v2124, %v2122
      %v2203 = vpack.c.b16 %v2125, %v2123
      %v2204 = vpack.c.b16 %v2128, %v2126
      %v2205 = vpack.c.b16 %v2129, %v2127
      %v2206 = vpack.c.b16 %v2132, %v2130
      %v2207 = vpack.c.b16 %v2133, %v2131
      %v2208 = vpack.c.b16 %v2136, %v2134
      %v2209 = vpack.c.b16 %v2137, %v2135
      %v2210 = vpack.c.b16 %v2140, %v2138
      %v2211 = vpack.c.b16 %v2141, %v2139
      %v2212 = vpack.c.b16 %v2144, %v2142
      %v2213 = vpack.c.b16 %v2145, %v2143
      %v2214 = vpack.c.b16 %v2148, %v2146
      %v2215 = vpack.c.b16 %v2149, %v2147
      %v2216 = vpack.c.b16 %v2152, %v2150
      %v2217 = vpack.c.b16 %v2153, %v2151
      %v2218 = vpack.c.b16 %v2156, %v2154
      %v2219 = vpack.c.b16 %v2157, %v2155
      %v2220 = vpack.c.b16 %v2160, %v2158
      %v2221 = vpack.c.b16 %v2161, %v2159
      %v2222 = vpack.c.b16 %v2164, %v2162
      %v2223 = vpack.c.b16 %v2165, %v2163
      %v2224 = vpack.c.b16 %v2168, %v2166
      %v2225 = vpack.c.b16 %v2169, %v2167
      %v2226 = vpack.c.b16 %v2170, %v2170
      %v2227 = vpack.c.b16 %v2171, %v2171
      %v2283 = vsel %vm697, %v1964, 0
      %v2286 = vsel %vm697, %v2000, 0
      %v2289 = vsel %vm704, %v2226, 0
      %v2292 = vsel %vm704, %v2227, 0
      %2294 = vmatpush.bf16.msra.mxu0 %v2186
      %2295 = vmatpush.bf16.msra.mxu0 %v2184
      %2296 = vmatpush.bf16.msra.mxu0 %v2182
      %2297 = vmatpush.bf16.msra.mxu0 %v2180
      %2298 = vmatpush.bf16.msra.mxu0 %v2178
      %2299 = vmatpush.bf16.msra.mxu0 %v2176
      %2300 = vmatpush.bf16.msra.mxu0 %v2174
      %2301 = vmatpush.bf16.msra.mxu0 %v2172
      %2302 = vmatmul.bf16.gmra.mxu0 %v1928
      %v2303 = vpop.f32.mrf.mxu0
      %v2304 = vadd.f32 0.0, %v2303
      %v2305 = vpop.f32.mrf.mxu0
      %v2306 = vadd.f32 0.0, %v2305
      %2307 = vmatmul.bf16.gmra.mxu0 %v1973
      %v2308 = vpop.f32.mrf.mxu0
      %v2309 = vadd.f32 0.0, %v2308
      %v2310 = vpop.f32.mrf.mxu0
      %v2311 = vadd.f32 0.0, %v2310
      %2312 = vdwg.mxu0
      %2313 = vmatpush.bf16.msra.mxu0 %v2202
      %2314 = vmatpush.bf16.msra.mxu0 %v2200
      %2315 = vmatpush.bf16.msra.mxu0 %v2198
      %2316 = vmatpush.bf16.msra.mxu0 %v2196
      %2317 = vmatpush.bf16.msra.mxu0 %v2194
      %2318 = vmatpush.bf16.msra.mxu0 %v2192
      %2319 = vmatpush.bf16.msra.mxu0 %v2190
      %2320 = vmatpush.bf16.msra.mxu0 %v2188
      %2321 = vmatmul.bf16.gmra.mxu0 %v1940
      %v2322 = vpop.f32.mrf.mxu0
      %v2323 = vadd.f32 %v2304, %v2322
      %v2324 = vpop.f32.mrf.mxu0
      %v2325 = vadd.f32 %v2306, %v2324
      %2326 = vmatmul.bf16.gmra.mxu0 %v1982
      %v2327 = vpop.f32.mrf.mxu0
      %v2328 = vadd.f32 %v2309, %v2327
      %v2329 = vpop.f32.mrf.mxu0
      %v2330 = vadd.f32 %v2311, %v2329
      %2331 = vdwg.mxu0
      %2332 = vmatpush.bf16.msra.mxu0 %v2218
      %2333 = vmatpush.bf16.msra.mxu0 %v2216
      %2334 = vmatpush.bf16.msra.mxu0 %v2214
      %2335 = vmatpush.bf16.msra.mxu0 %v2212
      %2336 = vmatpush.bf16.msra.mxu0 %v2210
      %2337 = vmatpush.bf16.msra.mxu0 %v2208
      %2338 = vmatpush.bf16.msra.mxu0 %v2206
      %2339 = vmatpush.bf16.msra.mxu0 %v2204
      %2340 = vmatmul.bf16.gmra.mxu0 %v1952
      %v2341 = vpop.f32.mrf.mxu0
      %v2342 = vadd.f32 %v2323, %v2341
      %v2343 = vpop.f32.mrf.mxu0
      %v2344 = vadd.f32 %v2325, %v2343
      %2345 = vmatmul.bf16.gmra.mxu0 %v1991
      %v2346 = vpop.f32.mrf.mxu0
      %v2347 = vadd.f32 %v2328, %v2346
      %v2348 = vpop.f32.mrf.mxu0
      %v2349 = vadd.f32 %v2330, %v2348
      %2350 = vdwg.mxu0
      %2351 = vmatpush.bf16.msra.mxu0 0
      %2352 = vmatpush.bf16.msra.mxu0 0
      %2353 = vmatpush.bf16.msra.mxu0 0
      %2354 = vmatpush.bf16.msra.mxu0 0
      %2355 = vmatpush.bf16.msra.mxu0 %v2289
      %2356 = vmatpush.bf16.msra.mxu0 %v2224
      %2357 = vmatpush.bf16.msra.mxu0 %v2222
      %2358 = vmatpush.bf16.msra.mxu0 %v2220
      %2359 = vmatmul.bf16.gmra.mxu0 %v2283
      %v2360 = vpop.f32.mrf.mxu0
      %v2361 = vadd.f32 %v2342, %v2360
      %v2362 = vpop.f32.mrf.mxu0
      %v2363 = vadd.f32 %v2344, %v2362
      %2364 = vmatmul.bf16.gmra.mxu0 %v2286
      %v2365 = vpop.f32.mrf.mxu0
      %v2366 = vadd.f32 %v2347, %v2365
      %v2367 = vpop.f32.mrf.mxu0
      %v2368 = vadd.f32 %v2349, %v2367
      %2369 = vdwg.mxu0
      %2370 = vmatpush.bf16.msra.mxu0 %v2187
      %2371 = vmatpush.bf16.msra.mxu0 %v2185
      %2372 = vmatpush.bf16.msra.mxu0 %v2183
      %2373 = vmatpush.bf16.msra.mxu0 %v2181
      %2374 = vmatpush.bf16.msra.mxu0 %v2179
      %2375 = vmatpush.bf16.msra.mxu0 %v2177
      %2376 = vmatpush.bf16.msra.mxu0 %v2175
      %2377 = vmatpush.bf16.msra.mxu0 %v2173
      %2378 = vmatmul.bf16.gmra.mxu0 %v1928
      %v2379 = vpop.f32.mrf.mxu0
      %v2380 = vadd.f32 0.0, %v2379
      %v2381 = vpop.f32.mrf.mxu0
      %v2382 = vadd.f32 0.0, %v2381
      %2383 = vmatmul.bf16.gmra.mxu0 %v1973
      %v2384 = vpop.f32.mrf.mxu0
      %v2385 = vadd.f32 0.0, %v2384
      %v2386 = vpop.f32.mrf.mxu0
      %v2387 = vadd.f32 0.0, %v2386
      %2388 = vdwg.mxu0
      %2389 = vmatpush.bf16.msra.mxu0 %v2203
      %2390 = vmatpush.bf16.msra.mxu0 %v2201
      %2391 = vmatpush.bf16.msra.mxu0 %v2199
      %2392 = vmatpush.bf16.msra.mxu0 %v2197
      %2393 = vmatpush.bf16.msra.mxu0 %v2195
      %2394 = vmatpush.bf16.msra.mxu0 %v2193
      %2395 = vmatpush.bf16.msra.mxu0 %v2191
      %2396 = vmatpush.bf16.msra.mxu0 %v2189
      %2397 = vmatmul.bf16.gmra.mxu0 %v1940
      %v2398 = vpop.f32.mrf.mxu0
      %v2399 = vadd.f32 %v2380, %v2398
      %v2400 = vpop.f32.mrf.mxu0
      %v2401 = vadd.f32 %v2382, %v2400
      %2402 = vmatmul.bf16.gmra.mxu0 %v1982
      %v2403 = vpop.f32.mrf.mxu0
      %v2404 = vadd.f32 %v2385, %v2403
      %v2405 = vpop.f32.mrf.mxu0
      %v2406 = vadd.f32 %v2387, %v2405
      %2407 = vdwg.mxu0
      %2408 = vmatpush.bf16.msra.mxu0 %v2219
      %2409 = vmatpush.bf16.msra.mxu0 %v2217
      %2410 = vmatpush.bf16.msra.mxu0 %v2215
      %2411 = vmatpush.bf16.msra.mxu0 %v2213
      %2412 = vmatpush.bf16.msra.mxu0 %v2211
      %2413 = vmatpush.bf16.msra.mxu0 %v2209
      %2414 = vmatpush.bf16.msra.mxu0 %v2207
      %2415 = vmatpush.bf16.msra.mxu0 %v2205
      %2416 = vmatmul.bf16.gmra.mxu0 %v1952
      %v2417 = vpop.f32.mrf.mxu0
      %v2418 = vadd.f32 %v2399, %v2417
      %v2419 = vpop.f32.mrf.mxu0
      %v2420 = vadd.f32 %v2401, %v2419
      %2421 = vmatmul.bf16.gmra.mxu0 %v1991
      %v2422 = vpop.f32.mrf.mxu0
      %v2423 = vadd.f32 %v2404, %v2422
      %v2424 = vpop.f32.mrf.mxu0
      %v2425 = vadd.f32 %v2406, %v2424
      %2426 = vdwg.mxu0
      %2427 = vmatpush.bf16.msra.mxu0 0
      %2428 = vmatpush.bf16.msra.mxu0 0
      %2429 = vmatpush.bf16.msra.mxu0 0
      %2430 = vmatpush.bf16.msra.mxu0 0
      %2431 = vmatpush.bf16.msra.mxu0 %v2292
      %2432 = vmatpush.bf16.msra.mxu0 %v2225
      %2433 = vmatpush.bf16.msra.mxu0 %v2223
      %2434 = vmatpush.bf16.msra.mxu0 %v2221
      %2435 = vmatmul.bf16.gmra.mxu0 %v2283
      %v2436 = vpop.f32.mrf.mxu0
      %v2437 = vadd.f32 %v2418, %v2436
      %v2438 = vpop.f32.mrf.mxu0
      %v2439 = vadd.f32 %v2420, %v2438
      %2440 = vmatmul.bf16.gmra.mxu0 %v2286
      %v2441 = vpop.f32.mrf.mxu0
      %v2442 = vadd.f32 %v2423, %v2441
      %v2443 = vpop.f32.mrf.mxu0
      %v2444 = vadd.f32 %v2425, %v2443
      %2445 = vdwg.mxu0
      %v2446 = vadd.f32 %v1840, %v2361
      %v2447 = vadd.f32 %v1841, %v2437
      %v2448 = vadd.f32 %v1842, %v2363
      %v2449 = vadd.f32 %v1843, %v2439
      %v2450 = vadd.f32 %v1844, %v2366
      %v2451 = vadd.f32 %v1845, %v2442
      %v2452 = vadd.f32 %v1846, %v2368
      %v2453 = vadd.f32 %v1847, %v2444
      %v2454 = vld [vmem:[%s165] sm:$0xcc]
      %v2455 = vld [vmem:[%s165 + $0x8] sm:$0xcc]
      %s2456 = scalar_lea.vmem %s1, 1760
      %v2457 = vld [vmem:[%s2456] sm:$0xff]
      %v2458 = vld [vmem:[%s2456 + $0x8] sm:$0xff]
      %v2459 = vld [vmem:[%s2456 + $0x10] sm:$0xff]
      %v2460 = vld [vmem:[%s2456 + $0x18] sm:$0xff]
      %v2461 = vld [vmem:[%s2456 + $0x20] sm:$0xff]
      %v2462 = vld [vmem:[%s2456 + $0x28] sm:$0xff]
      %v2463 = vld [vmem:[%s2456 + $0x30] sm:$0xff]
      %v2464 = vld [vmem:[%s2456 + $0x38] sm:$0xff]
      %v2465 = vld [vmem:[%s2456 + $0x40] sm:$0xff]
      %v2466 = vld [vmem:[%s2456 + $0x48] sm:$0xff]
      %v2467 = vld [vmem:[%s2456 + $0x50] sm:$0xff]
      %v2468 = vld [vmem:[%s2456 + $0x58] sm:$0xff]
      %v2469 = vld [vmem:[%s2456 + $0x60] sm:$0xff]
      %v2470 = vld [vmem:[%s2456 + $0x68] sm:$0xff]
      %v2471 = vld [vmem:[%s2456 + $0x70] sm:$0xff]
      %v2472 = vld [vmem:[%s2456 + $0x78] sm:$0xff]
      %v2473 = vld [vmem:[%s2456 + $0x80] sm:$0xff]
      %v2474 = vld [vmem:[%s2456 + $0x88] sm:$0xff]
      %v2475 = vld [vmem:[%s2456 + $0x90] sm:$0xff]
      %v2476 = vld [vmem:[%s2456 + $0x98] sm:$0xff]
      %v2477 = vld [vmem:[%s2456 + $0xa0] sm:$0xff]
      %v2478 = vld [vmem:[%s2456 + $0xa8] sm:$0xff]
      %v2479 = vld [vmem:[%s2456 + $0xb0] sm:$0xff]
      %v2480 = vld [vmem:[%s2456 + $0xb8] sm:$0xff]
      %v2481 = vld [vmem:[%s2456 + $0xc0] sm:$0xff]
      %v2482 = vld [vmem:[%s2456 + $0xc8] sm:$0xff]
      %v2483 = vld [vmem:[%s2456 + $0xd0] sm:$0xff]
      %v2484 = vld [vmem:[%s2456 + $0xd8] sm:$0xff]
      %v2485 = vld [vmem:[%s2456 + $0xe0] sm:$0xff]
      %v2486 = vld [vmem:[%s2456 + $0xe8] sm:$0xff]
      %v2487 = vld [vmem:[%s2456 + $0xf0] sm:$0xff]
      %v2488 = vld [vmem:[%s2456 + $0xf8] sm:$0xff]
      %v2489 = vld [vmem:[%s2456 + $0x100] sm:$0xff]
      %v2490 = vld [vmem:[%s2456 + $0x108] sm:$0xff]
      %v2491 = vld [vmem:[%s2456 + $0x110] sm:$0xff]
      %v2492 = vld [vmem:[%s2456 + $0x118] sm:$0xff]
      %v2493 = vld [vmem:[%s2456 + $0x120] sm:$0xff]
      %v2494 = vld [vmem:[%s2456 + $0x128] sm:$0xff]
      %v2495 = vld [vmem:[%s2456 + $0x130] sm:$0xff]
      %v2496 = vld [vmem:[%s2456 + $0x138] sm:$0xff]
      %v2497 = vld [vmem:[%s2456 + $0x140] sm:$0xff]
      %v2498 = vld [vmem:[%s2456 + $0x148] sm:$0xff]
      %v2499 = vld [vmem:[%s2456 + $0x150] sm:$0xff]
      %v2500 = vld [vmem:[%s2456 + $0x158] sm:$0xff]
      %v2501 = vld [vmem:[%s2456 + $0x160] sm:$0xff]
      %v2502 = vld [vmem:[%s2456 + $0x168] sm:$0xff]
      %v2503 = vld [vmem:[%s2456 + $0x170] sm:$0xff]
      %v2504 = vld [vmem:[%s2456 + $0x178] sm:$0xff]
      %v2505 = vld [vmem:[%s2456 + $0x180] sm:$0xff]
      %v2506 = vld [vmem:[%s2456 + $0x188] sm:$0xff]
      %v2507 = vld [vmem:[%s2456 + $0x190] sm:$0xff]
      %v2508 = vld [vmem:[%s2456 + $0x198] sm:$0xff]
      %v2509 = vld [vmem:[%s2456 + $0x1a0] sm:$0xff]
      %v2510 = vld [vmem:[%s2456 + $0x1a8] sm:$0xff]
      %v2511 = vld [vmem:[%s2456 + $0x1b0] sm:$0xff]
      %v2514 = vunpack.c.l.b16 %v2454
      %v2515 = vunpack.c.h.b16 %v2454
      %v2516 = vunpack.c.l.b16 %v2455
      %v2517 = vunpack.c.h.b16 %v2455
      %v2518 = vpack.c.b16 %v307, %v2514
      %v2519 = vpack.c.b16 %v308, %v2515
      %v2520 = vpack.c.b16 %v309, %v2516
      %v2521 = vpack.c.b16 %v310, %v2517
      %vm2522 = vcmask 1045504
      %v2523 = vrot.slane %v2518, 2
      %v2524 = vrot.slane %v327, 2
      %v2525 = vsel %vm2522, %v2523, %v2524
      %v2526 = vrot.slane %v2519, 2
      %v2527 = vrot.slane %v328, 2
      %v2528 = vsel %vm2522, %v2526, %v2527
      %v2529 = vrot.slane %v2520, 2
      %v2530 = vrot.slane %v329, 2
      %v2531 = vsel %vm2522, %v2529, %v2530
      %v2532 = vrot.slane %v2521, 2
      %v2533 = vrot.slane %v330, 2
      %v2534 = vsel %vm2522, %v2532, %v2533
      %v2535 = vrot.slane %v1912, 2
      %v2536 = vsel %vm2522, %v2524, %v2535
      %v2537 = vrot.slane %v1913, 2
      %v2538 = vsel %vm2522, %v2527, %v2537
      %v2539 = vrot.slane %v1914, 2
      %v2540 = vsel %vm2522, %v2530, %v2539
      %v2541 = vrot.slane %v1915, 2
      %v2542 = vsel %vm2522, %v2533, %v2541
      %v2604 = vunpack.c.l.b16 %v2457
      %v2605 = vunpack.c.h.b16 %v2457
      %v2606 = vunpack.c.l.b16 %v2458
      %v2607 = vunpack.c.h.b16 %v2458
      %v2608 = vunpack.c.l.b16 %v2459
      %v2609 = vunpack.c.h.b16 %v2459
      %v2610 = vunpack.c.l.b16 %v2460
      %v2611 = vunpack.c.h.b16 %v2460
      %v2612 = vunpack.c.l.b16 %v2461
      %v2613 = vunpack.c.h.b16 %v2461
      %v2614 = vunpack.c.l.b16 %v2462
      %v2615 = vunpack.c.h.b16 %v2462
      %v2616 = vunpack.c.l.b16 %v2463
      %v2617 = vunpack.c.h.b16 %v2463
      %v2618 = vunpack.c.l.b16 %v2464
      %v2619 = vunpack.c.h.b16 %v2464
      %v2620 = vunpack.c.l.b16 %v2465
      %v2621 = vunpack.c.h.b16 %v2465
      %v2622 = vunpack.c.l.b16 %v2466
      %v2623 = vunpack.c.h.b16 %v2466
      %v2624 = vunpack.c.l.b16 %v2467
      %v2625 = vunpack.c.h.b16 %v2467
      %v2626 = vunpack.c.l.b16 %v2468
      %v2627 = vunpack.c.h.b16 %v2468
      %v2628 = vunpack.c.l.b16 %v2469
      %v2629 = vunpack.c.h.b16 %v2469
      %v2630 = vunpack.c.l.b16 %v2470
      %v2631 = vunpack.c.h.b16 %v2470
      %v2632 = vunpack.c.l.b16 %v2471
      %v2633 = vunpack.c.h.b16 %v2471
      %v2634 = vunpack.c.l.b16 %v2472
      %v2635 = vunpack.c.h.b16 %v2472
      %v2636 = vunpack.c.l.b16 %v2473
      %v2637 = vunpack.c.h.b16 %v2473
      %v2638 = vunpack.c.l.b16 %v2474
      %v2639 = vunpack.c.h.b16 %v2474
      %v2640 = vunpack.c.l.b16 %v2475
      %v2641 = vunpack.c.h.b16 %v2475
      %v2642 = vunpack.c.l.b16 %v2476
      %v2643 = vunpack.c.h.b16 %v2476
      %v2644 = vunpack.c.l.b16 %v2477
      %v2645 = vunpack.c.h.b16 %v2477
      %v2646 = vunpack.c.l.b16 %v2478
      %v2647 = vunpack.c.h.b16 %v2478
      %v2648 = vunpack.c.l.b16 %v2479
      %v2649 = vunpack.c.h.b16 %v2479
      %v2650 = vunpack.c.l.b16 %v2480
      %v2651 = vunpack.c.h.b16 %v2480
      %v2652 = vunpack.c.l.b16 %v2481
      %v2653 = vunpack.c.h.b16 %v2481
      %v2654 = vunpack.c.l.b16 %v2482
      %v2655 = vunpack.c.h.b16 %v2482
      %v2656 = vunpack.c.l.b16 %v2483
      %v2657 = vunpack.c.h.b16 %v2483
      %v2658 = vunpack.c.l.b16 %v2484
      %v2659 = vunpack.c.h.b16 %v2484
      %v2660 = vunpack.c.l.b16 %v2485
      %v2661 = vunpack.c.h.b16 %v2485
      %v2662 = vunpack.c.l.b16 %v2486
      %v2663 = vunpack.c.h.b16 %v2486
      %v2664 = vunpack.c.l.b16 %v2487
      %v2665 = vunpack.c.h.b16 %v2487
      %v2666 = vunpack.c.l.b16 %v2488
      %v2667 = vunpack.c.h.b16 %v2488
      %v2668 = vunpack.c.l.b16 %v2489
      %v2669 = vunpack.c.h.b16 %v2489
      %v2670 = vunpack.c.l.b16 %v2490
      %v2671 = vunpack.c.h.b16 %v2490
      %v2672 = vunpack.c.l.b16 %v2491
      %v2673 = vunpack.c.h.b16 %v2491
      %v2674 = vunpack.c.l.b16 %v2492
      %v2675 = vunpack.c.h.b16 %v2492
      %v2676 = vunpack.c.l.b16 %v2493
      %v2677 = vunpack.c.h.b16 %v2493
      %v2678 = vunpack.c.l.b16 %v2494
      %v2679 = vunpack.c.h.b16 %v2494
      %v2680 = vunpack.c.l.b16 %v2495
      %v2681 = vunpack.c.h.b16 %v2495
      %v2682 = vunpack.c.l.b16 %v2496
      %v2683 = vunpack.c.h.b16 %v2496
      %v2684 = vunpack.c.l.b16 %v2497
      %v2685 = vunpack.c.h.b16 %v2497
      %v2686 = vunpack.c.l.b16 %v2498
      %v2687 = vunpack.c.h.b16 %v2498
      %v2688 = vunpack.c.l.b16 %v2499
      %v2689 = vunpack.c.h.b16 %v2499
      %v2690 = vunpack.c.l.b16 %v2500
      %v2691 = vunpack.c.h.b16 %v2500
      %v2692 = vunpack.c.l.b16 %v2501
      %v2693 = vunpack.c.h.b16 %v2501
      %v2694 = vunpack.c.l.b16 %v2502
      %v2695 = vunpack.c.h.b16 %v2502
      %v2696 = vunpack.c.l.b16 %v2503
      %v2697 = vunpack.c.h.b16 %v2503
      %v2698 = vunpack.c.l.b16 %v2504
      %v2699 = vunpack.c.h.b16 %v2504
      %v2700 = vunpack.c.l.b16 %v2505
      %v2701 = vunpack.c.h.b16 %v2505
      %v2702 = vunpack.c.l.b16 %v2506
      %v2703 = vunpack.c.h.b16 %v2506
      %v2704 = vunpack.c.l.b16 %v2507
      %v2705 = vunpack.c.h.b16 %v2507
      %v2706 = vunpack.c.l.b16 %v2508
      %v2707 = vunpack.c.h.b16 %v2508
      %v2708 = vunpack.c.l.b16 %v2509
      %v2709 = vunpack.c.h.b16 %v2509
      %v2710 = vunpack.c.l.b16 %v2510
      %v2711 = vunpack.c.h.b16 %v2510
      %v2712 = vunpack.c.l.b16 %v2511
      %v2713 = vunpack.c.h.b16 %v2511
      %v2714 = vpack.c.b16 %v2606, %v2604
      %v2715 = vpack.c.b16 %v2607, %v2605
      %v2716 = vpack.c.b16 %v2610, %v2608
      %v2717 = vpack.c.b16 %v2611, %v2609
      %v2718 = vpack.c.b16 %v2614, %v2612
      %v2719 = vpack.c.b16 %v2615, %v2613
      %v2720 = vpack.c.b16 %v2618, %v2616
      %v2721 = vpack.c.b16 %v2619, %v2617
      %v2722 = vpack.c.b16 %v2622, %v2620
      %v2723 = vpack.c.b16 %v2623, %v2621
      %v2724 = vpack.c.b16 %v2626, %v2624
      %v2725 = vpack.c.b16 %v2627, %v2625
      %v2726 = vpack.c.b16 %v2630, %v2628
      %v2727 = vpack.c.b16 %v2631, %v2629
      %v2728 = vpack.c.b16 %v2634, %v2632
      %v2729 = vpack.c.b16 %v2635, %v2633
      %v2730 = vpack.c.b16 %v2638, %v2636
      %v2731 = vpack.c.b16 %v2639, %v2637
      %v2732 = vpack.c.b16 %v2642, %v2640
      %v2733 = vpack.c.b16 %v2643, %v2641
      %v2734 = vpack.c.b16 %v2646, %v2644
      %v2735 = vpack.c.b16 %v2647, %v2645
      %v2736 = vpack.c.b16 %v2650, %v2648
      %v2737 = vpack.c.b16 %v2651, %v2649
      %v2738 = vpack.c.b16 %v2654, %v2652
      %v2739 = vpack.c.b16 %v2655, %v2653
      %v2740 = vpack.c.b16 %v2658, %v2656
      %v2741 = vpack.c.b16 %v2659, %v2657
      %v2742 = vpack.c.b16 %v2662, %v2660
      %v2743 = vpack.c.b16 %v2663, %v2661
      %v2744 = vpack.c.b16 %v2666, %v2664
      %v2745 = vpack.c.b16 %v2667, %v2665
      %v2746 = vpack.c.b16 %v2670, %v2668
      %v2747 = vpack.c.b16 %v2671, %v2669
      %v2748 = vpack.c.b16 %v2674, %v2672
      %v2749 = vpack.c.b16 %v2675, %v2673
      %v2750 = vpack.c.b16 %v2678, %v2676
      %v2751 = vpack.c.b16 %v2679, %v2677
      %v2752 = vpack.c.b16 %v2682, %v2680
      %v2753 = vpack.c.b16 %v2683, %v2681
      %v2754 = vpack.c.b16 %v2686, %v2684
      %v2755 = vpack.c.b16 %v2687, %v2685
      %v2756 = vpack.c.b16 %v2690, %v2688
      %v2757 = vpack.c.b16 %v2691, %v2689
      %v2758 = vpack.c.b16 %v2694, %v2692
      %v2759 = vpack.c.b16 %v2695, %v2693
      %v2760 = vpack.c.b16 %v2698, %v2696
      %v2761 = vpack.c.b16 %v2699, %v2697
      %v2762 = vpack.c.b16 %v2702, %v2700
      %v2763 = vpack.c.b16 %v2703, %v2701
      %v2764 = vpack.c.b16 %v2706, %v2704
      %v2765 = vpack.c.b16 %v2707, %v2705
      %v2766 = vpack.c.b16 %v2710, %v2708
      %v2767 = vpack.c.b16 %v2711, %v2709
      %v2768 = vpack.c.b16 %v2712, %v2712
      %v2769 = vpack.c.b16 %v2713, %v2713
      %v2825 = vsel %vm697, %v2534, 0
      %v2828 = vsel %vm697, %v2542, 0
      %v2831 = vsel %vm704, %v2768, 0
      %v2834 = vsel %vm704, %v2769, 0
      %2836 = vmatpush.bf16.msra.mxu0 %v2728
      %2837 = vmatpush.bf16.msra.mxu0 %v2726
      %2838 = vmatpush.bf16.msra.mxu0 %v2724
      %2839 = vmatpush.bf16.msra.mxu0 %v2722
      %2840 = vmatpush.bf16.msra.mxu0 %v2720
      %2841 = vmatpush.bf16.msra.mxu0 %v2718
      %2842 = vmatpush.bf16.msra.mxu0 %v2716
      %2843 = vmatpush.bf16.msra.mxu0 %v2714
      %2844 = vmatmul.bf16.gmra.mxu0 %v2525
      %v2845 = vpop.f32.mrf.mxu0
      %v2846 = vadd.f32 0.0, %v2845
      %v2847 = vpop.f32.mrf.mxu0
      %v2848 = vadd.f32 0.0, %v2847
      %2849 = vmatmul.bf16.gmra.mxu0 %v2536
      %v2850 = vpop.f32.mrf.mxu0
      %v2851 = vadd.f32 0.0, %v2850
      %v2852 = vpop.f32.mrf.mxu0
      %v2853 = vadd.f32 0.0, %v2852
      %2854 = vdwg.mxu0
      %2855 = vmatpush.bf16.msra.mxu0 %v2744
      %2856 = vmatpush.bf16.msra.mxu0 %v2742
      %2857 = vmatpush.bf16.msra.mxu0 %v2740
      %2858 = vmatpush.bf16.msra.mxu0 %v2738
      %2859 = vmatpush.bf16.msra.mxu0 %v2736
      %2860 = vmatpush.bf16.msra.mxu0 %v2734
      %2861 = vmatpush.bf16.msra.mxu0 %v2732
      %2862 = vmatpush.bf16.msra.mxu0 %v2730
      %2863 = vmatmul.bf16.gmra.mxu0 %v2528
      %v2864 = vpop.f32.mrf.mxu0
      %v2865 = vadd.f32 %v2846, %v2864
      %v2866 = vpop.f32.mrf.mxu0
      %v2867 = vadd.f32 %v2848, %v2866
      %2868 = vmatmul.bf16.gmra.mxu0 %v2538
      %v2869 = vpop.f32.mrf.mxu0
      %v2870 = vadd.f32 %v2851, %v2869
      %v2871 = vpop.f32.mrf.mxu0
      %v2872 = vadd.f32 %v2853, %v2871
      %2873 = vdwg.mxu0
      %2874 = vmatpush.bf16.msra.mxu0 %v2760
      %2875 = vmatpush.bf16.msra.mxu0 %v2758
      %2876 = vmatpush.bf16.msra.mxu0 %v2756
      %2877 = vmatpush.bf16.msra.mxu0 %v2754
      %2878 = vmatpush.bf16.msra.mxu0 %v2752
      %2879 = vmatpush.bf16.msra.mxu0 %v2750
      %2880 = vmatpush.bf16.msra.mxu0 %v2748
      %2881 = vmatpush.bf16.msra.mxu0 %v2746
      %2882 = vmatmul.bf16.gmra.mxu0 %v2531
      %v2883 = vpop.f32.mrf.mxu0
      %v2884 = vadd.f32 %v2865, %v2883
      %v2885 = vpop.f32.mrf.mxu0
      %v2886 = vadd.f32 %v2867, %v2885
      %2887 = vmatmul.bf16.gmra.mxu0 %v2540
      %v2888 = vpop.f32.mrf.mxu0
      %v2889 = vadd.f32 %v2870, %v2888
      %v2890 = vpop.f32.mrf.mxu0
      %v2891 = vadd.f32 %v2872, %v2890
      %2892 = vdwg.mxu0
      %2893 = vmatpush.bf16.msra.mxu0 0
      %2894 = vmatpush.bf16.msra.mxu0 0
      %2895 = vmatpush.bf16.msra.mxu0 0
      %2896 = vmatpush.bf16.msra.mxu0 0
      %2897 = vmatpush.bf16.msra.mxu0 %v2831
      %2898 = vmatpush.bf16.msra.mxu0 %v2766
      %2899 = vmatpush.bf16.msra.mxu0 %v2764
      %2900 = vmatpush.bf16.msra.mxu0 %v2762
      %2901 = vmatmul.bf16.gmra.mxu0 %v2825
      %v2902 = vpop.f32.mrf.mxu0
      %v2903 = vadd.f32 %v2884, %v2902
      %v2904 = vpop.f32.mrf.mxu0
      %v2905 = vadd.f32 %v2886, %v2904
      %2906 = vmatmul.bf16.gmra.mxu0 %v2828
      %v2907 = vpop.f32.mrf.mxu0
      %v2908 = vadd.f32 %v2889, %v2907
      %v2909 = vpop.f32.mrf.mxu0
      %v2910 = vadd.f32 %v2891, %v2909
      %2911 = vdwg.mxu0
      %2912 = vmatpush.bf16.msra.mxu0 %v2729
      %2913 = vmatpush.bf16.msra.mxu0 %v2727
      %2914 = vmatpush.bf16.msra.mxu0 %v2725
      %2915 = vmatpush.bf16.msra.mxu0 %v2723
      %2916 = vmatpush.bf16.msra.mxu0 %v2721
      %2917 = vmatpush.bf16.msra.mxu0 %v2719
      %2918 = vmatpush.bf16.msra.mxu0 %v2717
      %2919 = vmatpush.bf16.msra.mxu0 %v2715
      %2920 = vmatmul.bf16.gmra.mxu0 %v2525
      %v2921 = vpop.f32.mrf.mxu0
      %v2922 = vadd.f32 0.0, %v2921
      %v2923 = vpop.f32.mrf.mxu0
      %v2924 = vadd.f32 0.0, %v2923
      %2925 = vmatmul.bf16.gmra.mxu0 %v2536
      %v2926 = vpop.f32.mrf.mxu0
      %v2927 = vadd.f32 0.0, %v2926
      %v2928 = vpop.f32.mrf.mxu0
      %v2929 = vadd.f32 0.0, %v2928
      %2930 = vdwg.mxu0
      %2931 = vmatpush.bf16.msra.mxu0 %v2745
      %2932 = vmatpush.bf16.msra.mxu0 %v2743
      %2933 = vmatpush.bf16.msra.mxu0 %v2741
      %2934 = vmatpush.bf16.msra.mxu0 %v2739
      %2935 = vmatpush.bf16.msra.mxu0 %v2737
      %2936 = vmatpush.bf16.msra.mxu0 %v2735
      %2937 = vmatpush.bf16.msra.mxu0 %v2733
      %2938 = vmatpush.bf16.msra.mxu0 %v2731
      %2939 = vmatmul.bf16.gmra.mxu0 %v2528
      %v2940 = vpop.f32.mrf.mxu0
      %v2941 = vadd.f32 %v2922, %v2940
      %v2942 = vpop.f32.mrf.mxu0
      %v2943 = vadd.f32 %v2924, %v2942
      %2944 = vmatmul.bf16.gmra.mxu0 %v2538
      %v2945 = vpop.f32.mrf.mxu0
      %v2946 = vadd.f32 %v2927, %v2945
      %v2947 = vpop.f32.mrf.mxu0
      %v2948 = vadd.f32 %v2929, %v2947
      %2949 = vdwg.mxu0
      %2950 = vmatpush.bf16.msra.mxu0 %v2761
      %2951 = vmatpush.bf16.msra.mxu0 %v2759
      %2952 = vmatpush.bf16.msra.mxu0 %v2757
      %2953 = vmatpush.bf16.msra.mxu0 %v2755
      %2954 = vmatpush.bf16.msra.mxu0 %v2753
      %2955 = vmatpush.bf16.msra.mxu0 %v2751
      %2956 = vmatpush.bf16.msra.mxu0 %v2749
      %2957 = vmatpush.bf16.msra.mxu0 %v2747
      %2958 = vmatmul.bf16.gmra.mxu0 %v2531
      %v2959 = vpop.f32.mrf.mxu0
      %v2960 = vadd.f32 %v2941, %v2959
      %v2961 = vpop.f32.mrf.mxu0
      %v2962 = vadd.f32 %v2943, %v2961
      %2963 = vmatmul.bf16.gmra.mxu0 %v2540
      %v2964 = vpop.f32.mrf.mxu0
      %v2965 = vadd.f32 %v2946, %v2964
      %v2966 = vpop.f32.mrf.mxu0
      %v2967 = vadd.f32 %v2948, %v2966
      %2968 = vdwg.mxu0
      %2969 = vmatpush.bf16.msra.mxu0 0
      %2970 = vmatpush.bf16.msra.mxu0 0
      %2971 = vmatpush.bf16.msra.mxu0 0
      %2972 = vmatpush.bf16.msra.mxu0 0
      %2973 = vmatpush.bf16.msra.mxu0 %v2834
      %2974 = vmatpush.bf16.msra.mxu0 %v2767
      %2975 = vmatpush.bf16.msra.mxu0 %v2765
      %2976 = vmatpush.bf16.msra.mxu0 %v2763
      %2977 = vmatmul.bf16.gmra.mxu0 %v2825
      %v2978 = vpop.f32.mrf.mxu0
      %v2979 = vadd.f32 %v2960, %v2978
      %v2980 = vpop.f32.mrf.mxu0
      %v2981 = vadd.f32 %v2962, %v2980
      %2982 = vmatmul.bf16.gmra.mxu0 %v2828
      %v2983 = vpop.f32.mrf.mxu0
      %v2984 = vadd.f32 %v2965, %v2983
      %v2985 = vpop.f32.mrf.mxu0
      %v2986 = vadd.f32 %v2967, %v2985
      %2987 = vdwg.mxu0
      %v2988 = vadd.f32 %v2446, %v2903
      %v2989 = vadd.f32 %v2447, %v2979
      %v2990 = vadd.f32 %v2448, %v2905
      %v2991 = vadd.f32 %v2449, %v2981
      %v2992 = vadd.f32 %v2450, %v2908
      %v2993 = vadd.f32 %v2451, %v2984
      %v2994 = vadd.f32 %v2452, %v2910
      %v2995 = vadd.f32 %v2453, %v2986
      %v2996 = vld [vmem:[%s165 + $0x40] sm:$0x77]
      %v2997 = vld [vmem:[%s165 + $0x48] sm:$0x77]
      %s2998 = scalar_lea.vmem %s1, 2200
      %v2999 = vld [vmem:[%s2998] sm:$0xff]
      %v3000 = vld [vmem:[%s2998 + $0x8] sm:$0xff]
      %v3001 = vld [vmem:[%s2998 + $0x10] sm:$0xff]
      %v3002 = vld [vmem:[%s2998 + $0x18] sm:$0xff]
      %v3003 = vld [vmem:[%s2998 + $0x20] sm:$0xff]
      %v3004 = vld [vmem:[%s2998 + $0x28] sm:$0xff]
      %v3005 = vld [vmem:[%s2998 + $0x30] sm:$0xff]
      %v3006 = vld [vmem:[%s2998 + $0x38] sm:$0xff]
      %v3007 = vld [vmem:[%s2998 + $0x40] sm:$0xff]
      %v3008 = vld [vmem:[%s2998 + $0x48] sm:$0xff]
      %v3009 = vld [vmem:[%s2998 + $0x50] sm:$0xff]
      %v3010 = vld [vmem:[%s2998 + $0x58] sm:$0xff]
      %v3011 = vld [vmem:[%s2998 + $0x60] sm:$0xff]
      %v3012 = vld [vmem:[%s2998 + $0x68] sm:$0xff]
      %v3013 = vld [vmem:[%s2998 + $0x70] sm:$0xff]
      %v3014 = vld [vmem:[%s2998 + $0x78] sm:$0xff]
      %v3015 = vld [vmem:[%s2998 + $0x80] sm:$0xff]
      %v3016 = vld [vmem:[%s2998 + $0x88] sm:$0xff]
      %v3017 = vld [vmem:[%s2998 + $0x90] sm:$0xff]
      %v3018 = vld [vmem:[%s2998 + $0x98] sm:$0xff]
      %v3019 = vld [vmem:[%s2998 + $0xa0] sm:$0xff]
      %v3020 = vld [vmem:[%s2998 + $0xa8] sm:$0xff]
      %v3021 = vld [vmem:[%s2998 + $0xb0] sm:$0xff]
      %v3022 = vld [vmem:[%s2998 + $0xb8] sm:$0xff]
      %v3023 = vld [vmem:[%s2998 + $0xc0] sm:$0xff]
      %v3024 = vld [vmem:[%s2998 + $0xc8] sm:$0xff]
      %v3025 = vld [vmem:[%s2998 + $0xd0] sm:$0xff]
      %v3026 = vld [vmem:[%s2998 + $0xd8] sm:$0xff]
      %v3027 = vld [vmem:[%s2998 + $0xe0] sm:$0xff]
      %v3028 = vld [vmem:[%s2998 + $0xe8] sm:$0xff]
      %v3029 = vld [vmem:[%s2998 + $0xf0] sm:$0xff]
      %v3030 = vld [vmem:[%s2998 + $0xf8] sm:$0xff]
      %v3031 = vld [vmem:[%s2998 + $0x100] sm:$0xff]
      %v3032 = vld [vmem:[%s2998 + $0x108] sm:$0xff]
      %v3033 = vld [vmem:[%s2998 + $0x110] sm:$0xff]
      %v3034 = vld [vmem:[%s2998 + $0x118] sm:$0xff]
      %v3035 = vld [vmem:[%s2998 + $0x120] sm:$0xff]
      %v3036 = vld [vmem:[%s2998 + $0x128] sm:$0xff]
      %v3037 = vld [vmem:[%s2998 + $0x130] sm:$0xff]
      %v3038 = vld [vmem:[%s2998 + $0x138] sm:$0xff]
      %v3039 = vld [vmem:[%s2998 + $0x140] sm:$0xff]
      %v3040 = vld [vmem:[%s2998 + $0x148] sm:$0xff]
      %v3041 = vld [vmem:[%s2998 + $0x150] sm:$0xff]
      %v3042 = vld [vmem:[%s2998 + $0x158] sm:$0xff]
      %v3043 = vld [vmem:[%s2998 + $0x160] sm:$0xff]
      %v3044 = vld [vmem:[%s2998 + $0x168] sm:$0xff]
      %v3045 = vld [vmem:[%s2998 + $0x170] sm:$0xff]
      %v3046 = vld [vmem:[%s2998 + $0x178] sm:$0xff]
      %v3047 = vld [vmem:[%s2998 + $0x180] sm:$0xff]
      %v3048 = vld [vmem:[%s2998 + $0x188] sm:$0xff]
      %v3049 = vld [vmem:[%s2998 + $0x190] sm:$0xff]
      %v3050 = vld [vmem:[%s2998 + $0x198] sm:$0xff]
      %v3051 = vld [vmem:[%s2998 + $0x1a0] sm:$0xff]
      %v3052 = vld [vmem:[%s2998 + $0x1a8] sm:$0xff]
      %v3053 = vld [vmem:[%s2998 + $0x1b0] sm:$0xff]
      %v3056 = vunpack.c.l.b16 %v2996
      %v3057 = vunpack.c.h.b16 %v2996
      %v3058 = vunpack.c.l.b16 %v2997
      %v3059 = vunpack.c.h.b16 %v2997
      %v3060 = vpack.c.b16 %v3056, %v3056
      %v3061 = vpack.c.b16 %v3057, %v3057
      %v3062 = vpack.c.b16 %v3058, %v3058
      %v3063 = vpack.c.b16 %v3059, %v3059
      %vm3064 = vsmask.f32 5376
      %v3066 = vshrl.u32 %v2518, 16
      %v3068 = vrot.slane %v3066, 2
      %v3069 = vshll.u32 %v2518, 16
      %v3071 = vrot.slane %v3069, 3
      %v3072 = vor.u32 %v3068, %v3071
      %v3073 = vrot.slane %v384, 2
      %v3074 = vrot.slane %v344, 3
      %v3075 = vor.u32 %v3073, %v3074
      %v3076 = vsel %vm3064, %v3072, %v3075
      %v3078 = vshrl.u32 %v2519, 16
      %v3080 = vrot.slane %v3078, 2
      %v3081 = vshll.u32 %v2519, 16
      %v3083 = vrot.slane %v3081, 3
      %v3084 = vor.u32 %v3080, %v3083
      %v3085 = vrot.slane %v392, 2
      %v3086 = vrot.slane %v356, 3
      %v3087 = vor.u32 %v3085, %v3086
      %v3088 = vsel %vm3064, %v3084, %v3087
      %v3090 = vshrl.u32 %v2520, 16
      %v3092 = vrot.slane %v3090, 2
      %v3093 = vshll.u32 %v2520, 16
      %v3095 = vrot.slane %v3093, 3
      %v3096 = vor.u32 %v3092, %v3095
      %v3097 = vrot.slane %v400, 2
      %v3098 = vrot.slane %v368, 3
      %v3099 = vor.u32 %v3097, %v3098
      %v3100 = vsel %vm3064, %v3096, %v3099
      %v3102 = vshrl.u32 %v2521, 16
      %v3104 = vrot.slane %v3102, 2
      %v3105 = vshll.u32 %v2521, 16
      %v3107 = vrot.slane %v3105, 3
      %v3108 = vor.u32 %v3104, %v3107
      %v3109 = vrot.slane %v408, 2
      %v3110 = vrot.slane %v380, 3
      %v3111 = vor.u32 %v3109, %v3110
      %v3112 = vsel %vm3064, %v3108, %v3111
      %v3114 = vshrl.u32 %v3060, 16
      %v3116 = vrot.slane %v3114, 2
      %v3117 = vshll.u32 %v3060, 16
      %v3119 = vrot.slane %v3117, 3
      %v3120 = vor.u32 %v3116, %v3119
      %v3121 = vsel %vm3064, %v3075, %v3120
      %v3123 = vshrl.u32 %v3061, 16
      %v3125 = vrot.slane %v3123, 2
      %v3126 = vshll.u32 %v3061, 16
      %v3128 = vrot.slane %v3126, 3
      %v3129 = vor.u32 %v3125, %v3128
      %v3130 = vsel %vm3064, %v3087, %v3129
      %v3132 = vshrl.u32 %v3062, 16
      %v3134 = vrot.slane %v3132, 2
      %v3135 = vshll.u32 %v3062, 16
      %v3137 = vrot.slane %v3135, 3
      %v3138 = vor.u32 %v3134, %v3137
      %v3139 = vsel %vm3064, %v3099, %v3138
      %v3141 = vshrl.u32 %v3063, 16
      %v3143 = vrot.slane %v3141, 2
      %v3144 = vshll.u32 %v3063, 16
      %v3146 = vrot.slane %v3144, 3
      %v3147 = vor.u32 %v3143, %v3146
      %v3148 = vsel %vm3064, %v3111, %v3147
      %v3210 = vunpack.c.l.b16 %v2999
      %v3211 = vunpack.c.h.b16 %v2999
      %v3212 = vunpack.c.l.b16 %v3000
      %v3213 = vunpack.c.h.b16 %v3000
      %v3214 = vunpack.c.l.b16 %v3001
      %v3215 = vunpack.c.h.b16 %v3001
      %v3216 = vunpack.c.l.b16 %v3002
      %v3217 = vunpack.c.h.b16 %v3002
      %v3218 = vunpack.c.l.b16 %v3003
      %v3219 = vunpack.c.h.b16 %v3003
      %v3220 = vunpack.c.l.b16 %v3004
      %v3221 = vunpack.c.h.b16 %v3004
      %v3222 = vunpack.c.l.b16 %v3005
      %v3223 = vunpack.c.h.b16 %v3005
      %v3224 = vunpack.c.l.b16 %v3006
      %v3225 = vunpack.c.h.b16 %v3006
      %v3226 = vunpack.c.l.b16 %v3007
      %v3227 = vunpack.c.h.b16 %v3007
      %v3228 = vunpack.c.l.b16 %v3008
      %v3229 = vunpack.c.h.b16 %v3008
      %v3230 = vunpack.c.l.b16 %v3009
      %v3231 = vunpack.c.h.b16 %v3009
      %v3232 = vunpack.c.l.b16 %v3010
      %v3233 = vunpack.c.h.b16 %v3010
      %v3234 = vunpack.c.l.b16 %v3011
      %v3235 = vunpack.c.h.b16 %v3011
      %v3236 = vunpack.c.l.b16 %v3012
      %v3237 = vunpack.c.h.b16 %v3012
      %v3238 = vunpack.c.l.b16 %v3013
      %v3239 = vunpack.c.h.b16 %v3013
      %v3240 = vunpack.c.l.b16 %v3014
      %v3241 = vunpack.c.h.b16 %v3014
      %v3242 = vunpack.c.l.b16 %v3015
      %v3243 = vunpack.c.h.b16 %v3015
      %v3244 = vunpack.c.l.b16 %v3016
      %v3245 = vunpack.c.h.b16 %v3016
      %v3246 = vunpack.c.l.b16 %v3017
      %v3247 = vunpack.c.h.b16 %v3017
      %v3248 = vunpack.c.l.b16 %v3018
      %v3249 = vunpack.c.h.b16 %v3018
      %v3250 = vunpack.c.l.b16 %v3019
      %v3251 = vunpack.c.h.b16 %v3019
      %v3252 = vunpack.c.l.b16 %v3020
      %v3253 = vunpack.c.h.b16 %v3020
      %v3254 = vunpack.c.l.b16 %v3021
      %v3255 = vunpack.c.h.b16 %v3021
      %v3256 = vunpack.c.l.b16 %v3022
      %v3257 = vunpack.c.h.b16 %v3022
      %v3258 = vunpack.c.l.b16 %v3023
      %v3259 = vunpack.c.h.b16 %v3023
      %v3260 = vunpack.c.l.b16 %v3024
      %v3261 = vunpack.c.h.b16 %v3024
      %v3262 = vunpack.c.l.b16 %v3025
      %v3263 = vunpack.c.h.b16 %v3025
      %v3264 = vunpack.c.l.b16 %v3026
      %v3265 = vunpack.c.h.b16 %v3026
      %v3266 = vunpack.c.l.b16 %v3027
      %v3267 = vunpack.c.h.b16 %v3027
      %v3268 = vunpack.c.l.b16 %v3028
      %v3269 = vunpack.c.h.b16 %v3028
      %v3270 = vunpack.c.l.b16 %v3029
      %v3271 = vunpack.c.h.b16 %v3029
      %v3272 = vunpack.c.l.b16 %v3030
      %v3273 = vunpack.c.h.b16 %v3030
      %v3274 = vunpack.c.l.b16 %v3031
      %v3275 = vunpack.c.h.b16 %v3031
      %v3276 = vunpack.c.l.b16 %v3032
      %v3277 = vunpack.c.h.b16 %v3032
      %v3278 = vunpack.c.l.b16 %v3033
      %v3279 = vunpack.c.h.b16 %v3033
      %v3280 = vunpack.c.l.b16 %v3034
      %v3281 = vunpack.c.h.b16 %v3034
      %v3282 = vunpack.c.l.b16 %v3035
      %v3283 = vunpack.c.h.b16 %v3035
      %v3284 = vunpack.c.l.b16 %v3036
      %v3285 = vunpack.c.h.b16 %v3036
      %v3286 = vunpack.c.l.b16 %v3037
      %v3287 = vunpack.c.h.b16 %v3037
      %v3288 = vunpack.c.l.b16 %v3038
      %v3289 = vunpack.c.h.b16 %v3038
      %v3290 = vunpack.c.l.b16 %v3039
      %v3291 = vunpack.c.h.b16 %v3039
      %v3292 = vunpack.c.l.b16 %v3040
      %v3293 = vunpack.c.h.b16 %v3040
      %v3294 = vunpack.c.l.b16 %v3041
      %v3295 = vunpack.c.h.b16 %v3041
      %v3296 = vunpack.c.l.b16 %v3042
      %v3297 = vunpack.c.h.b16 %v3042
      %v3298 = vunpack.c.l.b16 %v3043
      %v3299 = vunpack.c.h.b16 %v3043
      %v3300 = vunpack.c.l.b16 %v3044
      %v3301 = vunpack.c.h.b16 %v3044
      %v3302 = vunpack.c.l.b16 %v3045
      %v3303 = vunpack.c.h.b16 %v3045
      %v3304 = vunpack.c.l.b16 %v3046
      %v3305 = vunpack.c.h.b16 %v3046
      %v3306 = vunpack.c.l.b16 %v3047
      %v3307 = vunpack.c.h.b16 %v3047
      %v3308 = vunpack.c.l.b16 %v3048
      %v3309 = vunpack.c.h.b16 %v3048
      %v3310 = vunpack.c.l.b16 %v3049
      %v3311 = vunpack.c.h.b16 %v3049
      %v3312 = vunpack.c.l.b16 %v3050
      %v3313 = vunpack.c.h.b16 %v3050
      %v3314 = vunpack.c.l.b16 %v3051
      %v3315 = vunpack.c.h.b16 %v3051
      %v3316 = vunpack.c.l.b16 %v3052
      %v3317 = vunpack.c.h.b16 %v3052
      %v3318 = vunpack.c.l.b16 %v3053
      %v3319 = vunpack.c.h.b16 %v3053
      %v3320 = vpack.c.b16 %v3212, %v3210
      %v3321 = vpack.c.b16 %v3213, %v3211
      %v3322 = vpack.c.b16 %v3216, %v3214
      %v3323 = vpack.c.b16 %v3217, %v3215
      %v3324 = vpack.c.b16 %v3220, %v3218
      %v3325 = vpack.c.b16 %v3221, %v3219
      %v3326 = vpack.c.b16 %v3224, %v3222
      %v3327 = vpack.c.b16 %v3225, %v3223
      %v3328 = vpack.c.b16 %v3228, %v3226
      %v3329 = vpack.c.b16 %v3229, %v3227
      %v3330 = vpack.c.b16 %v3232, %v3230
      %v3331 = vpack.c.b16 %v3233, %v3231
      %v3332 = vpack.c.b16 %v3236, %v3234
      %v3333 = vpack.c.b16 %v3237, %v3235
      %v3334 = vpack.c.b16 %v3240, %v3238
      %v3335 = vpack.c.b16 %v3241, %v3239
      %v3336 = vpack.c.b16 %v3244, %v3242
      %v3337 = vpack.c.b16 %v3245, %v3243
      %v3338 = vpack.c.b16 %v3248, %v3246
      %v3339 = vpack.c.b16 %v3249, %v3247
      %v3340 = vpack.c.b16 %v3252, %v3250
      %v3341 = vpack.c.b16 %v3253, %v3251
      %v3342 = vpack.c.b16 %v3256, %v3254
      %v3343 = vpack.c.b16 %v3257, %v3255
      %v3344 = vpack.c.b16 %v3260, %v3258
      %v3345 = vpack.c.b16 %v3261, %v3259
      %v3346 = vpack.c.b16 %v3264, %v3262
      %v3347 = vpack.c.b16 %v3265, %v3263
      %v3348 = vpack.c.b16 %v3268, %v3266
      %v3349 = vpack.c.b16 %v3269, %v3267
      %v3350 = vpack.c.b16 %v3272, %v3270
      %v3351 = vpack.c.b16 %v3273, %v3271
      %v3352 = vpack.c.b16 %v3276, %v3274
      %v3353 = vpack.c.b16 %v3277, %v3275
      %v3354 = vpack.c.b16 %v3280, %v3278
      %v3355 = vpack.c.b16 %v3281, %v3279
      %v3356 = vpack.c.b16 %v3284, %v3282
      %v3357 = vpack.c.b16 %v3285, %v3283
      %v3358 = vpack.c.b16 %v3288, %v3286
      %v3359 = vpack.c.b16 %v3289, %v3287
      %v3360 = vpack.c.b16 %v3292, %v3290
      %v3361 = vpack.c.b16 %v3293, %v3291
      %v3362 = vpack.c.b16 %v3296, %v3294
      %v3363 = vpack.c.b16 %v3297, %v3295
      %v3364 = vpack.c.b16 %v3300, %v3298
      %v3365 = vpack.c.b16 %v3301, %v3299
      %v3366 = vpack.c.b16 %v3304, %v3302
      %v3367 = vpack.c.b16 %v3305, %v3303
      %v3368 = vpack.c.b16 %v3308, %v3306
      %v3369 = vpack.c.b16 %v3309, %v3307
      %v3370 = vpack.c.b16 %v3312, %v3310
      %v3371 = vpack.c.b16 %v3313, %v3311
      %v3372 = vpack.c.b16 %v3316, %v3314
      %v3373 = vpack.c.b16 %v3317, %v3315
      %v3374 = vpack.c.b16 %v3318, %v3318
      %v3375 = vpack.c.b16 %v3319, %v3319
      %v3431 = vsel %vm697, %v3112, 0
      %v3434 = vsel %vm697, %v3148, 0
      %v3437 = vsel %vm704, %v3374, 0
      %v3440 = vsel %vm704, %v3375, 0
      %3442 = vmatpush.bf16.msra.mxu0 %v3334
      %3443 = vmatpush.bf16.msra.mxu0 %v3332
      %3444 = vmatpush.bf16.msra.mxu0 %v3330
      %3445 = vmatpush.bf16.msra.mxu0 %v3328
      %3446 = vmatpush.bf16.msra.mxu0 %v3326
      %3447 = vmatpush.bf16.msra.mxu0 %v3324
      %3448 = vmatpush.bf16.msra.mxu0 %v3322
      %3449 = vmatpush.bf16.msra.mxu0 %v3320
      %3450 = vmatmul.bf16.gmra.mxu0 %v3076
      %v3451 = vpop.f32.mrf.mxu0
      %v3452 = vadd.f32 0.0, %v3451
      %v3453 = vpop.f32.mrf.mxu0
      %v3454 = vadd.f32 0.0, %v3453
      %3455 = vmatmul.bf16.gmra.mxu0 %v3121
      %v3456 = vpop.f32.mrf.mxu0
      %v3457 = vadd.f32 0.0, %v3456
      %v3458 = vpop.f32.mrf.mxu0
      %v3459 = vadd.f32 0.0, %v3458
      %3460 = vdwg.mxu0
      %3461 = vmatpush.bf16.msra.mxu0 %v3350
      %3462 = vmatpush.bf16.msra.mxu0 %v3348
      %3463 = vmatpush.bf16.msra.mxu0 %v3346
      %3464 = vmatpush.bf16.msra.mxu0 %v3344
      %3465 = vmatpush.bf16.msra.mxu0 %v3342
      %3466 = vmatpush.bf16.msra.mxu0 %v3340
      %3467 = vmatpush.bf16.msra.mxu0 %v3338
      %3468 = vmatpush.bf16.msra.mxu0 %v3336
      %3469 = vmatmul.bf16.gmra.mxu0 %v3088
      %v3470 = vpop.f32.mrf.mxu0
      %v3471 = vadd.f32 %v3452, %v3470
      %v3472 = vpop.f32.mrf.mxu0
      %v3473 = vadd.f32 %v3454, %v3472
      %3474 = vmatmul.bf16.gmra.mxu0 %v3130
      %v3475 = vpop.f32.mrf.mxu0
      %v3476 = vadd.f32 %v3457, %v3475
      %v3477 = vpop.f32.mrf.mxu0
      %v3478 = vadd.f32 %v3459, %v3477
      %3479 = vdwg.mxu0
      %3480 = vmatpush.bf16.msra.mxu0 %v3366
      %3481 = vmatpush.bf16.msra.mxu0 %v3364
      %3482 = vmatpush.bf16.msra.mxu0 %v3362
      %3483 = vmatpush.bf16.msra.mxu0 %v3360
      %3484 = vmatpush.bf16.msra.mxu0 %v3358
      %3485 = vmatpush.bf16.msra.mxu0 %v3356
      %3486 = vmatpush.bf16.msra.mxu0 %v3354
      %3487 = vmatpush.bf16.msra.mxu0 %v3352
      %3488 = vmatmul.bf16.gmra.mxu0 %v3100
      %v3489 = vpop.f32.mrf.mxu0
      %v3490 = vadd.f32 %v3471, %v3489
      %v3491 = vpop.f32.mrf.mxu0
      %v3492 = vadd.f32 %v3473, %v3491
      %3493 = vmatmul.bf16.gmra.mxu0 %v3139
      %v3494 = vpop.f32.mrf.mxu0
      %v3495 = vadd.f32 %v3476, %v3494
      %v3496 = vpop.f32.mrf.mxu0
      %v3497 = vadd.f32 %v3478, %v3496
      %3498 = vdwg.mxu0
      %3499 = vmatpush.bf16.msra.mxu0 0
      %3500 = vmatpush.bf16.msra.mxu0 0
      %3501 = vmatpush.bf16.msra.mxu0 0
      %3502 = vmatpush.bf16.msra.mxu0 0
      %3503 = vmatpush.bf16.msra.mxu0 %v3437
      %3504 = vmatpush.bf16.msra.mxu0 %v3372
      %3505 = vmatpush.bf16.msra.mxu0 %v3370
      %3506 = vmatpush.bf16.msra.mxu0 %v3368
      %3507 = vmatmul.bf16.gmra.mxu0 %v3431
      %v3508 = vpop.f32.mrf.mxu0
      %v3509 = vadd.f32 %v3490, %v3508
      %v3510 = vpop.f32.mrf.mxu0
      %v3511 = vadd.f32 %v3492, %v3510
      %3512 = vmatmul.bf16.gmra.mxu0 %v3434
      %v3513 = vpop.f32.mrf.mxu0
      %v3514 = vadd.f32 %v3495, %v3513
      %v3515 = vpop.f32.mrf.mxu0
      %v3516 = vadd.f32 %v3497, %v3515
      %3517 = vdwg.mxu0
      %3518 = vmatpush.bf16.msra.mxu0 %v3335
      %3519 = vmatpush.bf16.msra.mxu0 %v3333
      %3520 = vmatpush.bf16.msra.mxu0 %v3331
      %3521 = vmatpush.bf16.msra.mxu0 %v3329
      %3522 = vmatpush.bf16.msra.mxu0 %v3327
      %3523 = vmatpush.bf16.msra.mxu0 %v3325
      %3524 = vmatpush.bf16.msra.mxu0 %v3323
      %3525 = vmatpush.bf16.msra.mxu0 %v3321
      %3526 = vmatmul.bf16.gmra.mxu0 %v3076
      %v3527 = vpop.f32.mrf.mxu0
      %v3528 = vadd.f32 0.0, %v3527
      %v3529 = vpop.f32.mrf.mxu0
      %v3530 = vadd.f32 0.0, %v3529
      %3531 = vmatmul.bf16.gmra.mxu0 %v3121
      %v3532 = vpop.f32.mrf.mxu0
      %v3533 = vadd.f32 0.0, %v3532
      %v3534 = vpop.f32.mrf.mxu0
      %v3535 = vadd.f32 0.0, %v3534
      %3536 = vdwg.mxu0
      %3537 = vmatpush.bf16.msra.mxu0 %v3351
      %3538 = vmatpush.bf16.msra.mxu0 %v3349
      %3539 = vmatpush.bf16.msra.mxu0 %v3347
      %3540 = vmatpush.bf16.msra.mxu0 %v3345
      %3541 = vmatpush.bf16.msra.mxu0 %v3343
      %3542 = vmatpush.bf16.msra.mxu0 %v3341
      %3543 = vmatpush.bf16.msra.mxu0 %v3339
      %3544 = vmatpush.bf16.msra.mxu0 %v3337
      %3545 = vmatmul.bf16.gmra.mxu0 %v3088
      %v3546 = vpop.f32.mrf.mxu0
      %v3547 = vadd.f32 %v3528, %v3546
      %v3548 = vpop.f32.mrf.mxu0
      %v3549 = vadd.f32 %v3530, %v3548
      %3550 = vmatmul.bf16.gmra.mxu0 %v3130
      %v3551 = vpop.f32.mrf.mxu0
      %v3552 = vadd.f32 %v3533, %v3551
      %v3553 = vpop.f32.mrf.mxu0
      %v3554 = vadd.f32 %v3535, %v3553
      %3555 = vdwg.mxu0
      %3556 = vmatpush.bf16.msra.mxu0 %v3367
      %3557 = vmatpush.bf16.msra.mxu0 %v3365
      %3558 = vmatpush.bf16.msra.mxu0 %v3363
      %3559 = vmatpush.bf16.msra.mxu0 %v3361
      %3560 = vmatpush.bf16.msra.mxu0 %v3359
      %3561 = vmatpush.bf16.msra.mxu0 %v3357
      %3562 = vmatpush.bf16.msra.mxu0 %v3355
      %3563 = vmatpush.bf16.msra.mxu0 %v3353
      %3564 = vmatmul.bf16.gmra.mxu0 %v3100
      %v3565 = vpop.f32.mrf.mxu0
      %v3566 = vadd.f32 %v3547, %v3565
      %v3567 = vpop.f32.mrf.mxu0
      %v3568 = vadd.f32 %v3549, %v3567
      %3569 = vmatmul.bf16.gmra.mxu0 %v3139
      %v3570 = vpop.f32.mrf.mxu0
      %v3571 = vadd.f32 %v3552, %v3570
      %v3572 = vpop.f32.mrf.mxu0
      %v3573 = vadd.f32 %v3554, %v3572
      %3574 = vdwg.mxu0
      %3575 = vmatpush.bf16.msra.mxu0 0
      %3576 = vmatpush.bf16.msra.mxu0 0
      %3577 = vmatpush.bf16.msra.mxu0 0
      %3578 = vmatpush.bf16.msra.mxu0 0
      %3579 = vmatpush.bf16.msra.mxu0 %v3440
      %3580 = vmatpush.bf16.msra.mxu0 %v3373
      %3581 = vmatpush.bf16.msra.mxu0 %v3371
      %3582 = vmatpush.bf16.msra.mxu0 %v3369
      %3583 = vmatmul.bf16.gmra.mxu0 %v3431
      %v3584 = vpop.f32.mrf.mxu0
      %v3585 = vadd.f32 %v3566, %v3584
      %v3586 = vpop.f32.mrf.mxu0
      %v3587 = vadd.f32 %v3568, %v3586
      %3588 = vmatmul.bf16.gmra.mxu0 %v3434
      %v3589 = vpop.f32.mrf.mxu0
      %v3590 = vadd.f32 %v3571, %v3589
      %v3591 = vpop.f32.mrf.mxu0
      %v3592 = vadd.f32 %v3573, %v3591
      %3593 = vdwg.mxu0
      %v3594 = vadd.f32 %v2988, %v3509
      %v3595 = vadd.f32 %v2989, %v3585
      %v3596 = vadd.f32 %v2990, %v3511
      %v3597 = vadd.f32 %v2991, %v3587
      %v3598 = vadd.f32 %v2992, %v3514
      %v3599 = vadd.f32 %v2993, %v3590
      %v3600 = vadd.f32 %v2994, %v3516
      %v3601 = vadd.f32 %v2995, %v3592
      %v3602 = vld [vmem:[%s165] sm:$0x88]
      %v3603 = vld [vmem:[%s165 + $0x8] sm:$0x88]
      %s3604 = scalar_lea.vmem %s1, 2640
      %v3605 = vld [vmem:[%s3604] sm:$0xff]
      %v3606 = vld [vmem:[%s3604 + $0x8] sm:$0xff]
      %v3607 = vld [vmem:[%s3604 + $0x10] sm:$0xff]
      %v3608 = vld [vmem:[%s3604 + $0x18] sm:$0xff]
      %v3609 = vld [vmem:[%s3604 + $0x20] sm:$0xff]
      %v3610 = vld [vmem:[%s3604 + $0x28] sm:$0xff]
      %v3611 = vld [vmem:[%s3604 + $0x30] sm:$0xff]
      %v3612 = vld [vmem:[%s3604 + $0x38] sm:$0xff]
      %v3613 = vld [vmem:[%s3604 + $0x40] sm:$0xff]
      %v3614 = vld [vmem:[%s3604 + $0x48] sm:$0xff]
      %v3615 = vld [vmem:[%s3604 + $0x50] sm:$0xff]
      %v3616 = vld [vmem:[%s3604 + $0x58] sm:$0xff]
      %v3617 = vld [vmem:[%s3604 + $0x60] sm:$0xff]
      %v3618 = vld [vmem:[%s3604 + $0x68] sm:$0xff]
      %v3619 = vld [vmem:[%s3604 + $0x70] sm:$0xff]
      %v3620 = vld [vmem:[%s3604 + $0x78] sm:$0xff]
      %v3621 = vld [vmem:[%s3604 + $0x80] sm:$0xff]
      %v3622 = vld [vmem:[%s3604 + $0x88] sm:$0xff]
      %v3623 = vld [vmem:[%s3604 + $0x90] sm:$0xff]
      %v3624 = vld [vmem:[%s3604 + $0x98] sm:$0xff]
      %v3625 = vld [vmem:[%s3604 + $0xa0] sm:$0xff]
      %v3626 = vld [vmem:[%s3604 + $0xa8] sm:$0xff]
      %v3627 = vld [vmem:[%s3604 + $0xb0] sm:$0xff]
      %v3628 = vld [vmem:[%s3604 + $0xb8] sm:$0xff]
      %v3629 = vld [vmem:[%s3604 + $0xc0] sm:$0xff]
      %v3630 = vld [vmem:[%s3604 + $0xc8] sm:$0xff]
      %v3631 = vld [vmem:[%s3604 + $0xd0] sm:$0xff]
      %v3632 = vld [vmem:[%s3604 + $0xd8] sm:$0xff]
      %v3633 = vld [vmem:[%s3604 + $0xe0] sm:$0xff]
      %v3634 = vld [vmem:[%s3604 + $0xe8] sm:$0xff]
      %v3635 = vld [vmem:[%s3604 + $0xf0] sm:$0xff]
      %v3636 = vld [vmem:[%s3604 + $0xf8] sm:$0xff]
      %v3637 = vld [vmem:[%s3604 + $0x100] sm:$0xff]
      %v3638 = vld [vmem:[%s3604 + $0x108] sm:$0xff]
      %v3639 = vld [vmem:[%s3604 + $0x110] sm:$0xff]
      %v3640 = vld [vmem:[%s3604 + $0x118] sm:$0xff]
      %v3641 = vld [vmem:[%s3604 + $0x120] sm:$0xff]
      %v3642 = vld [vmem:[%s3604 + $0x128] sm:$0xff]
      %v3643 = vld [vmem:[%s3604 + $0x130] sm:$0xff]
      %v3644 = vld [vmem:[%s3604 + $0x138] sm:$0xff]
      %v3645 = vld [vmem:[%s3604 + $0x140] sm:$0xff]
      %v3646 = vld [vmem:[%s3604 + $0x148] sm:$0xff]
      %v3647 = vld [vmem:[%s3604 + $0x150] sm:$0xff]
      %v3648 = vld [vmem:[%s3604 + $0x158] sm:$0xff]
      %v3649 = vld [vmem:[%s3604 + $0x160] sm:$0xff]
      %v3650 = vld [vmem:[%s3604 + $0x168] sm:$0xff]
      %v3651 = vld [vmem:[%s3604 + $0x170] sm:$0xff]
      %v3652 = vld [vmem:[%s3604 + $0x178] sm:$0xff]
      %v3653 = vld [vmem:[%s3604 + $0x180] sm:$0xff]
      %v3654 = vld [vmem:[%s3604 + $0x188] sm:$0xff]
      %v3655 = vld [vmem:[%s3604 + $0x190] sm:$0xff]
      %v3656 = vld [vmem:[%s3604 + $0x198] sm:$0xff]
      %v3657 = vld [vmem:[%s3604 + $0x1a0] sm:$0xff]
      %v3658 = vld [vmem:[%s3604 + $0x1a8] sm:$0xff]
      %v3659 = vld [vmem:[%s3604 + $0x1b0] sm:$0xff]
      %v3662 = vunpack.c.l.b16 %v3602
      %v3663 = vunpack.c.h.b16 %v3602
      %v3664 = vunpack.c.l.b16 %v3603
      %v3665 = vunpack.c.h.b16 %v3603
      %v3666 = vpack.c.b16 %v307, %v3662
      %v3667 = vpack.c.b16 %v308, %v3663
      %v3668 = vpack.c.b16 %v309, %v3664
      %v3669 = vpack.c.b16 %v310, %v3665
      %vm3670 = vcmask 1044480
      %v3671 = vrot.slane %v3666, 3
      %v3672 = vrot.slane %v327, 3
      %v3673 = vsel %vm3670, %v3671, %v3672
      %v3674 = vrot.slane %v3667, 3
      %v3675 = vrot.slane %v328, 3
      %v3676 = vsel %vm3670, %v3674, %v3675
      %v3677 = vrot.slane %v3668, 3
      %v3678 = vrot.slane %v329, 3
      %v3679 = vsel %vm3670, %v3677, %v3678
      %v3680 = vrot.slane %v3669, 3
      %v3681 = vrot.slane %v330, 3
      %v3682 = vsel %vm3670, %v3680, %v3681
      %v3683 = vrot.slane %v3060, 3
      %v3684 = vsel %vm3670, %v3672, %v3683
      %v3685 = vrot.slane %v3061, 3
      %v3686 = vsel %vm3670, %v3675, %v3685
      %v3687 = vrot.slane %v3062, 3
      %v3688 = vsel %vm3670, %v3678, %v3687
      %v3689 = vrot.slane %v3063, 3
      %v3690 = vsel %vm3670, %v3681, %v3689
      %v3752 = vunpack.c.l.b16 %v3605
      %v3753 = vunpack.c.h.b16 %v3605
      %v3754 = vunpack.c.l.b16 %v3606
      %v3755 = vunpack.c.h.b16 %v3606
      %v3756 = vunpack.c.l.b16 %v3607
      %v3757 = vunpack.c.h.b16 %v3607
      %v3758 = vunpack.c.l.b16 %v3608
      %v3759 = vunpack.c.h.b16 %v3608
      %v3760 = vunpack.c.l.b16 %v3609
      %v3761 = vunpack.c.h.b16 %v3609
      %v3762 = vunpack.c.l.b16 %v3610
      %v3763 = vunpack.c.h.b16 %v3610
      %v3764 = vunpack.c.l.b16 %v3611
      %v3765 = vunpack.c.h.b16 %v3611
      %v3766 = vunpack.c.l.b16 %v3612
      %v3767 = vunpack.c.h.b16 %v3612
      %v3768 = vunpack.c.l.b16 %v3613
      %v3769 = vunpack.c.h.b16 %v3613
      %v3770 = vunpack.c.l.b16 %v3614
      %v3771 = vunpack.c.h.b16 %v3614
      %v3772 = vunpack.c.l.b16 %v3615
      %v3773 = vunpack.c.h.b16 %v3615
      %v3774 = vunpack.c.l.b16 %v3616
      %v3775 = vunpack.c.h.b16 %v3616
      %v3776 = vunpack.c.l.b16 %v3617
      %v3777 = vunpack.c.h.b16 %v3617
      %v3778 = vunpack.c.l.b16 %v3618
      %v3779 = vunpack.c.h.b16 %v3618
      %v3780 = vunpack.c.l.b16 %v3619
      %v3781 = vunpack.c.h.b16 %v3619
      %v3782 = vunpack.c.l.b16 %v3620
      %v3783 = vunpack.c.h.b16 %v3620
      %v3784 = vunpack.c.l.b16 %v3621
      %v3785 = vunpack.c.h.b16 %v3621
      %v3786 = vunpack.c.l.b16 %v3622
      %v3787 = vunpack.c.h.b16 %v3622
      %v3788 = vunpack.c.l.b16 %v3623
      %v3789 = vunpack.c.h.b16 %v3623
      %v3790 = vunpack.c.l.b16 %v3624
      %v3791 = vunpack.c.h.b16 %v3624
      %v3792 = vunpack.c.l.b16 %v3625
      %v3793 = vunpack.c.h.b16 %v3625
      %v3794 = vunpack.c.l.b16 %v3626
      %v3795 = vunpack.c.h.b16 %v3626
      %v3796 = vunpack.c.l.b16 %v3627
      %v3797 = vunpack.c.h.b16 %v3627
      %v3798 = vunpack.c.l.b16 %v3628
      %v3799 = vunpack.c.h.b16 %v3628
      %v3800 = vunpack.c.l.b16 %v3629
      %v3801 = vunpack.c.h.b16 %v3629
      %v3802 = vunpack.c.l.b16 %v3630
      %v3803 = vunpack.c.h.b16 %v3630
      %v3804 = vunpack.c.l.b16 %v3631
      %v3805 = vunpack.c.h.b16 %v3631
      %v3806 = vunpack.c.l.b16 %v3632
      %v3807 = vunpack.c.h.b16 %v3632
      %v3808 = vunpack.c.l.b16 %v3633
      %v3809 = vunpack.c.h.b16 %v3633
      %v3810 = vunpack.c.l.b16 %v3634
      %v3811 = vunpack.c.h.b16 %v3634
      %v3812 = vunpack.c.l.b16 %v3635
      %v3813 = vunpack.c.h.b16 %v3635
      %v3814 = vunpack.c.l.b16 %v3636
      %v3815 = vunpack.c.h.b16 %v3636
      %v3816 = vunpack.c.l.b16 %v3637
      %v3817 = vunpack.c.h.b16 %v3637
      %v3818 = vunpack.c.l.b16 %v3638
      %v3819 = vunpack.c.h.b16 %v3638
      %v3820 = vunpack.c.l.b16 %v3639
      %v3821 = vunpack.c.h.b16 %v3639
      %v3822 = vunpack.c.l.b16 %v3640
      %v3823 = vunpack.c.h.b16 %v3640
      %v3824 = vunpack.c.l.b16 %v3641
      %v3825 = vunpack.c.h.b16 %v3641
      %v3826 = vunpack.c.l.b16 %v3642
      %v3827 = vunpack.c.h.b16 %v3642
      %v3828 = vunpack.c.l.b16 %v3643
      %v3829 = vunpack.c.h.b16 %v3643
      %v3830 = vunpack.c.l.b16 %v3644
      %v3831 = vunpack.c.h.b16 %v3644
      %v3832 = vunpack.c.l.b16 %v3645
      %v3833 = vunpack.c.h.b16 %v3645
      %v3834 = vunpack.c.l.b16 %v3646
      %v3835 = vunpack.c.h.b16 %v3646
      %v3836 = vunpack.c.l.b16 %v3647
      %v3837 = vunpack.c.h.b16 %v3647
      %v3838 = vunpack.c.l.b16 %v3648
      %v3839 = vunpack.c.h.b16 %v3648
      %v3840 = vunpack.c.l.b16 %v3649
      %v3841 = vunpack.c.h.b16 %v3649
      %v3842 = vunpack.c.l.b16 %v3650
      %v3843 = vunpack.c.h.b16 %v3650
      %v3844 = vunpack.c.l.b16 %v3651
      %v3845 = vunpack.c.h.b16 %v3651
      %v3846 = vunpack.c.l.b16 %v3652
      %v3847 = vunpack.c.h.b16 %v3652
      %v3848 = vunpack.c.l.b16 %v3653
      %v3849 = vunpack.c.h.b16 %v3653
      %v3850 = vunpack.c.l.b16 %v3654
      %v3851 = vunpack.c.h.b16 %v3654
      %v3852 = vunpack.c.l.b16 %v3655
      %v3853 = vunpack.c.h.b16 %v3655
      %v3854 = vunpack.c.l.b16 %v3656
      %v3855 = vunpack.c.h.b16 %v3656
      %v3856 = vunpack.c.l.b16 %v3657
      %v3857 = vunpack.c.h.b16 %v3657
      %v3858 = vunpack.c.l.b16 %v3658
      %v3859 = vunpack.c.h.b16 %v3658
      %v3860 = vunpack.c.l.b16 %v3659
      %v3861 = vunpack.c.h.b16 %v3659
      %v3862 = vpack.c.b16 %v3754, %v3752
      %v3863 = vpack.c.b16 %v3755, %v3753
      %v3864 = vpack.c.b16 %v3758, %v3756
      %v3865 = vpack.c.b16 %v3759, %v3757
      %v3866 = vpack.c.b16 %v3762, %v3760
      %v3867 = vpack.c.b16 %v3763, %v3761
      %v3868 = vpack.c.b16 %v3766, %v3764
      %v3869 = vpack.c.b16 %v3767, %v3765
      %v3870 = vpack.c.b16 %v3770, %v3768
      %v3871 = vpack.c.b16 %v3771, %v3769
      %v3872 = vpack.c.b16 %v3774, %v3772
      %v3873 = vpack.c.b16 %v3775, %v3773
      %v3874 = vpack.c.b16 %v3778, %v3776
      %v3875 = vpack.c.b16 %v3779, %v3777
      %v3876 = vpack.c.b16 %v3782, %v3780
      %v3877 = vpack.c.b16 %v3783, %v3781
      %v3878 = vpack.c.b16 %v3786, %v3784
      %v3879 = vpack.c.b16 %v3787, %v3785
      %v3880 = vpack.c.b16 %v3790, %v3788
      %v3881 = vpack.c.b16 %v3791, %v3789
      %v3882 = vpack.c.b16 %v3794, %v3792
      %v3883 = vpack.c.b16 %v3795, %v3793
      %v3884 = vpack.c.b16 %v3798, %v3796
      %v3885 = vpack.c.b16 %v3799, %v3797
      %v3886 = vpack.c.b16 %v3802, %v3800
      %v3887 = vpack.c.b16 %v3803, %v3801
      %v3888 = vpack.c.b16 %v3806, %v3804
      %v3889 = vpack.c.b16 %v3807, %v3805
      %v3890 = vpack.c.b16 %v3810, %v3808
      %v3891 = vpack.c.b16 %v3811, %v3809
      %v3892 = vpack.c.b16 %v3814, %v3812
      %v3893 = vpack.c.b16 %v3815, %v3813
      %v3894 = vpack.c.b16 %v3818, %v3816
      %v3895 = vpack.c.b16 %v3819, %v3817
      %v3896 = vpack.c.b16 %v3822, %v3820
      %v3897 = vpack.c.b16 %v3823, %v3821
      %v3898 = vpack.c.b16 %v3826, %v3824
      %v3899 = vpack.c.b16 %v3827, %v3825
      %v3900 = vpack.c.b16 %v3830, %v3828
      %v3901 = vpack.c.b16 %v3831, %v3829
      %v3902 = vpack.c.b16 %v3834, %v3832
      %v3903 = vpack.c.b16 %v3835, %v3833
      %v3904 = vpack.c.b16 %v3838, %v3836
      %v3905 = vpack.c.b16 %v3839, %v3837
      %v3906 = vpack.c.b16 %v3842, %v3840
      %v3907 = vpack.c.b16 %v3843, %v3841
      %v3908 = vpack.c.b16 %v3846, %v3844
      %v3909 = vpack.c.b16 %v3847, %v3845
      %v3910 = vpack.c.b16 %v3850, %v3848
      %v3911 = vpack.c.b16 %v3851, %v3849
      %v3912 = vpack.c.b16 %v3854, %v3852
      %v3913 = vpack.c.b16 %v3855, %v3853
      %v3914 = vpack.c.b16 %v3858, %v3856
      %v3915 = vpack.c.b16 %v3859, %v3857
      %v3916 = vpack.c.b16 %v3860, %v3860
      %v3917 = vpack.c.b16 %v3861, %v3861
      %v3973 = vsel %vm697, %v3682, 0
      %v3976 = vsel %vm697, %v3690, 0
      %v3979 = vsel %vm704, %v3916, 0
      %v3982 = vsel %vm704, %v3917, 0
      %3984 = vmatpush.bf16.msra.mxu0 %v3876
      %3985 = vmatpush.bf16.msra.mxu0 %v3874
      %3986 = vmatpush.bf16.msra.mxu0 %v3872
      %3987 = vmatpush.bf16.msra.mxu0 %v3870
      %3988 = vmatpush.bf16.msra.mxu0 %v3868
      %3989 = vmatpush.bf16.msra.mxu0 %v3866
      %3990 = vmatpush.bf16.msra.mxu0 %v3864
      %3991 = vmatpush.bf16.msra.mxu0 %v3862
      %3992 = vmatmul.bf16.gmra.mxu0 %v3673
      %v3993 = vpop.f32.mrf.mxu0
      %v3994 = vadd.f32 0.0, %v3993
      %v3995 = vpop.f32.mrf.mxu0
      %v3996 = vadd.f32 0.0, %v3995
      %3997 = vmatmul.bf16.gmra.mxu0 %v3684
      %v3998 = vpop.f32.mrf.mxu0
      %v3999 = vadd.f32 0.0, %v3998
      %v4000 = vpop.f32.mrf.mxu0
      %v4001 = vadd.f32 0.0, %v4000
      %4002 = vdwg.mxu0
      %4003 = vmatpush.bf16.msra.mxu0 %v3892
      %4004 = vmatpush.bf16.msra.mxu0 %v3890
      %4005 = vmatpush.bf16.msra.mxu0 %v3888
      %4006 = vmatpush.bf16.msra.mxu0 %v3886
      %4007 = vmatpush.bf16.msra.mxu0 %v3884
      %4008 = vmatpush.bf16.msra.mxu0 %v3882
      %4009 = vmatpush.bf16.msra.mxu0 %v3880
      %4010 = vmatpush.bf16.msra.mxu0 %v3878
      %4011 = vmatmul.bf16.gmra.mxu0 %v3676
      %v4012 = vpop.f32.mrf.mxu0
      %v4013 = vadd.f32 %v3994, %v4012
      %v4014 = vpop.f32.mrf.mxu0
      %v4015 = vadd.f32 %v3996, %v4014
      %4016 = vmatmul.bf16.gmra.mxu0 %v3686
      %v4017 = vpop.f32.mrf.mxu0
      %v4018 = vadd.f32 %v3999, %v4017
      %v4019 = vpop.f32.mrf.mxu0
      %v4020 = vadd.f32 %v4001, %v4019
      %4021 = vdwg.mxu0
      %4022 = vmatpush.bf16.msra.mxu0 %v3908
      %4023 = vmatpush.bf16.msra.mxu0 %v3906
      %4024 = vmatpush.bf16.msra.mxu0 %v3904
      %4025 = vmatpush.bf16.msra.mxu0 %v3902
      %4026 = vmatpush.bf16.msra.mxu0 %v3900
      %4027 = vmatpush.bf16.msra.mxu0 %v3898
      %4028 = vmatpush.bf16.msra.mxu0 %v3896
      %4029 = vmatpush.bf16.msra.mxu0 %v3894
      %4030 = vmatmul.bf16.gmra.mxu0 %v3679
      %v4031 = vpop.f32.mrf.mxu0
      %v4032 = vadd.f32 %v4013, %v4031
      %v4033 = vpop.f32.mrf.mxu0
      %v4034 = vadd.f32 %v4015, %v4033
      %4035 = vmatmul.bf16.gmra.mxu0 %v3688
      %v4036 = vpop.f32.mrf.mxu0
      %v4037 = vadd.f32 %v4018, %v4036
      %v4038 = vpop.f32.mrf.mxu0
      %v4039 = vadd.f32 %v4020, %v4038
      %4040 = vdwg.mxu0
      %4041 = vmatpush.bf16.msra.mxu0 0
      %4042 = vmatpush.bf16.msra.mxu0 0
      %4043 = vmatpush.bf16.msra.mxu0 0
      %4044 = vmatpush.bf16.msra.mxu0 0
      %4045 = vmatpush.bf16.msra.mxu0 %v3979
      %4046 = vmatpush.bf16.msra.mxu0 %v3914
      %4047 = vmatpush.bf16.msra.mxu0 %v3912
      %4048 = vmatpush.bf16.msra.mxu0 %v3910
      %4049 = vmatmul.bf16.gmra.mxu0 %v3973
      %v4050 = vpop.f32.mrf.mxu0
      %v4051 = vadd.f32 %v4032, %v4050
      %v4052 = vpop.f32.mrf.mxu0
      %v4053 = vadd.f32 %v4034, %v4052
      %4054 = vmatmul.bf16.gmra.mxu0 %v3976
      %v4055 = vpop.f32.mrf.mxu0
      %v4056 = vadd.f32 %v4037, %v4055
      %v4057 = vpop.f32.mrf.mxu0
      %v4058 = vadd.f32 %v4039, %v4057
      %4059 = vdwg.mxu0
      %4060 = vmatpush.bf16.msra.mxu0 %v3877
      %4061 = vmatpush.bf16.msra.mxu0 %v3875
      %4062 = vmatpush.bf16.msra.mxu0 %v3873
      %4063 = vmatpush.bf16.msra.mxu0 %v3871
      %4064 = vmatpush.bf16.msra.mxu0 %v3869
      %4065 = vmatpush.bf16.msra.mxu0 %v3867
      %4066 = vmatpush.bf16.msra.mxu0 %v3865
      %4067 = vmatpush.bf16.msra.mxu0 %v3863
      %4068 = vmatmul.bf16.gmra.mxu0 %v3673
      %v4069 = vpop.f32.mrf.mxu0
      %v4070 = vadd.f32 0.0, %v4069
      %v4071 = vpop.f32.mrf.mxu0
      %v4072 = vadd.f32 0.0, %v4071
      %4073 = vmatmul.bf16.gmra.mxu0 %v3684
      %v4074 = vpop.f32.mrf.mxu0
      %v4075 = vadd.f32 0.0, %v4074
      %v4076 = vpop.f32.mrf.mxu0
      %v4077 = vadd.f32 0.0, %v4076
      %4078 = vdwg.mxu0
      %4079 = vmatpush.bf16.msra.mxu0 %v3893
      %4080 = vmatpush.bf16.msra.mxu0 %v3891
      %4081 = vmatpush.bf16.msra.mxu0 %v3889
      %4082 = vmatpush.bf16.msra.mxu0 %v3887
      %4083 = vmatpush.bf16.msra.mxu0 %v3885
      %4084 = vmatpush.bf16.msra.mxu0 %v3883
      %4085 = vmatpush.bf16.msra.mxu0 %v3881
      %4086 = vmatpush.bf16.msra.mxu0 %v3879
      %4087 = vmatmul.bf16.gmra.mxu0 %v3676
      %v4088 = vpop.f32.mrf.mxu0
      %v4089 = vadd.f32 %v4070, %v4088
      %v4090 = vpop.f32.mrf.mxu0
      %v4091 = vadd.f32 %v4072, %v4090
      %4092 = vmatmul.bf16.gmra.mxu0 %v3686
      %v4093 = vpop.f32.mrf.mxu0
      %v4094 = vadd.f32 %v4075, %v4093
      %v4095 = vpop.f32.mrf.mxu0
      %v4096 = vadd.f32 %v4077, %v4095
      %4097 = vdwg.mxu0
      %4098 = vmatpush.bf16.msra.mxu0 %v3909
      %4099 = vmatpush.bf16.msra.mxu0 %v3907
      %4100 = vmatpush.bf16.msra.mxu0 %v3905
      %4101 = vmatpush.bf16.msra.mxu0 %v3903
      %4102 = vmatpush.bf16.msra.mxu0 %v3901
      %4103 = vmatpush.bf16.msra.mxu0 %v3899
      %4104 = vmatpush.bf16.msra.mxu0 %v3897
      %4105 = vmatpush.bf16.msra.mxu0 %v3895
      %4106 = vmatmul.bf16.gmra.mxu0 %v3679
      %v4107 = vpop.f32.mrf.mxu0
      %v4108 = vadd.f32 %v4089, %v4107
      %v4109 = vpop.f32.mrf.mxu0
      %v4110 = vadd.f32 %v4091, %v4109
      %4111 = vmatmul.bf16.gmra.mxu0 %v3688
      %v4112 = vpop.f32.mrf.mxu0
      %v4113 = vadd.f32 %v4094, %v4112
      %v4114 = vpop.f32.mrf.mxu0
      %v4115 = vadd.f32 %v4096, %v4114
      %4116 = vdwg.mxu0
      %4117 = vmatpush.bf16.msra.mxu0 0
      %4118 = vmatpush.bf16.msra.mxu0 0
      %4119 = vmatpush.bf16.msra.mxu0 0
      %4120 = vmatpush.bf16.msra.mxu0 0
      %4121 = vmatpush.bf16.msra.mxu0 %v3982
      %4122 = vmatpush.bf16.msra.mxu0 %v3915
      %4123 = vmatpush.bf16.msra.mxu0 %v3913
      %4124 = vmatpush.bf16.msra.mxu0 %v3911
      %4125 = vmatmul.bf16.gmra.mxu0 %v3973
      %v4126 = vpop.f32.mrf.mxu0
      %v4127 = vadd.f32 %v4108, %v4126
      %v4128 = vpop.f32.mrf.mxu0
      %v4129 = vadd.f32 %v4110, %v4128
      %4130 = vmatmul.bf16.gmra.mxu0 %v3976
      %v4131 = vpop.f32.mrf.mxu0
      %v4132 = vadd.f32 %v4113, %v4131
      %v4133 = vpop.f32.mrf.mxu0
      %v4134 = vadd.f32 %v4115, %v4133
      %4135 = vdwg.mxu0
      %v4136 = vadd.f32 %v3594, %v4051
      %v4137 = vadd.f32 %v3595, %v4127
      %v4138 = vadd.f32 %v3596, %v4053
      %v4139 = vadd.f32 %v3597, %v4129
      %v4140 = vadd.f32 %v3598, %v4056
      %v4141 = vadd.f32 %v3599, %v4132
      %v4142 = vadd.f32 %v3600, %v4058
      %v4143 = vadd.f32 %v3601, %v4134
      %v4144 = vld [vmem:[%s2] ss:$4 sm:$0x3]
      %v4146 = vperm.slane %v4144, 0
      %v4147 = vperm.slane %v4144, 1
      %v4150 = vadd.f32 %v4136, %v4146
      %v4151 = vadd.f32 %v4137, %v4147
      %v4152 = vadd.f32 %v4138, %v4146
      %v4153 = vadd.f32 %v4139, %v4147
      %v4154 = vadd.f32 %v4140, %v4146
      %v4155 = vadd.f32 %v4141, %v4147
      %v4156 = vadd.f32 %v4142, %v4146
      %v4157 = vadd.f32 %v4143, %v4147
      %v4158 = vmax.f32 %v4150, 0.0
      %v4159 = vmax.f32 %v4151, 0.0
      %v4160 = vmax.f32 %v4152, 0.0
      %v4161 = vmax.f32 %v4153, 0.0
      %v4162 = vmax.f32 %v4154, 0.0
      %v4163 = vmax.f32 %v4155, 0.0
      %v4164 = vmax.f32 %v4156, 0.0
      %v4165 = vmax.f32 %v4157, 0.0
      %s4166 = scalar_lea.vmem %s2, 1
      %v4167 = vld [vmem:[%s4166] ss:$4 sm:$0x3]
      %v4169 = vperm.slane %v4167, 0
      %v4170 = vperm.slane %v4167, 1
      %v4173 = vmul.f32 %v4158, %v4169
      %v4174 = vmul.f32 %v4159, %v4170
      %v4175 = vmul.f32 %v4160, %v4169
      %v4176 = vmul.f32 %v4161, %v4170
      %v4177 = vmul.f32 %v4162, %v4169
      %v4178 = vmul.f32 %v4163, %v4170
      %v4179 = vmul.f32 %v4164, %v4169
      %v4180 = vmul.f32 %v4165, %v4170
      %s4181 = scalar_lea.vmem %s2, 2
      %v4182 = vld [vmem:[%s4181] ss:$4 sm:$0x3]
      %v4184 = vperm.slane %v4182, 0
      %v4185 = vperm.slane %v4182, 1
      %v4188 = vadd.f32 %v4173, %v4184
      %v4189 = vadd.f32 %v4174, %v4185
      %v4190 = vadd.f32 %v4175, %v4184
      %v4191 = vadd.f32 %v4176, %v4185
      %v4192 = vadd.f32 %v4177, %v4184
      %v4193 = vadd.f32 %v4178, %v4185
      %v4194 = vadd.f32 %v4179, %v4184
      %v4195 = vadd.f32 %v4180, %v4185
      %4196 = vst [vmem:[%s170] sm:$0xff] %v4188
      %4197 = vst [vmem:[%s170 + $0x8] sm:$0xff] %v4189
      %4198 = vst [vmem:[%s170 + $0x10] sm:$0xff] %v4190
      %4199 = vst [vmem:[%s170 + $0x18] sm:$0xff] %v4191
      %4200 = vst [vmem:[%s170 + $0x20] sm:$0xff] %v4192
      %4201 = vst [vmem:[%s170 + $0x28] sm:$0xff] %v4193
      %4202 = vst [vmem:[%s170 + $0x30] sm:$0xff] %v4194
      %4203 = vst [vmem:[%s170 + $0x38] sm:$0xff] %v4195
      %p4204 = scmp.lt.s32.totalorder %s14, 1
      %s4205 = scalar_select %p4204, %s14, 1
      %s4206 = smul.addr %s4205, 8
      %s4207 = smul.addr %s4206, 8
      %s4208 = scalar_lea.vmem %s3, %s4207
      // Predicated region
      $region33: #{lc_cifar10_forward.3} parent=31 // pred_check
        %p4209 = pneg %p100
      $region34: #{lc_cifar10_forward.3} parent=31 // pred_check_branch
        %4211 = sbr.rel (%p4209) target = $region36
      $region35: #{lc_cifar10_forward.3} parent=31 // pred_region
        _
      $region36: #{lc_cifar10_forward.3} parent=31 // pred_fallthru
        _
    $region32: #{lc_cifar10_forward.3} parent=5 // pred_fallthru
      _
    %p4212 = scmp.le.s32.totalorder 2, %s9
    // Predicated region
    $region37: #{lc_cifar10_forward.3} parent=5 // pred_check
      %p4213 = pneg %p4212
    $region38: #{lc_cifar10_forward.3} parent=5 // pred_check_branch
      %4215 = sbr.rel (%p4213) target = $region40
    $region39: #{lc_cifar10_forward.3} parent=5 // pred_region
      %s4216 = ssub.s32 %s9, 2
      // Predicated region
      $region41: #{lc_cifar10_forward.3} parent=39 // pred_check
        %p4217 = pneg %p106
      $region42: #{lc_cifar10_forward.3} parent=39 // pred_check_branch
        %4219 = sbr.rel (%p4217) target = $region44
      $region43: #{lc_cifar10_forward.3} parent=39 // pred_region
        %p4220 = scmp.lt.s32.totalorder %s15, 1
        %s4221 = scalar_select %p4220, %s15, 1
        %s4222 = smul.addr %s4221, 8
        %s4223 = smul.addr %s4222, 8
        %s4224 = scalar_lea.vmem %s3, %s4223
      $region44: #{lc_cifar10_forward.3} parent=39 // pred_fallthru
        _
    $region40: #{lc_cifar10_forward.3} parent=5 // pred_fallthru
      _
  $region6: #{lc_cifar10_forward.3} parent=0 // loop_footer
    %s13 = sadd.s32 1, %s9
  $region7: #{lc_cifar10_forward.3} parent=0 // loop_footer_branch
    %8 = sbr.rel target = $region3
  $region8: #{lc_cifar10_forward.3} parent=0 // loop_exit
    _

</llo_original>
